<compile_context>
chip_gen: v6e
topology: v6e:2x2x1
jax: 0.10.0
libtpu: 0.0.40
codegen_flags: <defaults>
</compile_context>

<pallas_src>
import functools
import math

import jax
import jax.numpy as jnp
from jax import lax
from jax.experimental import pallas as pl
from jax.experimental.pallas import tpu as pltpu


# ---------------------------------------------------------------------------
# shared math (used inside the Pallas kernel AND by the pure-JAX reference)
# ---------------------------------------------------------------------------

def _layer_norm(x, gamma, beta, eps=1e-5):
    mu = jnp.mean(x, axis=-1, keepdims=True)
    xc = x - mu
    var = jnp.mean(xc * xc, axis=-1, keepdims=True)
    return xc * lax.rsqrt(var + eps) * gamma + beta


def _patch_embed_math(patches, w_pe, pe, *, PP, NH, epsilon):
    """patches: (M, PP_pad)   w_pe: (PP_pad, E)   pe: (M, E) (pre-broadcast pos-enc)."""
    emb = jnp.dot(patches, w_pe, preferred_element_type=jnp.float32) + pe
    # mask_generator = same conv with every weight == 1/(P*P) and no bias, so every
    # output channel equals the per-patch mean and the channel-mean equals it too.
    patch_mean = jnp.sum(patches, axis=-1, keepdims=True) * (1.0 / PP)       # (M, 1)
    keep = patch_mean > epsilon
    mask_add = (1.0 - keep.astype(jnp.float32)) * (-10000.0)                 # (M, 1)
    mask_add = jnp.broadcast_to(mask_add, (patches.shape[0], NH))            # (M, NH)
    return emb, mask_add


def _encoder_layer_math(x, mask_add, sel, selT,
                        w_in, b_in, w_out, b_out, ln1_w, ln1_b,
                        w_ff1, b_ff1, w_ff2, b_ff2, ln2_w, ln2_b,
                        *, L, N, E, DH):
    """One post-LN nn.TransformerEncoderLayer (eval mode).

    x        : (L*N, E)  rows ordered image-major (row = image * N + patch)
    mask_add : (L*N, NH) additive key-padding mask (per key image/patch, per head)
    sel/selT : (E, NH)/(NH, E) head selector — lane e belongs to head e // DH.
    Attention runs over the L (= original batch) axis, per patch and head, matching
    the original model's seq-first encoder fed with batch-first data.  L is a small
    static number, so the L x L pair loop is fully unrolled at trace time.
    """
    qkv = jnp.dot(x, w_in, preferred_element_type=jnp.float32) + b_in        # (M, 3E)
    q = qkv[:, :E] * (1.0 / math.sqrt(DH))
    k = qkv[:, E:2 * E]
    v = qkv[:, 2 * E:]

    blocks = []
    for i in range(L):                                  # queries: image i
        qi = q[i * N:(i + 1) * N, :]                    # (N, E)
        scores = []
        for j in range(L):                              # keys: image j
            kj = k[j * N:(j + 1) * N, :]
            s = jnp.dot(qi * kj, sel, preferred_element_type=jnp.float32)    # (N, NH)
            scores.append(s + mask_add[j * N:(j + 1) * N, :])
        m = scores[0]
        for s in scores[1:]:
            m = jnp.maximum(m, s)
        ps = [jnp.exp(s - m) for s in scores]
        denom = ps[0]
        for p_ in ps[1:]:
            denom = denom + p_
        inv = 1.0 / denom
        o = jnp.zeros((N, E), jnp.float32)
        for j in range(L):
            pj = jnp.dot(ps[j] * inv, selT, preferred_element_type=jnp.float32)  # (N, E)
            o = o + pj * v[j * N:(j + 1) * N, :]
        blocks.append(o)
    attn = jnp.concatenate(blocks, axis=0)                                   # (M, E)
    attn = jnp.dot(attn, w_out, preferred_element_type=jnp.float32) + b_out

    x = _layer_norm(x + attn, ln1_w, ln1_b)             # residual + norm1 (post-LN)
    h = jnp.dot(x, w_ff1, preferred_element_type=jnp.float32) + b_ff1
    h = jnp.maximum(h, 0.0)                             # relu
    h = jnp.dot(h, w_ff2, preferred_element_type=jnp.float32) + b_ff2
    return _layer_norm(x + h, ln2_w, ln2_b)             # residual + norm2


def _head_math(x, pool, wc, bc):
    pooled = jnp.dot(pool, x, preferred_element_type=jnp.float32)            # (B, E)
    return jnp.dot(pooled, wc, preferred_element_type=jnp.float32) + bc      # (B, NC)


# ---------------------------------------------------------------------------
# fused Pallas kernel: patch-embed + pos-enc + encoder stack + pool + classifier
# ---------------------------------------------------------------------------

def _fused_kernel(patches_ref, w_pe_ref, pe_ref, sel_ref, selT_ref, pool_ref,
                  wc_ref, bc_ref,
                  w_in_ref, b_in_ref, w_out_ref, b_out_ref,
                  ln1_w_ref, ln1_b_ref,
                  w_ff1_ref, b_ff1_ref, w_ff2_ref, b_ff2_ref,
                  ln2_w_ref, ln2_b_ref,
                  y_ref, state_ref, mask_ref,
                  *, L, N, E, DH, PP, NH, epsilon):
    layer = pl.program_id(0)

    @pl.when(layer == 0)
    def _():
        emb, mask_add = _patch_embed_math(
            patches_ref[...], w_pe_ref[...], pe_ref[...],
            PP=PP, NH=NH, epsilon=epsilon)
        state_ref[...] = emb
        mask_ref[...] = mask_add

    x = _encoder_layer_math(
        state_ref[...], mask_ref[...], sel_ref[...], selT_ref[...],
        w_in_ref[0], b_in_ref[0], w_out_ref[0], b_out_ref[0],
        ln1_w_ref[0], ln1_b_ref[0],
        w_ff1_ref[0], b_ff1_ref[0], w_ff2_ref[0], b_ff2_ref[0],
        ln2_w_ref[0], ln2_b_ref[0],
        L=L, N=N, E=E, DH=DH)
    state_ref[...] = x

    @pl.when(layer == pl.num_programs(0) - 1)
    def _():
        y_ref[...] = _head_math(x, pool_ref[...], wc_ref[...], bc_ref[...])


# ---------------------------------------------------------------------------
# wrapper helpers (pure layout plumbing, outside the kernel)
# ---------------------------------------------------------------------------

def _extract_patches(x_img, P, PP_pad):
    """Conv2d(kernel=stride=P, padding=P) as patch extraction.

    Returns (B, S, PP_pad) with S = (H/P + 2) * (W/P + 2).  The border ring of
    patches is all-zero (exactly what padding=P produces); the patch vector is
    zero-padded from P*P to PP_pad lanes (matching zero rows appended to w_pe).
    """
    B, C, H, W = x_img.shape            # C == 1 for this model
    Hp, Wp = H // P, W // P
    p = x_img.reshape(B, Hp, P, Wp, P)
    p = p.transpose(0, 1, 3, 2, 4).reshape(B, Hp, Wp, P * P)
    p = jnp.pad(p, ((0, 0), (1, 1), (1, 1), (0, 0)))     # conv padding -> zero patches
    p = p.reshape(B, (Hp + 2) * (Wp + 2), P * P)
    if PP_pad > P * P:
        p = jnp.pad(p, ((0, 0), (0, 0), (0, PP_pad - P * P)))
    return p


def _selectors(E, NH):
    DH = E // NH
    head_of_lane = jnp.arange(E) // DH
    sel = (head_of_lane[:, None] == jnp.arange(NH)[None, :]).astype(jnp.float32)
    return sel, sel.T


def _pool_matrix(B, S):
    row_img = jnp.arange(B * S) // S
    return (jnp.arange(B)[:, None] == row_img[None, :]).astype(jnp.float32) / S


# ---------------------------------------------------------------------------
# forward pass
# ---------------------------------------------------------------------------

def transformer_forward(x_img, params, *, P, E, NH, FF, NL, NC, epsilon):
    B = x_img.shape[0]
    PP = P * P
    PP_pad = pl.cdiv(PP, 128) * 128
    DH = E // NH

    patches = _extract_patches(x_img, P, PP_pad)          # (B, S, PP_pad)
    S = patches.shape[1]
    M = B * S
    patches = patches.reshape(M, PP_pad)

    # PositionalEncoding as written in the original module: pe[:x.size(0)] indexes the
    # *batch* dim -> one pe row per image, broadcast over all of its patches.
    pe_bcast = jnp.broadcast_to(params["pe"][:B][:, None, :], (B, S, E)).reshape(M, E)

    sel, selT = _selectors(E, NH)
    pool = _pool_matrix(B, S)

    layer_spec = lambda r, c: pl.BlockSpec((1, r, c), lambda l: (l, 0, 0))
    const2 = lambda r, c: pl.BlockSpec((r, c), lambda l: (0, 0))

    y = pl.pallas_call(
        functools.partial(_fused_kernel, L=B, N=S, E=E, DH=DH,
                          PP=PP, NH=NH, epsilon=epsilon),
        out_shape=jax.ShapeDtypeStruct((B, NC), jnp.float32),
        grid_spec=pltpu.PrefetchScalarGridSpec(
            num_scalar_prefetch=0,
            grid=(NL,),
            in_specs=[
                const2(M, PP_pad),       # patches (constant across layers)
                const2(PP_pad, E),       # patch-embed weight
                const2(M, E),            # positional encoding (pre-broadcast)
                const2(E, NH),           # head selector
                const2(NH, E),           # head selector (transposed)
                const2(B, M),            # mean-pool matrix
                const2(E, NC),           # classifier weight
                const2(1, NC),           # classifier bias
                layer_spec(E, 3 * E),    # in_proj weight   (streamed per layer)
                layer_spec(1, 3 * E),    # in_proj bias
                layer_spec(E, E),        # out_proj weight
                layer_spec(1, E),        # out_proj bias
                layer_spec(1, E),        # ln1 gamma
                layer_spec(1, E),        # ln1 beta
                layer_spec(E, FF),       # ffn linear1 weight
                layer_spec(1, FF),       # ffn linear1 bias
                layer_spec(FF, E),       # ffn linear2 weight
                layer_spec(1, E),        # ffn linear2 bias
                layer_spec(1, E),        # ln2 gamma
                layer_spec(1, E),        # ln2 beta
            ],
            out_specs=pl.BlockSpec((B, NC), lambda l: (0, 0)),
            scratch_shapes=[pltpu.VMEM((M, E), jnp.float32),    # activation state
                            pltpu.VMEM((M, NH), jnp.float32)]), # additive mask
        compiler_params=pltpu.CompilerParams(dimension_semantics=("arbitrary",)),
    )(patches, params["w_pe"], pe_bcast, sel, selT, pool, params["wc"], params["bc"],
      params["w_in"], params["b_in"], params["w_out"], params["b_out"],
      params["ln1_w"], params["ln1_b"],
      params["w_ff1"], params["b_ff1"], params["w_ff2"], params["b_ff2"],
      params["ln2_w"], params["ln2_b"])
    return y


# ---------------------------------------------------------------------------
# parameters + pure-JAX reference
# ---------------------------------------------------------------------------

def init_params(key, *, P, E, NH, FF, NL, NC, max_len=640):
    PP = P * P
    PP_pad = pl.cdiv(PP, 128) * 128
    ks = jax.random.split(key, 11)
    w = lambda k, shape, s=0.02: s * jax.random.normal(k, shape, jnp.float32)
    params = {
        "w_pe": jnp.concatenate(
            [w(ks[0], (PP, E)), jnp.zeros((PP_pad - PP, E), jnp.float32)], axis=0),
        "w_in": w(ks[1], (NL, E, 3 * E)),
        "b_in": w(ks[2], (NL, 1, 3 * E), 0.01),
        "w_out": w(ks[3], (NL, E, E)),
        "b_out": w(ks[4], (NL, 1, E), 0.01),
        "ln1_w": jnp.ones((NL, 1, E), jnp.float32),
        "ln1_b": jnp.zeros((NL, 1, E), jnp.float32),
        "w_ff1": w(ks[5], (NL, E, FF)),
        "b_ff1": w(ks[6], (NL, 1, FF), 0.01),
        "w_ff2": w(ks[7], (NL, FF, E)),
        "b_ff2": w(ks[8], (NL, 1, E), 0.01),
        "ln2_w": jnp.ones((NL, 1, E), jnp.float32),
        "ln2_b": jnp.zeros((NL, 1, E), jnp.float32),
        "wc": w(ks[9], (E, NC)),
        "bc": w(ks[10], (1, NC), 0.01),
    }
    # sinusoidal table, same construction as PositionalEncoding
    pos = jnp.arange(max_len, dtype=jnp.float32)[:, None]
    div = jnp.exp(jnp.arange(0, E, 2, dtype=jnp.float32) * (-math.log(10000.0) / E))
    pe = jnp.zeros((max_len, E), jnp.float32)
    pe = pe.at[:, 0::2].set(jnp.sin(pos * div))
    pe = pe.at[:, 1::2].set(jnp.cos(pos * div))
    params["pe"] = pe
    return params


def transformer_forward_ref(x_img, params, *, P, E, NH, FF, NL, NC, epsilon):
    B = x_img.shape[0]
    PP = P * P
    PP_pad = pl.cdiv(PP, 128) * 128
    DH = E // NH
    patches = _extract_patches(x_img, P, PP_pad)
    S = patches.shape[1]
    M = B * S
    patches = patches.reshape(M, PP_pad)
    pe_bcast = jnp.broadcast_to(params["pe"][:B][:, None, :], (B, S, E)).reshape(M, E)
    x, mask_add = _patch_embed_math(patches, params["w_pe"], pe_bcast,
                                    PP=PP, NH=NH, epsilon=epsilon)
    sel, selT = _selectors(E, NH)
    pool = _pool_matrix(B, S)
    for l in range(NL):
        x = _encoder_layer_math(
            x, mask_add, sel, selT,
            params["w_in"][l], params["b_in"][l], params["w_out"][l], params["b_out"][l],
            params["ln1_w"][l], params["ln1_b"][l],
            params["w_ff1"][l], params["b_ff1"][l], params["w_ff2"][l], params["b_ff2"][l],
            params["ln2_w"][l], params["ln2_b"][l],
            L=B, N=S, E=E, DH=DH)
    return _head_math(x, pool, params["wc"], params["bc"])


if __name__ == "__main__":
    # Small-but-consistent config: patch_size is fixed at 24 by the module; a 48x48
    # single-channel image gives a (48/24 + 2)^2 = 16-patch sequence.  Scaled-down
    # transformer: embed_dim=128, 8 heads, 2 layers, ffn=256, 1 output class.
    P, E, NH, FF, NL, NC = 24, 128, 8, 256, 2, 1
    EPSILON = 0.0

    key = jax.random.PRNGKey(0)
    kx, kp = jax.random.split(key)
    x = jax.random.normal(kx, (2, 1, 48, 48), dtype=jnp.float32)   # (B, C=1, H, W)
    params = init_params(kp, P=P, E=E, NH=NH, FF=FF, NL=NL, NC=NC)

    fwd = jax.jit(functools.partial(transformer_forward, P=P, E=E, NH=NH, FF=FF,
                                    NL=NL, NC=NC, epsilon=EPSILON))
    y = fwd(x, params)
    jax.block_until_ready(y)

    y_ref = transformer_forward_ref(x, params, P=P, E=E, NH=NH, FF=FF,
                                    NL=NL, NC=NC, epsilon=EPSILON)
    assert y.shape == (2, NC) and y.dtype == jnp.float32
    assert bool(jnp.all(jnp.isfinite(y)))
    assert bool(jnp.allclose(y, y_ref, atol=1e-3, rtol=1e-3)), (y, y_ref)
    print("KERNEL_OK")
</pallas_src>

<mosaic_0001>
module attributes {stable_mosaic.version = 11 : i64} {
  func.func @_fused_kernel(%arg0: i32, %arg1: memref<32x640xf32, #tpu.memory_space<vmem>>, %arg2: memref<640x128xf32, #tpu.memory_space<vmem>>, %arg3: memref<32x128xf32, #tpu.memory_space<vmem>>, %arg4: memref<128x8xf32, #tpu.memory_space<vmem>>, %arg5: memref<8x128xf32, #tpu.memory_space<vmem>>, %arg6: memref<2x32xf32, #tpu.memory_space<vmem>>, %arg7: memref<128x1xf32, #tpu.memory_space<vmem>>, %arg8: memref<1x1xf32, #tpu.memory_space<vmem>>, %arg9: memref<1x128x384xf32, #tpu.memory_space<vmem>>, %arg10: memref<1x1x384xf32, #tpu.memory_space<vmem>>, %arg11: memref<1x128x128xf32, #tpu.memory_space<vmem>>, %arg12: memref<1x1x128xf32, #tpu.memory_space<vmem>>, %arg13: memref<1x1x128xf32, #tpu.memory_space<vmem>>, %arg14: memref<1x1x128xf32, #tpu.memory_space<vmem>>, %arg15: memref<1x128x256xf32, #tpu.memory_space<vmem>>, %arg16: memref<1x1x256xf32, #tpu.memory_space<vmem>>, %arg17: memref<1x256x128xf32, #tpu.memory_space<vmem>>, %arg18: memref<1x1x128xf32, #tpu.memory_space<vmem>>, %arg19: memref<1x1x128xf32, #tpu.memory_space<vmem>>, %arg20: memref<1x1x128xf32, #tpu.memory_space<vmem>>, %arg21: memref<2x1xf32, #tpu.memory_space<vmem>>, %arg22: memref<32x128xf32, #tpu.memory_space<vmem>>, %arg23: memref<32x8xf32, #tpu.memory_space<vmem>>) attributes {dimension_semantics = [#tpu.dimension_semantics<arbitrary>], iteration_bounds = array<i64: 2>, scalar_prefetch = 0 : i64, scratch_operands = 2 : i64, tpu.core_type = #tpu.core_type<tc>, window_params = [{pipeline_mode = #tpu.pipeline_mode<synchronous>, transform_indices = @transform_0, window_bounds = array<i64: 32, 640>}, {pipeline_mode = #tpu.pipeline_mode<synchronous>, transform_indices = @transform_1, window_bounds = array<i64: 640, 128>}, {pipeline_mode = #tpu.pipeline_mode<synchronous>, transform_indices = @transform_2, window_bounds = array<i64: 32, 128>}, {pipeline_mode = #tpu.pipeline_mode<synchronous>, transform_indices = @transform_3, window_bounds = array<i64: 128, 8>}, {pipeline_mode = #tpu.pipeline_mode<synchronous>, transform_indices = @transform_4, window_bounds = array<i64: 8, 128>}, {pipeline_mode = #tpu.pipeline_mode<synchronous>, transform_indices = @transform_5, window_bounds = array<i64: 2, 32>}, {pipeline_mode = #tpu.pipeline_mode<synchronous>, transform_indices = @transform_6, window_bounds = array<i64: 128, 1>}, {pipeline_mode = #tpu.pipeline_mode<synchronous>, transform_indices = @transform_7, window_bounds = array<i64: 1, 1>}, {transform_indices = @transform_8, window_bounds = array<i64: 1, 128, 384>}, {transform_indices = @transform_9, window_bounds = array<i64: 1, 1, 384>}, {transform_indices = @transform_10, window_bounds = array<i64: 1, 128, 128>}, {transform_indices = @transform_11, window_bounds = array<i64: 1, 1, 128>}, {transform_indices = @transform_12, window_bounds = array<i64: 1, 1, 128>}, {transform_indices = @transform_13, window_bounds = array<i64: 1, 1, 128>}, {transform_indices = @transform_14, window_bounds = array<i64: 1, 128, 256>}, {transform_indices = @transform_15, window_bounds = array<i64: 1, 1, 256>}, {transform_indices = @transform_16, window_bounds = array<i64: 1, 256, 128>}, {transform_indices = @transform_17, window_bounds = array<i64: 1, 1, 128>}, {transform_indices = @transform_18, window_bounds = array<i64: 1, 1, 128>}, {transform_indices = @transform_19, window_bounds = array<i64: 1, 1, 128>}, {pipeline_mode = #tpu.pipeline_mode<synchronous>, transform_indices = @transform_20, window_bounds = array<i64: 2, 1>}]} {
    %c0_i32 = arith.constant 0 : i32
    %0 = arith.cmpi eq, %arg0, %c0_i32 : i32
    %1 = arith.extui %0 : i1 to i32
    %c0_i32_0 = arith.constant 0 : i32
    %2 = arith.cmpi ne, %1, %c0_i32_0 : i32
    scf.if %2 {
      %c0_74 = arith.constant 0 : index
      %c0_75 = arith.constant 0 : index
      %157 = vector.load %arg1[%c0_74, %c0_75] : memref<32x640xf32, #tpu.memory_space<vmem>>, vector<32x640xf32>
      %c0_76 = arith.constant 0 : index
      %c0_77 = arith.constant 0 : index
      %158 = vector.load %arg2[%c0_76, %c0_77] : memref<640x128xf32, #tpu.memory_space<vmem>>, vector<640x128xf32>
      %c0_78 = arith.constant 0 : index
      %c0_79 = arith.constant 0 : index
      %159 = vector.load %arg3[%c0_78, %c0_79] : memref<32x128xf32, #tpu.memory_space<vmem>>, vector<32x128xf32>
      %cst_80 = arith.constant dense<0.000000e+00> : vector<32x128xf32>
      %160 = tpu.matmul %157, %158, %cst_80 {dimension_numbers = #tpu.dot_dimension_numbers<[1], [0], [0], [1], [0, 0, 1, 1], [], []>} : vector<32x640xf32>, vector<640x128xf32>, vector<32x128xf32> -> vector<32x128xf32>
      %161 = arith.addf %160, %159 : vector<32x128xf32>
      %cst_81 = arith.constant dense<0.000000e+00> : vector<32xf32>
      %162 = vector.multi_reduction <add>, %157, %cst_81 [1] : vector<32x640xf32> to vector<32xf32>
      %163 = vector.shape_cast %162 : vector<32xf32> to vector<32x1xf32>
      %cst_82 = arith.constant 0.00173611112 : f32
      %164 = vector.broadcast %cst_82 : f32 to vector<32x1xf32>
      %165 = arith.mulf %163, %164 : vector<32x1xf32>
      %cst_83 = arith.constant 0.000000e+00 : f32
      %166 = vector.broadcast %cst_83 : f32 to vector<32x1xf32>
      %167 = arith.cmpf ogt, %165, %166 : vector<32x1xf32>
      %168 = arith.extui %167 : vector<32x1xi1> to vector<32x1xi32>
      %169 = arith.sitofp %168 : vector<32x1xi32> to vector<32x1xf32>
      %cst_84 = arith.constant 1.000000e+00 : f32
      %170 = vector.broadcast %cst_84 : f32 to vector<32x1xf32>
      %171 = arith.subf %170, %169 : vector<32x1xf32>
      %cst_85 = arith.constant -1.000000e+04 : f32
      %172 = vector.broadcast %cst_85 : f32 to vector<32x1xf32>
      %173 = arith.mulf %171, %172 : vector<32x1xf32>
      %174 = vector.shape_cast %173 : vector<32x1xf32> to vector<32x1xf32>
      %175 = vector.broadcast %174 : vector<32x1xf32> to vector<32x8xf32>
      %c0_86 = arith.constant 0 : index
      %c0_87 = arith.constant 0 : index
      %176 = vector.load %arg22[%c0_86, %c0_87] : memref<32x128xf32, #tpu.memory_space<vmem>>, vector<32x128xf32>
      tpu.vector_store %arg22[%c0_86, %c0_87], %161 {strides = array<i32>} : memref<32x128xf32, #tpu.memory_space<vmem>>, vector<32x128xf32>,
      %c0_88 = arith.constant 0 : index
      %c0_89 = arith.constant 0 : index
      %177 = vector.load %arg23[%c0_88, %c0_89] : memref<32x8xf32, #tpu.memory_space<vmem>>, vector<32x8xf32>
      tpu.vector_store %arg23[%c0_88, %c0_89], %175 {strides = array<i32>} : memref<32x8xf32, #tpu.memory_space<vmem>>, vector<32x8xf32>,
    } else {
    }
    %c0 = arith.constant 0 : index
    %c0_1 = arith.constant 0 : index
    %3 = vector.load %arg22[%c0, %c0_1] : memref<32x128xf32, #tpu.memory_space<vmem>>, vector<32x128xf32>
    %c0_2 = arith.constant 0 : index
    %c0_3 = arith.constant 0 : index
    %4 = vector.load %arg23[%c0_2, %c0_3] : memref<32x8xf32, #tpu.memory_space<vmem>>, vector<32x8xf32>
    %c0_4 = arith.constant 0 : index
    %c0_5 = arith.constant 0 : index
    %5 = vector.load %arg4[%c0_4, %c0_5] : memref<128x8xf32, #tpu.memory_space<vmem>>, vector<128x8xf32>
    %c0_6 = arith.constant 0 : index
    %c0_7 = arith.constant 0 : index
    %6 = vector.load %arg5[%c0_6, %c0_7] : memref<8x128xf32, #tpu.memory_space<vmem>>, vector<8x128xf32>
    %c0_8 = arith.constant 0 : index
    %c0_9 = arith.constant 0 : index
    %c0_10 = arith.constant 0 : index
    %7 = vector.load %arg9[%c0_8, %c0_9, %c0_10] : memref<1x128x384xf32, #tpu.memory_space<vmem>>, vector<1x128x384xf32>
    %8 = vector.shape_cast %7 : vector<1x128x384xf32> to vector<128x384xf32>
    %c0_11 = arith.constant 0 : index
    %c0_12 = arith.constant 0 : index
    %c0_13 = arith.constant 0 : index
    %9 = vector.load %arg10[%c0_11, %c0_12, %c0_13] : memref<1x1x384xf32, #tpu.memory_space<vmem>>, vector<1x1x384xf32>
    %10 = vector.shape_cast %9 : vector<1x1x384xf32> to vector<1x384xf32>
    %c0_14 = arith.constant 0 : index
    %c0_15 = arith.constant 0 : index
    %c0_16 = arith.constant 0 : index
    %11 = vector.load %arg11[%c0_14, %c0_15, %c0_16] : memref<1x128x128xf32, #tpu.memory_space<vmem>>, vector<1x128x128xf32>
    %12 = vector.shape_cast %11 : vector<1x128x128xf32> to vector<128x128xf32>
    %c0_17 = arith.constant 0 : index
    %c0_18 = arith.constant 0 : index
    %c0_19 = arith.constant 0 : index
    %13 = vector.load %arg12[%c0_17, %c0_18, %c0_19] : memref<1x1x128xf32, #tpu.memory_space<vmem>>, vector<1x1x128xf32>
    %14 = vector.shape_cast %13 : vector<1x1x128xf32> to vector<1x128xf32>
    %c0_20 = arith.constant 0 : index
    %c0_21 = arith.constant 0 : index
    %c0_22 = arith.constant 0 : index
    %15 = vector.load %arg13[%c0_20, %c0_21, %c0_22] : memref<1x1x128xf32, #tpu.memory_space<vmem>>, vector<1x1x128xf32>
    %16 = vector.shape_cast %15 : vector<1x1x128xf32> to vector<1x128xf32>
    %c0_23 = arith.constant 0 : index
    %c0_24 = arith.constant 0 : index
    %c0_25 = arith.constant 0 : index
    %17 = vector.load %arg14[%c0_23, %c0_24, %c0_25] : memref<1x1x128xf32, #tpu.memory_space<vmem>>, vector<1x1x128xf32>
    %18 = vector.shape_cast %17 : vector<1x1x128xf32> to vector<1x128xf32>
    %c0_26 = arith.constant 0 : index
    %c0_27 = arith.constant 0 : index
    %c0_28 = arith.constant 0 : index
    %19 = vector.load %arg15[%c0_26, %c0_27, %c0_28] : memref<1x128x256xf32, #tpu.memory_space<vmem>>, vector<1x128x256xf32>
    %20 = vector.shape_cast %19 : vector<1x128x256xf32> to vector<128x256xf32>
    %c0_29 = arith.constant 0 : index
    %c0_30 = arith.constant 0 : index
    %c0_31 = arith.constant 0 : index
    %21 = vector.load %arg16[%c0_29, %c0_30, %c0_31] : memref<1x1x256xf32, #tpu.memory_space<vmem>>, vector<1x1x256xf32>
    %22 = vector.shape_cast %21 : vector<1x1x256xf32> to vector<1x256xf32>
    %c0_32 = arith.constant 0 : index
    %c0_33 = arith.constant 0 : index
    %c0_34 = arith.constant 0 : index
    %23 = vector.load %arg17[%c0_32, %c0_33, %c0_34] : memref<1x256x128xf32, #tpu.memory_space<vmem>>, vector<1x256x128xf32>
    %24 = vector.shape_cast %23 : vector<1x256x128xf32> to vector<256x128xf32>
    %c0_35 = arith.constant 0 : index
    %c0_36 = arith.constant 0 : index
    %c0_37 = arith.constant 0 : index
    %25 = vector.load %arg18[%c0_35, %c0_36, %c0_37] : memref<1x1x128xf32, #tpu.memory_space<vmem>>, vector<1x1x128xf32>
    %26 = vector.shape_cast %25 : vector<1x1x128xf32> to vector<1x128xf32>
    %c0_38 = arith.constant 0 : index
    %c0_39 = arith.constant 0 : index
    %c0_40 = arith.constant 0 : index
    %27 = vector.load %arg19[%c0_38, %c0_39, %c0_40] : memref<1x1x128xf32, #tpu.memory_space<vmem>>, vector<1x1x128xf32>
    %28 = vector.shape_cast %27 : vector<1x1x128xf32> to vector<1x128xf32>
    %c0_41 = arith.constant 0 : index
    %c0_42 = arith.constant 0 : index
    %c0_43 = arith.constant 0 : index
    %29 = vector.load %arg20[%c0_41, %c0_42, %c0_43] : memref<1x1x128xf32, #tpu.memory_space<vmem>>, vector<1x1x128xf32>
    %30 = vector.shape_cast %29 : vector<1x1x128xf32> to vector<1x128xf32>
    %cst = arith.constant dense<0.000000e+00> : vector<32x384xf32>
    %31 = tpu.matmul %3, %8, %cst {dimension_numbers = #tpu.dot_dimension_numbers<[1], [0], [0], [1], [0, 0, 1, 1], [], []>} : vector<32x128xf32>, vector<128x384xf32>, vector<32x384xf32> -> vector<32x384xf32>
    %32 = vector.broadcast %10 : vector<1x384xf32> to vector<32x384xf32>
    %33 = arith.addf %31, %32 : vector<32x384xf32>
    %34 = vector.extract_strided_slice %33 {offsets = [0, 0], sizes = [32, 128], strides = [1, 1]} : vector<32x384xf32> to vector<32x128xf32>
    %cst_44 = arith.constant 2.500000e-01 : f32
    %35 = vector.broadcast %cst_44 : f32 to vector<32x128xf32>
    %36 = arith.mulf %34, %35 : vector<32x128xf32>
    %37 = vector.extract_strided_slice %33 {offsets = [0, 128], sizes = [32, 128], strides = [1, 1]} : vector<32x384xf32> to vector<32x128xf32>
    %38 = vector.extract_strided_slice %33 {offsets = [0, 256], sizes = [32, 128], strides = [1, 1]} : vector<32x384xf32> to vector<32x128xf32>
    %39 = vector.extract_strided_slice %36 {offsets = [0, 0], sizes = [16, 128], strides = [1, 1]} : vector<32x128xf32> to vector<16x128xf32>
    %40 = vector.extract_strided_slice %37 {offsets = [0, 0], sizes = [16, 128], strides = [1, 1]} : vector<32x128xf32> to vector<16x128xf32>
    %41 = arith.mulf %39, %40 : vector<16x128xf32>
    %cst_45 = arith.constant dense<0.000000e+00> : vector<16x8xf32>
    %42 = tpu.matmul %41, %5, %cst_45 {dimension_numbers = #tpu.dot_dimension_numbers<[1], [0], [0], [1], [0, 0, 1, 1], [], []>} : vector<16x128xf32>, vector<128x8xf32>, vector<16x8xf32> -> vector<16x8xf32>
    %43 = vector.extract_strided_slice %4 {offsets = [0, 0], sizes = [16, 8], strides = [1, 1]} : vector<32x8xf32> to vector<16x8xf32>
    %44 = arith.addf %42, %43 : vector<16x8xf32>
    %45 = vector.extract_strided_slice %37 {offsets = [16, 0], sizes = [16, 128], strides = [1, 1]} : vector<32x128xf32> to vector<16x128xf32>
    %46 = arith.mulf %39, %45 : vector<16x128xf32>
    %cst_46 = arith.constant dense<0.000000e+00> : vector<16x8xf32>
    %47 = tpu.matmul %46, %5, %cst_46 {dimension_numbers = #tpu.dot_dimension_numbers<[1], [0], [0], [1], [0, 0, 1, 1], [], []>} : vector<16x128xf32>, vector<128x8xf32>, vector<16x8xf32> -> vector<16x8xf32>
    %48 = vector.extract_strided_slice %4 {offsets = [16, 0], sizes = [16, 8], strides = [1, 1]} : vector<32x8xf32> to vector<16x8xf32>
    %49 = arith.addf %47, %48 : vector<16x8xf32>
    %50 = arith.maximumf %44, %49 : vector<16x8xf32>
    %51 = arith.subf %44, %50 : vector<16x8xf32>
    %52 = math.exp %51 : vector<16x8xf32>
    %53 = arith.subf %49, %50 : vector<16x8xf32>
    %54 = math.exp %53 : vector<16x8xf32>
    %55 = arith.addf %52, %54 : vector<16x8xf32>
    %cst_47 = arith.constant 1.000000e+00 : f32
    %56 = vector.broadcast %cst_47 : f32 to vector<16x8xf32>
    %57 = arith.divf %56, %55 : vector<16x8xf32>
    %cst_48 = arith.constant 0.000000e+00 : f32
    %58 = vector.broadcast %cst_48 : f32 to vector<16x128xf32>
    %59 = arith.mulf %52, %57 : vector<16x8xf32>
    %cst_49 = arith.constant dense<0.000000e+00> : vector<16x128xf32>
    %60 = tpu.matmul %59, %6, %cst_49 {dimension_numbers = #tpu.dot_dimension_numbers<[1], [0], [0], [1], [0, 0, 1, 1], [], []>} : vector<16x8xf32>, vector<8x128xf32>, vector<16x128xf32> -> vector<16x128xf32>
    %61 = vector.extract_strided_slice %38 {offsets = [0, 0], sizes = [16, 128], strides = [1, 1]} : vector<32x128xf32> to vector<16x128xf32>
    %62 = arith.mulf %60, %61 : vector<16x128xf32>
    %63 = arith.addf %58, %62 : vector<16x128xf32>
    %64 = arith.mulf %54, %57 : vector<16x8xf32>
    %cst_50 = arith.constant dense<0.000000e+00> : vector<16x128xf32>
    %65 = tpu.matmul %64, %6, %cst_50 {dimension_numbers = #tpu.dot_dimension_numbers<[1], [0], [0], [1], [0, 0, 1, 1], [], []>} : vector<16x8xf32>, vector<8x128xf32>, vector<16x128xf32> -> vector<16x128xf32>
    %66 = vector.extract_strided_slice %38 {offsets = [16, 0], sizes = [16, 128], strides = [1, 1]} : vector<32x128xf32> to vector<16x128xf32>
    %67 = arith.mulf %65, %66 : vector<16x128xf32>
    %68 = arith.addf %63, %67 : vector<16x128xf32>
    %69 = vector.extract_strided_slice %36 {offsets = [16, 0], sizes = [16, 128], strides = [1, 1]} : vector<32x128xf32> to vector<16x128xf32>
    %70 = vector.extract_strided_slice %37 {offsets = [0, 0], sizes = [16, 128], strides = [1, 1]} : vector<32x128xf32> to vector<16x128xf32>
    %71 = arith.mulf %69, %70 : vector<16x128xf32>
    %cst_51 = arith.constant dense<0.000000e+00> : vector<16x8xf32>
    %72 = tpu.matmul %71, %5, %cst_51 {dimension_numbers = #tpu.dot_dimension_numbers<[1], [0], [0], [1], [0, 0, 1, 1], [], []>} : vector<16x128xf32>, vector<128x8xf32>, vector<16x8xf32> -> vector<16x8xf32>
    %73 = vector.extract_strided_slice %4 {offsets = [0, 0], sizes = [16, 8], strides = [1, 1]} : vector<32x8xf32> to vector<16x8xf32>
    %74 = arith.addf %72, %73 : vector<16x8xf32>
    %75 = vector.extract_strided_slice %37 {offsets = [16, 0], sizes = [16, 128], strides = [1, 1]} : vector<32x128xf32> to vector<16x128xf32>
    %76 = arith.mulf %69, %75 : vector<16x128xf32>
    %cst_52 = arith.constant dense<0.000000e+00> : vector<16x8xf32>
    %77 = tpu.matmul %76, %5, %cst_52 {dimension_numbers = #tpu.dot_dimension_numbers<[1], [0], [0], [1], [0, 0, 1, 1], [], []>} : vector<16x128xf32>, vector<128x8xf32>, vector<16x8xf32> -> vector<16x8xf32>
    %78 = vector.extract_strided_slice %4 {offsets = [16, 0], sizes = [16, 8], strides = [1, 1]} : vector<32x8xf32> to vector<16x8xf32>
    %79 = arith.addf %77, %78 : vector<16x8xf32>
    %80 = arith.maximumf %74, %79 : vector<16x8xf32>
    %81 = arith.subf %74, %80 : vector<16x8xf32>
    %82 = math.exp %81 : vector<16x8xf32>
    %83 = arith.subf %79, %80 : vector<16x8xf32>
    %84 = math.exp %83 : vector<16x8xf32>
    %85 = arith.addf %82, %84 : vector<16x8xf32>
    %cst_53 = arith.constant 1.000000e+00 : f32
    %86 = vector.broadcast %cst_53 : f32 to vector<16x8xf32>
    %87 = arith.divf %86, %85 : vector<16x8xf32>
    %cst_54 = arith.constant 0.000000e+00 : f32
    %88 = vector.broadcast %cst_54 : f32 to vector<16x128xf32>
    %89 = arith.mulf %82, %87 : vector<16x8xf32>
    %cst_55 = arith.constant dense<0.000000e+00> : vector<16x128xf32>
    %90 = tpu.matmul %89, %6, %cst_55 {dimension_numbers = #tpu.dot_dimension_numbers<[1], [0], [0], [1], [0, 0, 1, 1], [], []>} : vector<16x8xf32>, vector<8x128xf32>, vector<16x128xf32> -> vector<16x128xf32>
    %91 = vector.extract_strided_slice %38 {offsets = [0, 0], sizes = [16, 128], strides = [1, 1]} : vector<32x128xf32> to vector<16x128xf32>
    %92 = arith.mulf %90, %91 : vector<16x128xf32>
    %93 = arith.addf %88, %92 : vector<16x128xf32>
    %94 = arith.mulf %84, %87 : vector<16x8xf32>
    %cst_56 = arith.constant dense<0.000000e+00> : vector<16x128xf32>
    %95 = tpu.matmul %94, %6, %cst_56 {dimension_numbers = #tpu.dot_dimension_numbers<[1], [0], [0], [1], [0, 0, 1, 1], [], []>} : vector<16x8xf32>, vector<8x128xf32>, vector<16x128xf32> -> vector<16x128xf32>
    %96 = vector.extract_strided_slice %38 {offsets = [16, 0], sizes = [16, 128], strides = [1, 1]} : vector<32x128xf32> to vector<16x128xf32>
    %97 = arith.mulf %95, %96 : vector<16x128xf32>
    %98 = arith.addf %93, %97 : vector<16x128xf32>
    %99 = tpu.concatenate %68, %98 in 0 : vector<16x128xf32>, vector<16x128xf32> -> vector<32x128xf32>
    %cst_57 = arith.constant dense<0.000000e+00> : vector<32x128xf32>
    %100 = tpu.matmul %99, %12, %cst_57 {dimension_numbers = #tpu.dot_dimension_numbers<[1], [0], [0], [1], [0, 0, 1, 1], [], []>} : vector<32x128xf32>, vector<128x128xf32>, vector<32x128xf32> -> vector<32x128xf32>
    %101 = vector.broadcast %14 : vector<1x128xf32> to vector<32x128xf32>
    %102 = arith.addf %100, %101 : vector<32x128xf32>
    %103 = arith.addf %3, %102 : vector<32x128xf32>
    %cst_58 = arith.constant dense<0.000000e+00> : vector<32xf32>
    %104 = vector.multi_reduction <add>, %103, %cst_58 [1] : vector<32x128xf32> to vector<32xf32>
    %105 = vector.shape_cast %104 : vector<32xf32> to vector<32x1xf32>
    %cst_59 = arith.constant 1.280000e+02 : f32
    %106 = vector.broadcast %cst_59 : f32 to vector<32x1xf32>
    %107 = arith.divf %105, %106 : vector<32x1xf32>
    %108 = vector.broadcast %107 : vector<32x1xf32> to vector<32x128xf32>
    %109 = arith.subf %103, %108 : vector<32x128xf32>
    %110 = arith.mulf %109, %109 : vector<32x128xf32>
    %cst_60 = arith.constant dense<0.000000e+00> : vector<32xf32>
    %111 = vector.multi_reduction <add>, %110, %cst_60 [1] : vector<32x128xf32> to vector<32xf32>
    %112 = vector.shape_cast %111 : vector<32xf32> to vector<32x1xf32>
    %cst_61 = arith.constant 1.280000e+02 : f32
    %113 = vector.broadcast %cst_61 : f32 to vector<32x1xf32>
    %114 = arith.divf %112, %113 : vector<32x1xf32>
    %cst_62 = arith.constant 9.99999974E-6 : f32
    %115 = vector.broadcast %cst_62 : f32 to vector<32x1xf32>
    %116 = arith.addf %114, %115 : vector<32x1xf32>
    %117 = math.rsqrt %116 : vector<32x1xf32>
    %118 = vector.broadcast %117 : vector<32x1xf32> to vector<32x128xf32>
    %119 = arith.mulf %109, %118 : vector<32x128xf32>
    %120 = vector.broadcast %16 : vector<1x128xf32> to vector<32x128xf32>
    %121 = arith.mulf %119, %120 : vector<32x128xf32>
    %122 = vector.broadcast %18 : vector<1x128xf32> to vector<32x128xf32>
    %123 = arith.addf %121, %122 : vector<32x128xf32>
    %cst_63 = arith.constant dense<0.000000e+00> : vector<32x256xf32>
    %124 = tpu.matmul %123, %20, %cst_63 {dimension_numbers = #tpu.dot_dimension_numbers<[1], [0], [0], [1], [0, 0, 1, 1], [], []>} : vector<32x128xf32>, vector<128x256xf32>, vector<32x256xf32> -> vector<32x256xf32>
    %125 = vector.broadcast %22 : vector<1x256xf32> to vector<32x256xf32>
    %126 = arith.addf %124, %125 : vector<32x256xf32>
    %cst_64 = arith.constant 0.000000e+00 : f32
    %127 = vector.broadcast %cst_64 : f32 to vector<32x256xf32>
    %128 = arith.maximumf %126, %127 : vector<32x256xf32>
    %cst_65 = arith.constant dense<0.000000e+00> : vector<32x128xf32>
    %129 = tpu.matmul %128, %24, %cst_65 {dimension_numbers = #tpu.dot_dimension_numbers<[1], [0], [0], [1], [0, 0, 1, 1], [], []>} : vector<32x256xf32>, vector<256x128xf32>, vector<32x128xf32> -> vector<32x128xf32>
    %130 = vector.broadcast %26 : vector<1x128xf32> to vector<32x128xf32>
    %131 = arith.addf %129, %130 : vector<32x128xf32>
    %132 = arith.addf %123, %131 : vector<32x128xf32>
    %cst_66 = arith.constant dense<0.000000e+00> : vector<32xf32>
    %133 = vector.multi_reduction <add>, %132, %cst_66 [1] : vector<32x128xf32> to vector<32xf32>
    %134 = vector.shape_cast %133 : vector<32xf32> to vector<32x1xf32>
    %cst_67 = arith.constant 1.280000e+02 : f32
    %135 = vector.broadcast %cst_67 : f32 to vector<32x1xf32>
    %136 = arith.divf %134, %135 : vector<32x1xf32>
    %137 = vector.broadcast %136 : vector<32x1xf32> to vector<32x128xf32>
    %138 = arith.subf %132, %137 : vector<32x128xf32>
    %139 = arith.mulf %138, %138 : vector<32x128xf32>
    %cst_68 = arith.constant dense<0.000000e+00> : vector<32xf32>
    %140 = vector.multi_reduction <add>, %139, %cst_68 [1] : vector<32x128xf32> to vector<32xf32>
    %141 = vector.shape_cast %140 : vector<32xf32> to vector<32x1xf32>
    %cst_69 = arith.constant 1.280000e+02 : f32
    %142 = vector.broadcast %cst_69 : f32 to vector<32x1xf32>
    %143 = arith.divf %141, %142 : vector<32x1xf32>
    %cst_70 = arith.constant 9.99999974E-6 : f32
    %144 = vector.broadcast %cst_70 : f32 to vector<32x1xf32>
    %145 = arith.addf %143, %144 : vector<32x1xf32>
    %146 = math.rsqrt %145 : vector<32x1xf32>
    %147 = vector.broadcast %146 : vector<32x1xf32> to vector<32x128xf32>
    %148 = arith.mulf %138, %147 : vector<32x128xf32>
    %149 = vector.broadcast %28 : vector<1x128xf32> to vector<32x128xf32>
    %150 = arith.mulf %148, %149 : vector<32x128xf32>
    %151 = vector.broadcast %30 : vector<1x128xf32> to vector<32x128xf32>
    %152 = arith.addf %150, %151 : vector<32x128xf32>
    %c0_71 = arith.constant 0 : index
    %c0_72 = arith.constant 0 : index
    %153 = vector.load %arg22[%c0_71, %c0_72] : memref<32x128xf32, #tpu.memory_space<vmem>>, vector<32x128xf32>
    tpu.vector_store %arg22[%c0_71, %c0_72], %152 {strides = array<i32>} : memref<32x128xf32, #tpu.memory_space<vmem>>, vector<32x128xf32>,
    %c1_i32 = arith.constant 1 : i32
    %154 = arith.cmpi eq, %arg0, %c1_i32 : i32
    %155 = arith.extui %154 : i1 to i32
    %c0_i32_73 = arith.constant 0 : i32
    %156 = arith.cmpi ne, %155, %c0_i32_73 : i32
    scf.if %156 {
      %c0_74 = arith.constant 0 : index
      %c0_75 = arith.constant 0 : index
      %157 = vector.load %arg6[%c0_74, %c0_75] : memref<2x32xf32, #tpu.memory_space<vmem>>, vector<2x32xf32>
      %c0_76 = arith.constant 0 : index
      %c0_77 = arith.constant 0 : index
      %158 = vector.load %arg7[%c0_76, %c0_77] : memref<128x1xf32, #tpu.memory_space<vmem>>, vector<128x1xf32>
      %c0_78 = arith.constant 0 : index
      %c0_79 = arith.constant 0 : index
      %159 = vector.load %arg8[%c0_78, %c0_79] : memref<1x1xf32, #tpu.memory_space<vmem>>, vector<1x1xf32>
      %cst_80 = arith.constant dense<0.000000e+00> : vector<2x128xf32>
      %160 = tpu.matmul %157, %152, %cst_80 {dimension_numbers = #tpu.dot_dimension_numbers<[1], [0], [0], [1], [0, 0, 1, 1], [], []>} : vector<2x32xf32>, vector<32x128xf32>, vector<2x128xf32> -> vector<2x128xf32>
      %cst_81 = arith.constant dense<0.000000e+00> : vector<2x1xf32>
      %161 = tpu.matmul %160, %158, %cst_81 {dimension_numbers = #tpu.dot_dimension_numbers<[1], [0], [0], [1], [0, 0, 1, 1], [], []>} : vector<2x128xf32>, vector<128x1xf32>, vector<2x1xf32> -> vector<2x1xf32>
      %162 = vector.broadcast %159 : vector<1x1xf32> to vector<2x1xf32>
      %163 = arith.addf %161, %162 : vector<2x1xf32>
      %c0_82 = arith.constant 0 : index
      %c0_83 = arith.constant 0 : index
      %164 = vector.load %arg21[%c0_82, %c0_83] : memref<2x1xf32, #tpu.memory_space<vmem>>, vector<2x1xf32>
      tpu.vector_store %arg21[%c0_82, %c0_83], %163 {strides = array<i32>} : memref<2x1xf32, #tpu.memory_space<vmem>>, vector<2x1xf32>,
    } else {
    }
    return
  }
  func.func @transform_0(%arg0: i32) -> (i32, i32) {
    %c0_i32 = arith.constant 0 : i32
    %c0_i32_0 = arith.constant 0 : i32
    %c0_i32_1 = arith.constant 0 : i32
    return %c0_i32, %c0_i32_0 : i32, i32
  }
  func.func @transform_1(%arg0: i32) -> (i32, i32) {
    %c0_i32 = arith.constant 0 : i32
    %c0_i32_0 = arith.constant 0 : i32
    %c0_i32_1 = arith.constant 0 : i32
    return %c0_i32, %c0_i32_0 : i32, i32
  }
  func.func @transform_2(%arg0: i32) -> (i32, i32) {
    %c0_i32 = arith.constant 0 : i32
    %c0_i32_0 = arith.constant 0 : i32
    %c0_i32_1 = arith.constant 0 : i32
    return %c0_i32, %c0_i32_0 : i32, i32
  }
  func.func @transform_3(%arg0: i32) -> (i32, i32) {
    %c0_i32 = arith.constant 0 : i32
    %c0_i32_0 = arith.constant 0 : i32
    %c0_i32_1 = arith.constant 0 : i32
    return %c0_i32, %c0_i32_0 : i32, i32
  }
  func.func @transform_4(%arg0: i32) -> (i32, i32) {
    %c0_i32 = arith.constant 0 : i32
    %c0_i32_0 = arith.constant 0 : i32
    %c0_i32_1 = arith.constant 0 : i32
    return %c0_i32, %c0_i32_0 : i32, i32
  }
  func.func @transform_5(%arg0: i32) -> (i32, i32) {
    %c0_i32 = arith.constant 0 : i32
    %c0_i32_0 = arith.constant 0 : i32
    %c0_i32_1 = arith.constant 0 : i32
    return %c0_i32, %c0_i32_0 : i32, i32
  }
  func.func @transform_6(%arg0: i32) -> (i32, i32) {
    %c0_i32 = arith.constant 0 : i32
    %c0_i32_0 = arith.constant 0 : i32
    %c0_i32_1 = arith.constant 0 : i32
    return %c0_i32, %c0_i32_0 : i32, i32
  }
  func.func @transform_7(%arg0: i32) -> (i32, i32) {
    %c0_i32 = arith.constant 0 : i32
    %c0_i32_0 = arith.constant 0 : i32
    %c0_i32_1 = arith.constant 0 : i32
    return %c0_i32, %c0_i32_0 : i32, i32
  }
  func.func @transform_8(%arg0: i32) -> (i32, i32, i32) {
    %c0_i32 = arith.constant 0 : i32
    %c0_i32_0 = arith.constant 0 : i32
    %c0_i32_1 = arith.constant 0 : i32
    return %arg0, %c0_i32, %c0_i32_0 : i32, i32, i32
  }
  func.func @transform_9(%arg0: i32) -> (i32, i32, i32) {
    %c0_i32 = arith.constant 0 : i32
    %c0_i32_0 = arith.constant 0 : i32
    %c0_i32_1 = arith.constant 0 : i32
    return %arg0, %c0_i32, %c0_i32_0 : i32, i32, i32
  }
  func.func @transform_10(%arg0: i32) -> (i32, i32, i32) {
    %c0_i32 = arith.constant 0 : i32
    %c0_i32_0 = arith.constant 0 : i32
    %c0_i32_1 = arith.constant 0 : i32
    return %arg0, %c0_i32, %c0_i32_0 : i32, i32, i32
  }
  func.func @transform_11(%arg0: i32) -> (i32, i32, i32) {
    %c0_i32 = arith.constant 0 : i32
    %c0_i32_0 = arith.constant 0 : i32
    %c0_i32_1 = arith.constant 0 : i32
    return %arg0, %c0_i32, %c0_i32_0 : i32, i32, i32
  }
  func.func @transform_12(%arg0: i32) -> (i32, i32, i32) {
    %c0_i32 = arith.constant 0 : i32
    %c0_i32_0 = arith.constant 0 : i32
    %c0_i32_1 = arith.constant 0 : i32
    return %arg0, %c0_i32, %c0_i32_0 : i32, i32, i32
  }
  func.func @transform_13(%arg0: i32) -> (i32, i32, i32) {
    %c0_i32 = arith.constant 0 : i32
    %c0_i32_0 = arith.constant 0 : i32
    %c0_i32_1 = arith.constant 0 : i32
    return %arg0, %c0_i32, %c0_i32_0 : i32, i32, i32
  }
  func.func @transform_14(%arg0: i32) -> (i32, i32, i32) {
    %c0_i32 = arith.constant 0 : i32
    %c0_i32_0 = arith.constant 0 : i32
    %c0_i32_1 = arith.constant 0 : i32
    return %arg0, %c0_i32, %c0_i32_0 : i32, i32, i32
  }
  func.func @transform_15(%arg0: i32) -> (i32, i32, i32) {
    %c0_i32 = arith.constant 0 : i32
    %c0_i32_0 = arith.constant 0 : i32
    %c0_i32_1 = arith.constant 0 : i32
    return %arg0, %c0_i32, %c0_i32_0 : i32, i32, i32
  }
  func.func @transform_16(%arg0: i32) -> (i32, i32, i32) {
    %c0_i32 = arith.constant 0 : i32
    %c0_i32_0 = arith.constant 0 : i32
    %c0_i32_1 = arith.constant 0 : i32
    return %arg0, %c0_i32, %c0_i32_0 : i32, i32, i32
  }
  func.func @transform_17(%arg0: i32) -> (i32, i32, i32) {
    %c0_i32 = arith.constant 0 : i32
    %c0_i32_0 = arith.constant 0 : i32
    %c0_i32_1 = arith.constant 0 : i32
    return %arg0, %c0_i32, %c0_i32_0 : i32, i32, i32
  }
  func.func @transform_18(%arg0: i32) -> (i32, i32, i32) {
    %c0_i32 = arith.constant 0 : i32
    %c0_i32_0 = arith.constant 0 : i32
    %c0_i32_1 = arith.constant 0 : i32
    return %arg0, %c0_i32, %c0_i32_0 : i32, i32, i32
  }
  func.func @transform_19(%arg0: i32) -> (i32, i32, i32) {
    %c0_i32 = arith.constant 0 : i32
    %c0_i32_0 = arith.constant 0 : i32
    %c0_i32_1 = arith.constant 0 : i32
    return %arg0, %c0_i32, %c0_i32_0 : i32, i32, i32
  }
  func.func @transform_20(%arg0: i32) -> (i32, i32) {
    %c0_i32 = arith.constant 0 : i32
    %c0_i32_0 = arith.constant 0 : i32
    %c0_i32_1 = arith.constant 0 : i32
    return %c0_i32, %c0_i32_0 : i32, i32
  }
}

</mosaic_0001>

<llo_original>
// kernel: transformer_forward.1
$region0: #{transformer_forward.1}
  #allocation0 [shape = 'u32[]', space=smem, size = 0x4, offset = 0x4, fixed_abs, tag = 'smem constant byte address 0x4 - core index']
  #allocation1 [shape = 'u32[144,128]{1,0:T(1,128)}', space=vmem, size = 0x12000, scoped, tag = 'internal scratch']
  #allocation2 [shape = 'f32[32,128]{1,0:T(8,128)}', space=vmem, size = 0x4000, scoped, tag = 'scratch operand']
  #allocation3 [shape = 'f32[32,8]{1,0:T(8,128)}', space=vmem, size = 0x4000, scoped, tag = 'scratch operand']
  #allocation4 [shape = 'f32[1,1]{1,0:T(1,128)S(1)}', space=vmem, size = 0x200, scoped, tag = 'scoped memory for transformer_forward.1']
  %s0 = inlined_call_operand.vmem [shape: f32[32,640], index: 0, kind: input, shape index: {}]
  %s1 = inlined_call_operand.vmem [shape: f32[640,128], index: 1, kind: input, shape index: {}]
  %s2 = inlined_call_operand.vmem [shape: f32[32,128], index: 2, kind: input, shape index: {}]
  %s3 = inlined_call_operand.vmem [shape: f32[128,8], index: 3, kind: input, shape index: {}]
  %s4 = inlined_call_operand.vmem [shape: f32[8,128], index: 4, kind: input, shape index: {}]
  %s5 = inlined_call_operand.vmem [shape: f32[2,32], index: 5, kind: input, shape index: {}]
  %s6 = inlined_call_operand.vmem [shape: f32[128,1], index: 6, kind: input, shape index: {}]
  %s7 = inlined_call_operand.<no memory space> [shape: f32[1,1], index: 7, kind: input, shape index: {}]
  %s8 = inlined_call_operand.vmem [shape: f32[2,128,384], index: 8, kind: input, shape index: {}]
  %s9 = inlined_call_operand.vmem [shape: f32[2,1,384], index: 9, kind: input, shape index: {}]
  %s10 = inlined_call_operand.hbm [shape: f32[2,128,128], index: 10, kind: input, shape index: {}]
  %s11 = inlined_call_operand.vmem [shape: f32[2,1,128], index: 11, kind: input, shape index: {}]
  %s12 = inlined_call_operand.vmem [shape: f32[2,1,128], index: 12, kind: input, shape index: {}]
  %s13 = inlined_call_operand.vmem [shape: f32[2,1,128], index: 13, kind: input, shape index: {}]
  %s14 = inlined_call_operand.vmem [shape: f32[2,128,256], index: 14, kind: input, shape index: {}]
  %s15 = inlined_call_operand.vmem [shape: f32[2,1,256], index: 15, kind: input, shape index: {}]
  %s16 = inlined_call_operand.hbm [shape: f32[2,256,128], index: 16, kind: input, shape index: {}]
  %s17 = inlined_call_operand.vmem [shape: f32[2,1,128], index: 17, kind: input, shape index: {}]
  %s18 = inlined_call_operand.vmem [shape: f32[2,1,128], index: 18, kind: input, shape index: {}]
  %s19 = inlined_call_operand.vmem [shape: f32[2,1,128], index: 19, kind: input, shape index: {}]
  %s20 = inlined_call_operand.vmem [shape: f32[2,1], index: 20, kind: output, shape index: {}]
  %s21 = sld [smem:[#allocation0]]
  $region129: #{transformer_forward.1} parent=0
    _
  %s23 = ssub.s32 1, %s21
  %s24 = scalar_select 0, %s23, %s21
  %v25 = vstv %s7
  %26 = vst [vmem:[#allocation4] sm:$0x1] %v25
  $region1: #{transformer_forward.1} parent=0
    #allocation5 [shape = 'u8[131072]{0}', space=vmem, size = 0x20000, scoped, tag = 'input window, operand 10']
    #allocation6 [shape = 's32[2]{0}', space=sflag, size = 0x8, scoped, tag = 'scoped memory for transformer_forward.1']
    #allocation7 [shape = 'u8[262144]{0}', space=vmem, size = 0x40000, scoped, tag = 'input window, operand 16']
    #allocation8 [shape = 's32[2]{0}', space=sflag, size = 0x8, scoped, tag = 'scoped memory for transformer_forward.1']
    %27 = vsyncpa [#allocation6], 0
    %s28 = scalar_lea.sflag [#allocation6], 1
    %29 = vsyncpa %s28, 0
    %30 = vsyncpa [#allocation8], 0
    %s31 = scalar_lea.sflag [#allocation8], 1
    %32 = vsyncpa %s31, 0
    loop: start=0, step=1, limit=4
    $region2: #{transformer_forward.1} parent=1 // loop_pre_header
      _
    $region3: #{transformer_forward.1} parent=1 // loop_header
      %s34 = sphi 0, %s38
      %p35 = scmp.ge.s32.totalorder %s34, 4
      %s42 = sphi 0, %s42
      %s44 = sphi 0, %s42
      %s45 = sphi 0, %s44
      %s59 = sphi 0, %s45
      %s63 = sphi 0, %s63
      %s65 = sphi 0, %s63
      %s66 = sphi 0, %s65
      %s80 = sphi 0, %s66
      %s84 = sphi 0, %s84
      %s86 = sphi 0, %s84
      %s87 = sphi 0, %s86
      %s101 = sphi 0, %s87
      %s105 = sphi 0, %s105
      %s107 = sphi 0, %s105
      %s108 = sphi 0, %s107
      %s122 = sphi 0, %s108
      %s126 = sphi 0, %s126
      %s128 = sphi 0, %s126
      %s129 = sphi 0, %s128
      %s143 = sphi 0, %s129
      %s147 = sphi 0, %s147
      %s149 = sphi 0, %s147
      %s150 = sphi 0, %s149
      %s164 = sphi 0, %s150
      %s168 = sphi 0, %s168
      %s170 = sphi 0, %s168
      %s171 = sphi 0, %s170
      %s185 = sphi 0, %s171
      %s189 = sphi 0, %s189
      %s191 = sphi 0, %s189
      %s192 = sphi 0, %s191
      %s206 = sphi 0, %s192
      %s212 = sphi 0, %s214
      %s215 = sphi 0, %s212
      %s216 = sphi 0, %s215
      %s232 = sphi 0, %s216
      %s238 = sphi 0, %s240
      %s241 = sphi 0, %s238
      %s242 = sphi 0, %s241
      %s258 = sphi 0, %s242
      %s264 = sphi 0, %s266
      %s267 = sphi 0, %s264
      %s268 = sphi 0, %s267
      %s284 = sphi 0, %s268
      %s290 = sphi 0, %s292
      %s293 = sphi 0, %s290
      %s294 = sphi 0, %s293
      %s310 = sphi 0, %s294
      %s316 = sphi 0, %s318
      %s319 = sphi 0, %s316
      %s320 = sphi 0, %s319
      %s336 = sphi 0, %s320
      %s342 = sphi 0, %s344
      %s345 = sphi 0, %s342
      %s346 = sphi 0, %s345
      %s362 = sphi 0, %s346
      %s368 = sphi 0, %s370
      %s371 = sphi 0, %s368
      %s372 = sphi 0, %s371
      %s388 = sphi 0, %s372
      %s394 = sphi 0, %s396
      %s397 = sphi 0, %s394
      %s398 = sphi 0, %s397
      %s414 = sphi 0, %s398
      %s420 = sphi 0, %s422
      %s423 = sphi 0, %s420
      %s424 = sphi 0, %s423
      %s440 = sphi 0, %s424
      %s446 = sphi 0, %s448
      %s449 = sphi 0, %s446
      %s450 = sphi 0, %s449
      %s466 = sphi 0, %s450
      %s472 = sphi 0, %s474
      %s475 = sphi 0, %s472
      %s476 = sphi 0, %s475
      %s492 = sphi 0, %s476
      %s498 = sphi 0, %s500
      %s501 = sphi 0, %s498
      %s502 = sphi 0, %s501
      %s518 = sphi 0, %s502
      %s522 = sphi 0, %s522
      %s524 = sphi 0, %s522
      %s525 = sphi 0, %s524
      %s539 = sphi 0, %s525
    $region4: #{transformer_forward.1} parent=1 // loop_header_branch
      %37 = sbr.rel (%p35) target = $region8
    $region5: #{transformer_forward.1} parent=1 // loop_body
      %s39 = ssub.s32 %s34, 1
      %s40 = ssub.s32 %s34, 2
      %s41 = sadd.s32 %s34, 1
      %s43 = sadd.s32 %s42, 1
      %p46 = scmp.eq.s32.totalorder %s34, 1
      %p47 = scmp.ne.s32.totalorder %s42, %s44
      %p48 = scmp.eq.s32.totalorder %s34, 0
      %p49 = por %p47, %p48
      %p50 = scmp.ne.s32.totalorder %s42, %s44
      %p51 = scmp.eq.s32.totalorder %s39, 1
      %p52 = por %p50, %p51
      %p53 = scmp.ne.s32.totalorder %s44, %s45
      %p54 = scmp.eq.s32.totalorder %s39, 0
      %p55 = por %p53, %p54
      %p56 = scmp.ne.s32.totalorder %s44, %s45
      %p57 = scmp.eq.s32.totalorder %s40, 1
      %p58 = por %p56, %p57
      %p60 = scmp.ne.s32.totalorder %s45, %s59
      %p61 = scmp.eq.s32.totalorder %s40, 0
      %p62 = por %p60, %p61
      %s64 = sadd.s32 %s63, 1
      %p67 = scmp.eq.s32.totalorder %s34, 1
      %p68 = scmp.ne.s32.totalorder %s63, %s65
      %p69 = scmp.eq.s32.totalorder %s34, 0
      %p70 = por %p68, %p69
      %p71 = scmp.ne.s32.totalorder %s63, %s65
      %p72 = scmp.eq.s32.totalorder %s39, 1
      %p73 = por %p71, %p72
      %p74 = scmp.ne.s32.totalorder %s65, %s66
      %p75 = scmp.eq.s32.totalorder %s39, 0
      %p76 = por %p74, %p75
      %p77 = scmp.ne.s32.totalorder %s65, %s66
      %p78 = scmp.eq.s32.totalorder %s40, 1
      %p79 = por %p77, %p78
      %p81 = scmp.ne.s32.totalorder %s66, %s80
      %p82 = scmp.eq.s32.totalorder %s40, 0
      %p83 = por %p81, %p82
      %s85 = sadd.s32 %s84, 1
      %p88 = scmp.eq.s32.totalorder %s34, 1
      %p89 = scmp.ne.s32.totalorder %s84, %s86
      %p90 = scmp.eq.s32.totalorder %s34, 0
      %p91 = por %p89, %p90
      %p92 = scmp.ne.s32.totalorder %s84, %s86
      %p93 = scmp.eq.s32.totalorder %s39, 1
      %p94 = por %p92, %p93
      %p95 = scmp.ne.s32.totalorder %s86, %s87
      %p96 = scmp.eq.s32.totalorder %s39, 0
      %p97 = por %p95, %p96
      %p98 = scmp.ne.s32.totalorder %s86, %s87
      %p99 = scmp.eq.s32.totalorder %s40, 1
      %p100 = por %p98, %p99
      %p102 = scmp.ne.s32.totalorder %s87, %s101
      %p103 = scmp.eq.s32.totalorder %s40, 0
      %p104 = por %p102, %p103
      %s106 = sadd.s32 %s105, 1
      %p109 = scmp.eq.s32.totalorder %s34, 1
      %p110 = scmp.ne.s32.totalorder %s105, %s107
      %p111 = scmp.eq.s32.totalorder %s34, 0
      %p112 = por %p110, %p111
      %p113 = scmp.ne.s32.totalorder %s105, %s107
      %p114 = scmp.eq.s32.totalorder %s39, 1
      %p115 = por %p113, %p114
      %p116 = scmp.ne.s32.totalorder %s107, %s108
      %p117 = scmp.eq.s32.totalorder %s39, 0
      %p118 = por %p116, %p117
      %p119 = scmp.ne.s32.totalorder %s107, %s108
      %p120 = scmp.eq.s32.totalorder %s40, 1
      %p121 = por %p119, %p120
      %p123 = scmp.ne.s32.totalorder %s108, %s122
      %p124 = scmp.eq.s32.totalorder %s40, 0
      %p125 = por %p123, %p124
      %s127 = sadd.s32 %s126, 1
      %p130 = scmp.eq.s32.totalorder %s34, 1
      %p131 = scmp.ne.s32.totalorder %s126, %s128
      %p132 = scmp.eq.s32.totalorder %s34, 0
      %p133 = por %p131, %p132
      %p134 = scmp.ne.s32.totalorder %s126, %s128
      %p135 = scmp.eq.s32.totalorder %s39, 1
      %p136 = por %p134, %p135
      %p137 = scmp.ne.s32.totalorder %s128, %s129
      %p138 = scmp.eq.s32.totalorder %s39, 0
      %p139 = por %p137, %p138
      %p140 = scmp.ne.s32.totalorder %s128, %s129
      %p141 = scmp.eq.s32.totalorder %s40, 1
      %p142 = por %p140, %p141
      %p144 = scmp.ne.s32.totalorder %s129, %s143
      %p145 = scmp.eq.s32.totalorder %s40, 0
      %p146 = por %p144, %p145
      %s148 = sadd.s32 %s147, 1
      %p151 = scmp.eq.s32.totalorder %s34, 1
      %p152 = scmp.ne.s32.totalorder %s147, %s149
      %p153 = scmp.eq.s32.totalorder %s34, 0
      %p154 = por %p152, %p153
      %p155 = scmp.ne.s32.totalorder %s147, %s149
      %p156 = scmp.eq.s32.totalorder %s39, 1
      %p157 = por %p155, %p156
      %p158 = scmp.ne.s32.totalorder %s149, %s150
      %p159 = scmp.eq.s32.totalorder %s39, 0
      %p160 = por %p158, %p159
      %p161 = scmp.ne.s32.totalorder %s149, %s150
      %p162 = scmp.eq.s32.totalorder %s40, 1
      %p163 = por %p161, %p162
      %p165 = scmp.ne.s32.totalorder %s150, %s164
      %p166 = scmp.eq.s32.totalorder %s40, 0
      %p167 = por %p165, %p166
      %s169 = sadd.s32 %s168, 1
      %p172 = scmp.eq.s32.totalorder %s34, 1
      %p173 = scmp.ne.s32.totalorder %s168, %s170
      %p174 = scmp.eq.s32.totalorder %s34, 0
      %p175 = por %p173, %p174
      %p176 = scmp.ne.s32.totalorder %s168, %s170
      %p177 = scmp.eq.s32.totalorder %s39, 1
      %p178 = por %p176, %p177
      %p179 = scmp.ne.s32.totalorder %s170, %s171
      %p180 = scmp.eq.s32.totalorder %s39, 0
      %p181 = por %p179, %p180
      %p182 = scmp.ne.s32.totalorder %s170, %s171
      %p183 = scmp.eq.s32.totalorder %s40, 1
      %p184 = por %p182, %p183
      %p186 = scmp.ne.s32.totalorder %s171, %s185
      %p187 = scmp.eq.s32.totalorder %s40, 0
      %p188 = por %p186, %p187
      %s190 = sadd.s32 %s189, 1
      %p193 = scmp.eq.s32.totalorder %s34, 1
      %p194 = scmp.ne.s32.totalorder %s189, %s191
      %p195 = scmp.eq.s32.totalorder %s34, 0
      %p196 = por %p194, %p195
      %p197 = scmp.ne.s32.totalorder %s189, %s191
      %p198 = scmp.eq.s32.totalorder %s39, 1
      %p199 = por %p197, %p198
      %p200 = scmp.ne.s32.totalorder %s191, %s192
      %p201 = scmp.eq.s32.totalorder %s39, 0
      %p202 = por %p200, %p201
      %p203 = scmp.ne.s32.totalorder %s191, %s192
      %p204 = scmp.eq.s32.totalorder %s40, 1
      %p205 = por %p203, %p204
      %p207 = scmp.ne.s32.totalorder %s192, %s206
      %p208 = scmp.eq.s32.totalorder %s40, 0
      %p209 = por %p207, %p208
      %s210 = ssub.s32 %s34, %s41
      %p211 = scmp.eq.s32.totalorder %s210, 0
      %s213 = sadd.s32 %s212, 1
      %s214 = scalar_select %p211, %s212, %s213
      %p217 = pneg %p211
      %p218 = scmp.eq.s32.totalorder %s34, 1
      %p219 = por %p217, %p218
      %p220 = scmp.ne.s32.totalorder %s212, %s215
      %p221 = scmp.eq.s32.totalorder %s34, 0
      %p222 = por %p220, %p221
      %p223 = scmp.ne.s32.totalorder %s212, %s215
      %p224 = scmp.eq.s32.totalorder %s39, 1
      %p225 = por %p223, %p224
      %p226 = scmp.ne.s32.totalorder %s215, %s216
      %p227 = scmp.eq.s32.totalorder %s39, 0
      %p228 = por %p226, %p227
      %p229 = scmp.ne.s32.totalorder %s215, %s216
      %p230 = scmp.eq.s32.totalorder %s40, 1
      %p231 = por %p229, %p230
      %p233 = scmp.ne.s32.totalorder %s216, %s232
      %p234 = scmp.eq.s32.totalorder %s40, 0
      %p235 = por %p233, %p234
      %s236 = ssub.s32 %s34, %s41
      %p237 = scmp.eq.s32.totalorder %s236, 0
      %s239 = sadd.s32 %s238, 1
      %s240 = scalar_select %p237, %s238, %s239
      %p243 = pneg %p237
      %p244 = scmp.eq.s32.totalorder %s34, 1
      %p245 = por %p243, %p244
      %p246 = scmp.ne.s32.totalorder %s238, %s241
      %p247 = scmp.eq.s32.totalorder %s34, 0
      %p248 = por %p246, %p247
      %p249 = scmp.ne.s32.totalorder %s238, %s241
      %p250 = scmp.eq.s32.totalorder %s39, 1
      %p251 = por %p249, %p250
      %p252 = scmp.ne.s32.totalorder %s241, %s242
      %p253 = scmp.eq.s32.totalorder %s39, 0
      %p254 = por %p252, %p253
      %p255 = scmp.ne.s32.totalorder %s241, %s242
      %p256 = scmp.eq.s32.totalorder %s40, 1
      %p257 = por %p255, %p256
      %p259 = scmp.ne.s32.totalorder %s242, %s258
      %p260 = scmp.eq.s32.totalorder %s40, 0
      %p261 = por %p259, %p260
      %s262 = ssub.s32 %s34, %s41
      %p263 = scmp.eq.s32.totalorder %s262, 0
      %s265 = sadd.s32 %s264, 1
      %s266 = scalar_select %p263, %s264, %s265
      %p269 = pneg %p263
      %p270 = scmp.eq.s32.totalorder %s34, 1
      %p271 = por %p269, %p270
      %p272 = scmp.ne.s32.totalorder %s264, %s267
      %p273 = scmp.eq.s32.totalorder %s34, 0
      %p274 = por %p272, %p273
      %p275 = scmp.ne.s32.totalorder %s264, %s267
      %p276 = scmp.eq.s32.totalorder %s39, 1
      %p277 = por %p275, %p276
      %p278 = scmp.ne.s32.totalorder %s267, %s268
      %p279 = scmp.eq.s32.totalorder %s39, 0
      %p280 = por %p278, %p279
      %p281 = scmp.ne.s32.totalorder %s267, %s268
      %p282 = scmp.eq.s32.totalorder %s40, 1
      %p283 = por %p281, %p282
      %p285 = scmp.ne.s32.totalorder %s268, %s284
      %p286 = scmp.eq.s32.totalorder %s40, 0
      %p287 = por %p285, %p286
      %s288 = ssub.s32 %s34, %s41
      %p289 = scmp.eq.s32.totalorder %s288, 0
      %s291 = sadd.s32 %s290, 1
      %s292 = scalar_select %p289, %s290, %s291
      %p295 = pneg %p289
      %p296 = scmp.eq.s32.totalorder %s34, 1
      %p297 = por %p295, %p296
      %p298 = scmp.ne.s32.totalorder %s290, %s293
      %p299 = scmp.eq.s32.totalorder %s34, 0
      %p300 = por %p298, %p299
      %p301 = scmp.ne.s32.totalorder %s290, %s293
      %p302 = scmp.eq.s32.totalorder %s39, 1
      %p303 = por %p301, %p302
      %p304 = scmp.ne.s32.totalorder %s293, %s294
      %p305 = scmp.eq.s32.totalorder %s39, 0
      %p306 = por %p304, %p305
      %p307 = scmp.ne.s32.totalorder %s293, %s294
      %p308 = scmp.eq.s32.totalorder %s40, 1
      %p309 = por %p307, %p308
      %p311 = scmp.ne.s32.totalorder %s294, %s310
      %p312 = scmp.eq.s32.totalorder %s40, 0
      %p313 = por %p311, %p312
      %s314 = ssub.s32 %s34, %s41
      %p315 = scmp.eq.s32.totalorder %s314, 0
      %s317 = sadd.s32 %s316, 1
      %s318 = scalar_select %p315, %s316, %s317
      %p321 = pneg %p315
      %p322 = scmp.eq.s32.totalorder %s34, 1
      %p323 = por %p321, %p322
      %p324 = scmp.ne.s32.totalorder %s316, %s319
      %p325 = scmp.eq.s32.totalorder %s34, 0
      %p326 = por %p324, %p325
      %p327 = scmp.ne.s32.totalorder %s316, %s319
      %p328 = scmp.eq.s32.totalorder %s39, 1
      %p329 = por %p327, %p328
      %p330 = scmp.ne.s32.totalorder %s319, %s320
      %p331 = scmp.eq.s32.totalorder %s39, 0
      %p332 = por %p330, %p331
      %p333 = scmp.ne.s32.totalorder %s319, %s320
      %p334 = scmp.eq.s32.totalorder %s40, 1
      %p335 = por %p333, %p334
      %p337 = scmp.ne.s32.totalorder %s320, %s336
      %p338 = scmp.eq.s32.totalorder %s40, 0
      %p339 = por %p337, %p338
      %s340 = ssub.s32 %s34, %s41
      %p341 = scmp.eq.s32.totalorder %s340, 0
      %s343 = sadd.s32 %s342, 1
      %s344 = scalar_select %p341, %s342, %s343
      %p347 = pneg %p341
      %p348 = scmp.eq.s32.totalorder %s34, 1
      %p349 = por %p347, %p348
      %p350 = scmp.ne.s32.totalorder %s342, %s345
      %p351 = scmp.eq.s32.totalorder %s34, 0
      %p352 = por %p350, %p351
      %p353 = scmp.ne.s32.totalorder %s342, %s345
      %p354 = scmp.eq.s32.totalorder %s39, 1
      %p355 = por %p353, %p354
      %p356 = scmp.ne.s32.totalorder %s345, %s346
      %p357 = scmp.eq.s32.totalorder %s39, 0
      %p358 = por %p356, %p357
      %p359 = scmp.ne.s32.totalorder %s345, %s346
      %p360 = scmp.eq.s32.totalorder %s40, 1
      %p361 = por %p359, %p360
      %p363 = scmp.ne.s32.totalorder %s346, %s362
      %p364 = scmp.eq.s32.totalorder %s40, 0
      %p365 = por %p363, %p364
      %s366 = ssub.s32 %s34, %s41
      %p367 = scmp.eq.s32.totalorder %s366, 0
      %s369 = sadd.s32 %s368, 1
      %s370 = scalar_select %p367, %s368, %s369
      %p373 = pneg %p367
      %p374 = scmp.eq.s32.totalorder %s34, 1
      %p375 = por %p373, %p374
      %p376 = scmp.ne.s32.totalorder %s368, %s371
      %p377 = scmp.eq.s32.totalorder %s34, 0
      %p378 = por %p376, %p377
      %p379 = scmp.ne.s32.totalorder %s368, %s371
      %p380 = scmp.eq.s32.totalorder %s39, 1
      %p381 = por %p379, %p380
      %p382 = scmp.ne.s32.totalorder %s371, %s372
      %p383 = scmp.eq.s32.totalorder %s39, 0
      %p384 = por %p382, %p383
      %p385 = scmp.ne.s32.totalorder %s371, %s372
      %p386 = scmp.eq.s32.totalorder %s40, 1
      %p387 = por %p385, %p386
      %p389 = scmp.ne.s32.totalorder %s372, %s388
      %p390 = scmp.eq.s32.totalorder %s40, 0
      %p391 = por %p389, %p390
      %s392 = ssub.s32 %s34, %s41
      %p393 = scmp.eq.s32.totalorder %s392, 0
      %s395 = sadd.s32 %s394, 1
      %s396 = scalar_select %p393, %s394, %s395
      %p399 = pneg %p393
      %p400 = scmp.eq.s32.totalorder %s34, 1
      %p401 = por %p399, %p400
      %p402 = scmp.ne.s32.totalorder %s394, %s397
      %p403 = scmp.eq.s32.totalorder %s34, 0
      %p404 = por %p402, %p403
      %p405 = scmp.ne.s32.totalorder %s394, %s397
      %p406 = scmp.eq.s32.totalorder %s39, 1
      %p407 = por %p405, %p406
      %p408 = scmp.ne.s32.totalorder %s397, %s398
      %p409 = scmp.eq.s32.totalorder %s39, 0
      %p410 = por %p408, %p409
      %p411 = scmp.ne.s32.totalorder %s397, %s398
      %p412 = scmp.eq.s32.totalorder %s40, 1
      %p413 = por %p411, %p412
      %p415 = scmp.ne.s32.totalorder %s398, %s414
      %p416 = scmp.eq.s32.totalorder %s40, 0
      %p417 = por %p415, %p416
      %s418 = ssub.s32 %s34, %s41
      %p419 = scmp.eq.s32.totalorder %s418, 0
      %s421 = sadd.s32 %s420, 1
      %s422 = scalar_select %p419, %s420, %s421
      %p425 = pneg %p419
      %p426 = scmp.eq.s32.totalorder %s34, 1
      %p427 = por %p425, %p426
      %p428 = scmp.ne.s32.totalorder %s420, %s423
      %p429 = scmp.eq.s32.totalorder %s34, 0
      %p430 = por %p428, %p429
      %p431 = scmp.ne.s32.totalorder %s420, %s423
      %p432 = scmp.eq.s32.totalorder %s39, 1
      %p433 = por %p431, %p432
      %p434 = scmp.ne.s32.totalorder %s423, %s424
      %p435 = scmp.eq.s32.totalorder %s39, 0
      %p436 = por %p434, %p435
      %p437 = scmp.ne.s32.totalorder %s423, %s424
      %p438 = scmp.eq.s32.totalorder %s40, 1
      %p439 = por %p437, %p438
      %p441 = scmp.ne.s32.totalorder %s424, %s440
      %p442 = scmp.eq.s32.totalorder %s40, 0
      %p443 = por %p441, %p442
      %s444 = ssub.s32 %s34, %s41
      %p445 = scmp.eq.s32.totalorder %s444, 0
      %s447 = sadd.s32 %s446, 1
      %s448 = scalar_select %p445, %s446, %s447
      %p451 = pneg %p445
      %p452 = scmp.eq.s32.totalorder %s34, 1
      %p453 = por %p451, %p452
      %p454 = scmp.ne.s32.totalorder %s446, %s449
      %p455 = scmp.eq.s32.totalorder %s34, 0
      %p456 = por %p454, %p455
      %p457 = scmp.ne.s32.totalorder %s446, %s449
      %p458 = scmp.eq.s32.totalorder %s39, 1
      %p459 = por %p457, %p458
      %p460 = scmp.ne.s32.totalorder %s449, %s450
      %p461 = scmp.eq.s32.totalorder %s39, 0
      %p462 = por %p460, %p461
      %p463 = scmp.ne.s32.totalorder %s449, %s450
      %p464 = scmp.eq.s32.totalorder %s40, 1
      %p465 = por %p463, %p464
      %p467 = scmp.ne.s32.totalorder %s450, %s466
      %p468 = scmp.eq.s32.totalorder %s40, 0
      %p469 = por %p467, %p468
      %s470 = ssub.s32 %s34, %s41
      %p471 = scmp.eq.s32.totalorder %s470, 0
      %s473 = sadd.s32 %s472, 1
      %s474 = scalar_select %p471, %s472, %s473
      %p477 = pneg %p471
      %p478 = scmp.eq.s32.totalorder %s34, 1
      %p479 = por %p477, %p478
      %p480 = scmp.ne.s32.totalorder %s472, %s475
      %p481 = scmp.eq.s32.totalorder %s34, 0
      %p482 = por %p480, %p481
      %p483 = scmp.ne.s32.totalorder %s472, %s475
      %p484 = scmp.eq.s32.totalorder %s39, 1
      %p485 = por %p483, %p484
      %p486 = scmp.ne.s32.totalorder %s475, %s476
      %p487 = scmp.eq.s32.totalorder %s39, 0
      %p488 = por %p486, %p487
      %p489 = scmp.ne.s32.totalorder %s475, %s476
      %p490 = scmp.eq.s32.totalorder %s40, 1
      %p491 = por %p489, %p490
      %p493 = scmp.ne.s32.totalorder %s476, %s492
      %p494 = scmp.eq.s32.totalorder %s40, 0
      %p495 = por %p493, %p494
      %s496 = ssub.s32 %s34, %s41
      %p497 = scmp.eq.s32.totalorder %s496, 0
      %s499 = sadd.s32 %s498, 1
      %s500 = scalar_select %p497, %s498, %s499
      %p503 = pneg %p497
      %p504 = scmp.eq.s32.totalorder %s34, 1
      %p505 = por %p503, %p504
      %p506 = scmp.ne.s32.totalorder %s498, %s501
      %p507 = scmp.eq.s32.totalorder %s34, 0
      %p508 = por %p506, %p507
      %p509 = scmp.ne.s32.totalorder %s498, %s501
      %p510 = scmp.eq.s32.totalorder %s39, 1
      %p511 = por %p509, %p510
      %p512 = scmp.ne.s32.totalorder %s501, %s502
      %p513 = scmp.eq.s32.totalorder %s39, 0
      %p514 = por %p512, %p513
      %p515 = scmp.ne.s32.totalorder %s501, %s502
      %p516 = scmp.eq.s32.totalorder %s40, 1
      %p517 = por %p515, %p516
      %p519 = scmp.ne.s32.totalorder %s502, %s518
      %p520 = scmp.eq.s32.totalorder %s40, 0
      %p521 = por %p519, %p520
      %s523 = sadd.s32 %s522, 1
      %p526 = scmp.eq.s32.totalorder %s34, 1
      %p527 = scmp.ne.s32.totalorder %s522, %s524
      %p528 = scmp.eq.s32.totalorder %s34, 0
      %p529 = por %p527, %p528
      %p530 = scmp.ne.s32.totalorder %s522, %s524
      %p531 = scmp.eq.s32.totalorder %s39, 1
      %p532 = por %p530, %p531
      %p533 = scmp.ne.s32.totalorder %s524, %s525
      %p534 = scmp.eq.s32.totalorder %s39, 0
      %p535 = por %p533, %p534
      %p536 = scmp.ne.s32.totalorder %s524, %s525
      %p537 = scmp.eq.s32.totalorder %s40, 1
      %p538 = por %p536, %p537
      %p540 = scmp.ne.s32.totalorder %s525, %s539
      %p541 = scmp.eq.s32.totalorder %s40, 0
      %p542 = por %p540, %p541
      %p543 = scmp.le.s32.totalorder 1, %s34
      %p544 = scmp.lt.s32.totalorder %s34, 3
      %p545 = pnand %p543, %p544
      %p546 = pneg %p545
      // Predicated region
      $region9: #{transformer_forward.1} parent=5 // pred_check
        _
      $region10: #{transformer_forward.1} parent=5 // pred_check_branch
        %548 = sbr.rel (%p545) target = $region12
      $region11: #{transformer_forward.1} parent=5 // pred_region
        %s549 = ssub.s32 %s34, 1
        // Predicated region
        $region13: #{transformer_forward.1} parent=11 // pred_check
          %p550 = pneg %p55
        $region14: #{transformer_forward.1} parent=11 // pred_check_branch
          %552 = sbr.rel (%p550) target = $region16
        $region15: #{transformer_forward.1} parent=11 // pred_region
          _
        $region16: #{transformer_forward.1} parent=11 // pred_fallthru
          _
        // Predicated region
        $region17: #{transformer_forward.1} parent=11 // pred_check
          %p553 = pneg %p76
        $region18: #{transformer_forward.1} parent=11 // pred_check_branch
          %555 = sbr.rel (%p553) target = $region20
        $region19: #{transformer_forward.1} parent=11 // pred_region
          _
        $region20: #{transformer_forward.1} parent=11 // pred_fallthru
          _
        // Predicated region
        $region21: #{transformer_forward.1} parent=11 // pred_check
          %p556 = pneg %p97
        $region22: #{transformer_forward.1} parent=11 // pred_check_branch
          %558 = sbr.rel (%p556) target = $region24
        $region23: #{transformer_forward.1} parent=11 // pred_region
          _
        $region24: #{transformer_forward.1} parent=11 // pred_fallthru
          _
        // Predicated region
        $region25: #{transformer_forward.1} parent=11 // pred_check
          %p559 = pneg %p118
        $region26: #{transformer_forward.1} parent=11 // pred_check_branch
          %561 = sbr.rel (%p559) target = $region28
        $region27: #{transformer_forward.1} parent=11 // pred_region
          _
        $region28: #{transformer_forward.1} parent=11 // pred_fallthru
          _
        // Predicated region
        $region29: #{transformer_forward.1} parent=11 // pred_check
          %p562 = pneg %p139
        $region30: #{transformer_forward.1} parent=11 // pred_check_branch
          %564 = sbr.rel (%p562) target = $region32
        $region31: #{transformer_forward.1} parent=11 // pred_region
          _
        $region32: #{transformer_forward.1} parent=11 // pred_fallthru
          _
        // Predicated region
        $region33: #{transformer_forward.1} parent=11 // pred_check
          %p565 = pneg %p160
        $region34: #{transformer_forward.1} parent=11 // pred_check_branch
          %567 = sbr.rel (%p565) target = $region36
        $region35: #{transformer_forward.1} parent=11 // pred_region
          _
        $region36: #{transformer_forward.1} parent=11 // pred_fallthru
          _
        // Predicated region
        $region37: #{transformer_forward.1} parent=11 // pred_check
          %p568 = pneg %p181
        $region38: #{transformer_forward.1} parent=11 // pred_check_branch
          %570 = sbr.rel (%p568) target = $region40
        $region39: #{transformer_forward.1} parent=11 // pred_region
          _
        $region40: #{transformer_forward.1} parent=11 // pred_fallthru
          _
        // Predicated region
        $region41: #{transformer_forward.1} parent=11 // pred_check
          %p571 = pneg %p202
        $region42: #{transformer_forward.1} parent=11 // pred_check_branch
          %573 = sbr.rel (%p571) target = $region44
        $region43: #{transformer_forward.1} parent=11 // pred_region
          _
        $region44: #{transformer_forward.1} parent=11 // pred_fallthru
          _
      $region12: #{transformer_forward.1} parent=5 // pred_fallthru
        _
      %p574 = scmp.lt.s32.totalorder %s34, 2
      // Predicated region
      $region45: #{transformer_forward.1} parent=5 // pred_check
        %p575 = pneg %p574
      $region46: #{transformer_forward.1} parent=5 // pred_check_branch
        %577 = sbr.rel (%p575) target = $region48
      $region47: #{transformer_forward.1} parent=5 // pred_region
        // Predicated region
        $region49: #{transformer_forward.1} parent=47 // pred_check
          %p578 = pneg %p222
        $region50: #{transformer_forward.1} parent=47 // pred_check_branch
          %580 = sbr.rel (%p578) target = $region52
        $region51: #{transformer_forward.1} parent=47 // pred_region
          %p581 = scmp.lt.s32.totalorder %s34, 1
          %s582 = scalar_select %p581, %s34, 1
          %s583 = smul.addr %s582, 48
          %s584 = smul.addr %s583, 8
          %s585 = scalar_lea.vmem %s8, %s584
        $region52: #{transformer_forward.1} parent=47 // pred_fallthru
          _
        // Predicated region
        $region53: #{transformer_forward.1} parent=47 // pred_check
          %p586 = pneg %p248
        $region54: #{transformer_forward.1} parent=47 // pred_check_branch
          %588 = sbr.rel (%p586) target = $region56
        $region55: #{transformer_forward.1} parent=47 // pred_region
          %p589 = scmp.lt.s32.totalorder %s34, 1
          %s590 = scalar_select %p589, %s34, 1
          %s591 = smul.addr %s590, 3
          %s592 = scalar_lea.vmem %s9, %s591
        $region56: #{transformer_forward.1} parent=47 // pred_fallthru
          _
        // Predicated region
        $region57: #{transformer_forward.1} parent=47 // pred_check
          %p593 = pneg %p274
        $region58: #{transformer_forward.1} parent=47 // pred_check_branch
          %595 = sbr.rel (%p593) target = $region60
        $region59: #{transformer_forward.1} parent=47 // pred_region
          %s596 = sand.u32 %s264, 1
          %s597 = scalar_lea.sflag [#allocation6], %s596
          %s598 = sand.u32 %s264, 1
          %s599 = smul.addr %s598, 128
          %s600 = scalar_lea.vmem [#allocation5], %s599
          %s602 = ssub.s32 2048, 2048
          %603 = vsyncadd %s597, %s602
          %s604 = smul.addr %s34, 16
          %s605 = smul.addr %s604, 128
          %s606 = scalar_lea.hbm %s10, %s605
          %s607 = sshll.u32 %s600, 4
          %s608 = int_to_ptr.vmem [resolvable:$true] %s607
          %613 = dma.hbm_to_vmem [thread:$0]  %s606, 2048, %s608, %s597, 128, 128, 8
        $region60: #{transformer_forward.1} parent=47 // pred_fallthru
          _
        // Predicated region
        $region61: #{transformer_forward.1} parent=47 // pred_check
          %p614 = pneg %p300
        $region62: #{transformer_forward.1} parent=47 // pred_check_branch
          %616 = sbr.rel (%p614) target = $region64
        $region63: #{transformer_forward.1} parent=47 // pred_region
          %p617 = scmp.lt.s32.totalorder %s34, 1
          %s618 = scalar_select %p617, %s34, 1
          %s619 = scalar_lea.vmem %s11, %s618
        $region64: #{transformer_forward.1} parent=47 // pred_fallthru
          _
        // Predicated region
        $region65: #{transformer_forward.1} parent=47 // pred_check
          %p620 = pneg %p326
        $region66: #{transformer_forward.1} parent=47 // pred_check_branch
          %622 = sbr.rel (%p620) target = $region68
        $region67: #{transformer_forward.1} parent=47 // pred_region
          %p623 = scmp.lt.s32.totalorder %s34, 1
          %s624 = scalar_select %p623, %s34, 1
          %s625 = scalar_lea.vmem %s12, %s624
        $region68: #{transformer_forward.1} parent=47 // pred_fallthru
          _
        // Predicated region
        $region69: #{transformer_forward.1} parent=47 // pred_check
          %p626 = pneg %p352
        $region70: #{transformer_forward.1} parent=47 // pred_check_branch
          %628 = sbr.rel (%p626) target = $region72
        $region71: #{transformer_forward.1} parent=47 // pred_region
          %p629 = scmp.lt.s32.totalorder %s34, 1
          %s630 = scalar_select %p629, %s34, 1
          %s631 = scalar_lea.vmem %s13, %s630
        $region72: #{transformer_forward.1} parent=47 // pred_fallthru
          _
        // Predicated region
        $region73: #{transformer_forward.1} parent=47 // pred_check
          %p632 = pneg %p378
        $region74: #{transformer_forward.1} parent=47 // pred_check_branch
          %634 = sbr.rel (%p632) target = $region76
        $region75: #{transformer_forward.1} parent=47 // pred_region
          %p635 = scmp.lt.s32.totalorder %s34, 1
          %s636 = scalar_select %p635, %s34, 1
          %s637 = smul.addr %s636, 32
          %s638 = smul.addr %s637, 8
          %s639 = scalar_lea.vmem %s14, %s638
        $region76: #{transformer_forward.1} parent=47 // pred_fallthru
          _
        // Predicated region
        $region77: #{transformer_forward.1} parent=47 // pred_check
          %p640 = pneg %p404
        $region78: #{transformer_forward.1} parent=47 // pred_check_branch
          %642 = sbr.rel (%p640) target = $region80
        $region79: #{transformer_forward.1} parent=47 // pred_region
          %p643 = scmp.lt.s32.totalorder %s34, 1
          %s644 = scalar_select %p643, %s34, 1
          %s645 = smul.addr %s644, 2
          %s646 = scalar_lea.vmem %s15, %s645
        $region80: #{transformer_forward.1} parent=47 // pred_fallthru
          _
        // Predicated region
        $region81: #{transformer_forward.1} parent=47 // pred_check
          %p647 = pneg %p430
        $region82: #{transformer_forward.1} parent=47 // pred_check_branch
          %649 = sbr.rel (%p647) target = $region84
        $region83: #{transformer_forward.1} parent=47 // pred_region
          %s650 = sand.u32 %s420, 1
          %s651 = scalar_lea.sflag [#allocation8], %s650
          %s652 = sand.u32 %s420, 1
          %s653 = smul.addr %s652, 256
          %s654 = scalar_lea.vmem [#allocation7], %s653
          %s656 = ssub.s32 4096, 4096
          %657 = vsyncadd %s651, %s656
          %s658 = smul.addr %s34, 32
          %s659 = smul.addr %s658, 128
          %s660 = scalar_lea.hbm %s16, %s659
          %s661 = sshll.u32 %s654, 4
          %s662 = int_to_ptr.vmem [resolvable:$true] %s661
          %667 = dma.hbm_to_vmem [thread:$0]  %s660, 4096, %s662, %s651, 128, 128, 8
        $region84: #{transformer_forward.1} parent=47 // pred_fallthru
          _
        // Predicated region
        $region85: #{transformer_forward.1} parent=47 // pred_check
          %p668 = pneg %p456
        $region86: #{transformer_forward.1} parent=47 // pred_check_branch
          %670 = sbr.rel (%p668) target = $region88
        $region87: #{transformer_forward.1} parent=47 // pred_region
          %p671 = scmp.lt.s32.totalorder %s34, 1
          %s672 = scalar_select %p671, %s34, 1
          %s673 = scalar_lea.vmem %s17, %s672
        $region88: #{transformer_forward.1} parent=47 // pred_fallthru
          _
        // Predicated region
        $region89: #{transformer_forward.1} parent=47 // pred_check
          %p674 = pneg %p482
        $region90: #{transformer_forward.1} parent=47 // pred_check_branch
          %676 = sbr.rel (%p674) target = $region92
        $region91: #{transformer_forward.1} parent=47 // pred_region
          %p677 = scmp.lt.s32.totalorder %s34, 1
          %s678 = scalar_select %p677, %s34, 1
          %s679 = scalar_lea.vmem %s18, %s678
        $region92: #{transformer_forward.1} parent=47 // pred_fallthru
          _
        // Predicated region
        $region93: #{transformer_forward.1} parent=47 // pred_check
          %p680 = pneg %p508
        $region94: #{transformer_forward.1} parent=47 // pred_check_branch
          %682 = sbr.rel (%p680) target = $region96
        $region95: #{transformer_forward.1} parent=47 // pred_region
          %p683 = scmp.lt.s32.totalorder %s34, 1
          %s684 = scalar_select %p683, %s34, 1
          %s685 = scalar_lea.vmem %s19, %s684
        $region96: #{transformer_forward.1} parent=47 // pred_fallthru
          _
      $region48: #{transformer_forward.1} parent=5 // pred_fallthru
        _
      %p686 = scmp.le.s32.totalorder 1, %s34
      %p687 = scmp.lt.s32.totalorder %s34, 3
      %p688 = pnand %p686, %p687
      %p689 = pneg %p688
      // Predicated region
      $region97: #{transformer_forward.1} parent=5 // pred_check
        _
      $region98: #{transformer_forward.1} parent=5 // pred_check_branch
        %691 = sbr.rel (%p688) target = $region100
      $region99: #{transformer_forward.1} parent=5 // pred_region
        %s692 = ssub.s32 %s34, 1
        %s693 = sand.u32 %s267, 1
        %s694 = scalar_lea.sflag [#allocation6], %s693
        %s695 = sand.u32 %s267, 1
        %s696 = smul.addr %s695, 128
        %s697 = scalar_lea.vmem [#allocation5], %s696
        // Predicated region
        $region101: #{transformer_forward.1} parent=99 // pred_check
          %p698 = pneg %p280
        $region102: #{transformer_forward.1} parent=99 // pred_check_branch
          %700 = sbr.rel (%p698) target = $region104
        $region103: #{transformer_forward.1} parent=99 // pred_region
          %701 = dma.done %s694, 2048
        $region104: #{transformer_forward.1} parent=99 // pred_fallthru
          _
        %s702 = sand.u32 %s423, 1
        %s703 = scalar_lea.sflag [#allocation8], %s702
        %s704 = sand.u32 %s423, 1
        %s705 = smul.addr %s704, 256
        %s706 = scalar_lea.vmem [#allocation7], %s705
        // Predicated region
        $region105: #{transformer_forward.1} parent=99 // pred_check
          %p707 = pneg %p436
        $region106: #{transformer_forward.1} parent=99 // pred_check_branch
          %709 = sbr.rel (%p707) target = $region108
        $region107: #{transformer_forward.1} parent=99 // pred_region
          %710 = dma.done %s703, 4096
        $region108: #{transformer_forward.1} parent=99 // pred_fallthru
          _
        %p711 = pneg %p55
        %p712 = pneg %p52
        %p713 = pneg %p76
        %p714 = pneg %p73
        %p715 = pneg %p97
        %p716 = pneg %p94
        %p717 = pneg %p118
        %p718 = pneg %p115
        %p719 = pneg %p139
        %p720 = pneg %p136
        %p721 = pneg %p160
        %p722 = pneg %p157
        %p723 = pneg %p181
        %p724 = pneg %p178
        %p725 = pneg %p202
        %p726 = pneg %p199
        %p727 = scmp.lt.s32.totalorder %s39, 1
        %s728 = scalar_select %p727, %s39, 1
        %s729 = smul.addr %s728, 48
        %s730 = smul.addr %s729, 8
        %s731 = scalar_lea.vmem %s8, %s730
        %p732 = pneg %p228
        %p733 = pneg %p225
        %p734 = scmp.lt.s32.totalorder %s39, 1
        %s735 = scalar_select %p734, %s39, 1
        %s736 = smul.addr %s735, 3
        %s737 = scalar_lea.vmem %s9, %s736
        %p738 = pneg %p254
        %p739 = pneg %p251
        %s740 = sand.u32 %s267, 1
        %s741 = scalar_lea.sflag [#allocation6], %s740
        %s742 = sand.u32 %s267, 1
        %s743 = smul.addr %s742, 128
        %s744 = scalar_lea.vmem [#allocation5], %s743
        %p745 = pneg %p280
        %p746 = pneg %p277
        %p747 = scmp.lt.s32.totalorder %s39, 1
        %s748 = scalar_select %p747, %s39, 1
        %s749 = scalar_lea.vmem %s11, %s748
        %p750 = pneg %p306
        %p751 = pneg %p303
        %p752 = scmp.lt.s32.totalorder %s39, 1
        %s753 = scalar_select %p752, %s39, 1
        %s754 = scalar_lea.vmem %s12, %s753
        %p755 = pneg %p332
        %p756 = pneg %p329
        %p757 = scmp.lt.s32.totalorder %s39, 1
        %s758 = scalar_select %p757, %s39, 1
        %s759 = scalar_lea.vmem %s13, %s758
        %p760 = pneg %p358
        %p761 = pneg %p355
        %p762 = scmp.lt.s32.totalorder %s39, 1
        %s763 = scalar_select %p762, %s39, 1
        %s764 = smul.addr %s763, 32
        %s765 = smul.addr %s764, 8
        %s766 = scalar_lea.vmem %s14, %s765
        %p767 = pneg %p384
        %p768 = pneg %p381
        %p769 = scmp.lt.s32.totalorder %s39, 1
        %s770 = scalar_select %p769, %s39, 1
        %s771 = smul.addr %s770, 2
        %s772 = scalar_lea.vmem %s15, %s771
        %p773 = pneg %p410
        %p774 = pneg %p407
        %s775 = sand.u32 %s423, 1
        %s776 = scalar_lea.sflag [#allocation8], %s775
        %s777 = sand.u32 %s423, 1
        %s778 = smul.addr %s777, 256
        %s779 = scalar_lea.vmem [#allocation7], %s778
        %p780 = pneg %p436
        %p781 = pneg %p433
        %p782 = scmp.lt.s32.totalorder %s39, 1
        %s783 = scalar_select %p782, %s39, 1
        %s784 = scalar_lea.vmem %s17, %s783
        %p785 = pneg %p462
        %p786 = pneg %p459
        %p787 = scmp.lt.s32.totalorder %s39, 1
        %s788 = scalar_select %p787, %s39, 1
        %s789 = scalar_lea.vmem %s18, %s788
        %p790 = pneg %p488
        %p791 = pneg %p485
        %p792 = scmp.lt.s32.totalorder %s39, 1
        %s793 = scalar_select %p792, %s39, 1
        %s794 = scalar_lea.vmem %s19, %s793
        %p795 = pneg %p514
        %p796 = pneg %p511
        %p797 = pneg %p535
        %p798 = pneg %p532
        %p799 = scmp.lt.s32.totalorder %s39, 1
        %s800 = scalar_select %p799, %s39, 1
        %s801 = smul.addr %s800, 48
        %s802 = smul.addr %s801, 8
        %s803 = scalar_lea.vmem %s8, %s802
        %p804 = scmp.lt.s32.totalorder %s39, 1
        %s805 = scalar_select %p804, %s39, 1
        %s806 = smul.addr %s805, 3
        %s807 = scalar_lea.vmem %s9, %s806
        %p808 = scmp.lt.s32.totalorder %s39, 1
        %s809 = scalar_select %p808, %s39, 1
        %s810 = scalar_lea.vmem %s11, %s809
        %p811 = scmp.lt.s32.totalorder %s39, 1
        %s812 = scalar_select %p811, %s39, 1
        %s813 = scalar_lea.vmem %s12, %s812
        %p814 = scmp.lt.s32.totalorder %s39, 1
        %s815 = scalar_select %p814, %s39, 1
        %s816 = scalar_lea.vmem %s13, %s815
        %p817 = scmp.lt.s32.totalorder %s39, 1
        %s818 = scalar_select %p817, %s39, 1
        %s819 = smul.addr %s818, 32
        %s820 = smul.addr %s819, 8
        %s821 = scalar_lea.vmem %s14, %s820
        %p822 = scmp.lt.s32.totalorder %s39, 1
        %s823 = scalar_select %p822, %s39, 1
        %s824 = smul.addr %s823, 2
        %s825 = scalar_lea.vmem %s15, %s824
        %p826 = scmp.lt.s32.totalorder %s39, 1
        %s827 = scalar_select %p826, %s39, 1
        %s828 = scalar_lea.vmem %s17, %s827
        %p829 = scmp.lt.s32.totalorder %s39, 1
        %s830 = scalar_select %p829, %s39, 1
        %s831 = scalar_lea.vmem %s18, %s830
        %p832 = scmp.lt.s32.totalorder %s39, 1
        %s833 = scalar_select %p832, %s39, 1
        %s834 = scalar_lea.vmem %s19, %s833
        %p835 = scmp.eq.s32.totalorder %s39, 0
        // Predicated region
        $region109: #{transformer_forward.1} parent=99 // pred_check
          %p836 = pneg %p835
        $region110: #{transformer_forward.1} parent=99 // pred_check_branch
          %838 = sbr.rel (%p836) target = $region112
        $region111: #{transformer_forward.1} parent=99 // pred_region
          %v839 = vld [vmem:[%s0] sm:$0xff]
          %v840 = vld [vmem:[%s0 + $0x8] sm:$0xff]
          %v841 = vld [vmem:[%s0 + $0x10] sm:$0xff]
          %v842 = vld [vmem:[%s0 + $0x18] sm:$0xff]
          %v843 = vld [vmem:[%s0 + $0x20] sm:$0xff]
          %v844 = vld [vmem:[%s0 + $0x28] sm:$0xff]
          %v845 = vld [vmem:[%s0 + $0x30] sm:$0xff]
          %v846 = vld [vmem:[%s0 + $0x38] sm:$0xff]
          %v847 = vld [vmem:[%s0 + $0x40] sm:$0xff]
          %v848 = vld [vmem:[%s0 + $0x48] sm:$0xff]
          %v849 = vld [vmem:[%s0 + $0x50] sm:$0xff]
          %v850 = vld [vmem:[%s0 + $0x58] sm:$0xff]
          %v851 = vld [vmem:[%s0 + $0x60] sm:$0xff]
          %v852 = vld [vmem:[%s0 + $0x68] sm:$0xff]
          %v853 = vld [vmem:[%s0 + $0x70] sm:$0xff]
          %v854 = vld [vmem:[%s0 + $0x78] sm:$0xff]
          %v855 = vld [vmem:[%s0 + $0x80] sm:$0xff]
          %v856 = vld [vmem:[%s0 + $0x88] sm:$0xff]
          %v857 = vld [vmem:[%s0 + $0x90] sm:$0xff]
          %v858 = vld [vmem:[%s0 + $0x98] sm:$0xff]
          %v859 = vld [vmem:[%s1] sm:$0xff]
          %v860 = vld [vmem:[%s1 + $0x8] sm:$0xff]
          %v861 = vld [vmem:[%s1 + $0x10] sm:$0xff]
          %v862 = vld [vmem:[%s1 + $0x18] sm:$0xff]
          %v863 = vld [vmem:[%s1 + $0x20] sm:$0xff]
          %v864 = vld [vmem:[%s1 + $0x28] sm:$0xff]
          %v865 = vld [vmem:[%s1 + $0x30] sm:$0xff]
          %v866 = vld [vmem:[%s1 + $0x38] sm:$0xff]
          %v867 = vld [vmem:[%s1 + $0x40] sm:$0xff]
          %v868 = vld [vmem:[%s1 + $0x48] sm:$0xff]
          %v869 = vld [vmem:[%s1 + $0x50] sm:$0xff]
          %v870 = vld [vmem:[%s1 + $0x58] sm:$0xff]
          %v871 = vld [vmem:[%s1 + $0x60] sm:$0xff]
          %v872 = vld [vmem:[%s1 + $0x68] sm:$0xff]
          %v873 = vld [vmem:[%s1 + $0x70] sm:$0xff]
          %v874 = vld [vmem:[%s1 + $0x78] sm:$0xff]
          %v875 = vld [vmem:[%s1 + $0x80] sm:$0xff]
          %v876 = vld [vmem:[%s1 + $0x88] sm:$0xff]
          %v877 = vld [vmem:[%s1 + $0x90] sm:$0xff]
          %v878 = vld [vmem:[%s1 + $0x98] sm:$0xff]
          %v879 = vld [vmem:[%s1 + $0xa0] sm:$0xff]
          %v880 = vld [vmem:[%s1 + $0xa8] sm:$0xff]
          %v881 = vld [vmem:[%s1 + $0xb0] sm:$0xff]
          %v882 = vld [vmem:[%s1 + $0xb8] sm:$0xff]
          %v883 = vld [vmem:[%s1 + $0xc0] sm:$0xff]
          %v884 = vld [vmem:[%s1 + $0xc8] sm:$0xff]
          %v885 = vld [vmem:[%s1 + $0xd0] sm:$0xff]
          %v886 = vld [vmem:[%s1 + $0xd8] sm:$0xff]
          %v887 = vld [vmem:[%s1 + $0xe0] sm:$0xff]
          %v888 = vld [vmem:[%s1 + $0xe8] sm:$0xff]
          %v889 = vld [vmem:[%s1 + $0xf0] sm:$0xff]
          %v890 = vld [vmem:[%s1 + $0xf8] sm:$0xff]
          %v891 = vld [vmem:[%s1 + $0x100] sm:$0xff]
          %v892 = vld [vmem:[%s1 + $0x108] sm:$0xff]
          %v893 = vld [vmem:[%s1 + $0x110] sm:$0xff]
          %v894 = vld [vmem:[%s1 + $0x118] sm:$0xff]
          %v895 = vld [vmem:[%s1 + $0x120] sm:$0xff]
          %v896 = vld [vmem:[%s1 + $0x128] sm:$0xff]
          %v897 = vld [vmem:[%s1 + $0x130] sm:$0xff]
          %v898 = vld [vmem:[%s1 + $0x138] sm:$0xff]
          %v899 = vld [vmem:[%s1 + $0x140] sm:$0xff]
          %v900 = vld [vmem:[%s1 + $0x148] sm:$0xff]
          %v901 = vld [vmem:[%s1 + $0x150] sm:$0xff]
          %v902 = vld [vmem:[%s1 + $0x158] sm:$0xff]
          %v903 = vld [vmem:[%s1 + $0x160] sm:$0xff]
          %v904 = vld [vmem:[%s1 + $0x168] sm:$0xff]
          %v905 = vld [vmem:[%s1 + $0x170] sm:$0xff]
          %v906 = vld [vmem:[%s1 + $0x178] sm:$0xff]
          %v907 = vld [vmem:[%s1 + $0x180] sm:$0xff]
          %v908 = vld [vmem:[%s1 + $0x188] sm:$0xff]
          %v909 = vld [vmem:[%s1 + $0x190] sm:$0xff]
          %v910 = vld [vmem:[%s1 + $0x198] sm:$0xff]
          %v911 = vld [vmem:[%s1 + $0x1a0] sm:$0xff]
          %v912 = vld [vmem:[%s1 + $0x1a8] sm:$0xff]
          %v913 = vld [vmem:[%s1 + $0x1b0] sm:$0xff]
          %v914 = vld [vmem:[%s1 + $0x1b8] sm:$0xff]
          %v915 = vld [vmem:[%s1 + $0x1c0] sm:$0xff]
          %v916 = vld [vmem:[%s1 + $0x1c8] sm:$0xff]
          %v917 = vld [vmem:[%s1 + $0x1d0] sm:$0xff]
          %v918 = vld [vmem:[%s1 + $0x1d8] sm:$0xff]
          %v919 = vld [vmem:[%s1 + $0x1e0] sm:$0xff]
          %v920 = vld [vmem:[%s1 + $0x1e8] sm:$0xff]
          %v921 = vld [vmem:[%s1 + $0x1f0] sm:$0xff]
          %v922 = vld [vmem:[%s1 + $0x1f8] sm:$0xff]
          %v923 = vld [vmem:[%s1 + $0x200] sm:$0xff]
          %v924 = vld [vmem:[%s1 + $0x208] sm:$0xff]
          %v925 = vld [vmem:[%s1 + $0x210] sm:$0xff]
          %v926 = vld [vmem:[%s1 + $0x218] sm:$0xff]
          %v927 = vld [vmem:[%s1 + $0x220] sm:$0xff]
          %v928 = vld [vmem:[%s1 + $0x228] sm:$0xff]
          %v929 = vld [vmem:[%s1 + $0x230] sm:$0xff]
          %v930 = vld [vmem:[%s1 + $0x238] sm:$0xff]
          %v931 = vld [vmem:[%s1 + $0x240] sm:$0xff]
          %v932 = vld [vmem:[%s1 + $0x248] sm:$0xff]
          %v933 = vld [vmem:[%s1 + $0x250] sm:$0xff]
          %v934 = vld [vmem:[%s1 + $0x258] sm:$0xff]
          %v935 = vld [vmem:[%s1 + $0x260] sm:$0xff]
          %v936 = vld [vmem:[%s1 + $0x268] sm:$0xff]
          %v937 = vld [vmem:[%s1 + $0x270] sm:$0xff]
          %v938 = vld [vmem:[%s1 + $0x278] sm:$0xff]
          %v939 = vld [vmem:[%s2] sm:$0xff]
          %v940 = vld [vmem:[%s2 + $0x8] sm:$0xff]
          %v941 = vld [vmem:[%s2 + $0x10] sm:$0xff]
          %v942 = vld [vmem:[%s2 + $0x18] sm:$0xff]
          %943 = vmatprep.subr.mxu0 0.0
          %944 = vmatpush1.msra.mxu0 %v874
          %945 = vmatprep.subr.mxu0 0.0
          %946 = vmatpush1.msra.mxu0 %v873
          %947 = vmatprep.subr.mxu0 0.0
          %948 = vmatpush1.msra.mxu0 %v872
          %949 = vmatprep.subr.mxu0 0.0
          %950 = vmatpush1.msra.mxu0 %v871
          %951 = vmatprep.subr.mxu0 0.0
          %952 = vmatpush1.msra.mxu0 %v870
          %953 = vmatprep.subr.mxu0 0.0
          %954 = vmatpush1.msra.mxu0 %v869
          %955 = vmatprep.subr.mxu0 0.0
          %956 = vmatpush1.msra.mxu0 %v868
          %957 = vmatprep.subr.mxu0 0.0
          %958 = vmatpush1.msra.mxu0 %v867
          %959 = vmatprep.subr.mxu0 0.0
          %960 = vmatpush1.msra.mxu0 %v866
          %961 = vmatprep.subr.mxu0 0.0
          %962 = vmatpush1.msra.mxu0 %v865
          %963 = vmatprep.subr.mxu0 0.0
          %964 = vmatpush1.msra.mxu0 %v864
          %965 = vmatprep.subr.mxu0 0.0
          %966 = vmatpush1.msra.mxu0 %v863
          %967 = vmatprep.subr.mxu0 0.0
          %968 = vmatpush1.msra.mxu0 %v862
          %969 = vmatprep.subr.mxu0 0.0
          %970 = vmatpush1.msra.mxu0 %v861
          %971 = vmatprep.subr.mxu0 0.0
          %972 = vmatpush1.msra.mxu0 %v860
          %973 = vmatprep.subr.mxu0 0.0
          %974 = vmatpush1.msra.mxu0 %v859
          %975 = vmatprep.subr.mxu0 0.0
          %976 = vmatpush2.msra.mxu0 %v890
          %977 = vmatprep.subr.mxu0 0.0
          %978 = vmatpush2.msra.mxu0 %v889
          %979 = vmatprep.subr.mxu0 0.0
          %980 = vmatpush2.msra.mxu0 %v888
          %981 = vmatprep.subr.mxu0 0.0
          %982 = vmatpush2.msra.mxu0 %v887
          %983 = vmatprep.subr.mxu0 0.0
          %984 = vmatpush2.msra.mxu0 %v886
          %985 = vmatprep.subr.mxu0 0.0
          %986 = vmatpush2.msra.mxu0 %v885
          %987 = vmatprep.subr.mxu0 0.0
          %988 = vmatpush2.msra.mxu0 %v884
          %989 = vmatprep.subr.mxu0 0.0
          %990 = vmatpush2.msra.mxu0 %v883
          %991 = vmatprep.subr.mxu0 0.0
          %992 = vmatpush2.msra.mxu0 %v882
          %993 = vmatprep.subr.mxu0 0.0
          %994 = vmatpush2.msra.mxu0 %v881
          %995 = vmatprep.subr.mxu0 0.0
          %996 = vmatpush2.msra.mxu0 %v880
          %997 = vmatprep.subr.mxu0 0.0
          %998 = vmatpush2.msra.mxu0 %v879
          %999 = vmatprep.subr.mxu0 0.0
          %1000 = vmatpush2.msra.mxu0 %v878
          %1001 = vmatprep.subr.mxu0 0.0
          %1002 = vmatpush2.msra.mxu0 %v877
          %1003 = vmatprep.subr.mxu0 0.0
          %1004 = vmatpush2.msra.mxu0 %v876
          %1005 = vmatprep.subr.mxu0 0.0
          %1006 = vmatpush2.msra.mxu0 %v875
          %1007 = vmatprep.mubr.f32.mxu0 %v840
          %1008 = vmatmul.mubr.f32.gmra.mxu0 %v839
          %v1009 = vpop.f32.mrf.mxu0
          %v1010 = vadd.f32 %v939, %v1009
          %v1011 = vpop.f32.mrf.mxu0
          %1012 = vmatprep.mubr.f32.mxu0 %v845
          %1013 = vmatmul.mubr.f32.gmra.mxu0 %v844
          %v1014 = vpop.f32.mrf.mxu0
          %v1015 = vadd.f32 %v940, %v1014
          %v1016 = vpop.f32.mrf.mxu0
          %1017 = vmatprep.mubr.f32.mxu0 %v850
          %1018 = vmatmul.mubr.f32.gmra.mxu0 %v849
          %v1019 = vpop.f32.mrf.mxu0
          %v1020 = vadd.f32 %v941, %v1019
          %v1021 = vpop.f32.mrf.mxu0
          %1022 = vmatprep.mubr.f32.mxu0 %v855
          %1023 = vmatmul.mubr.f32.gmra.mxu0 %v854
          %v1024 = vpop.f32.mrf.mxu0
          %v1025 = vadd.f32 %v942, %v1024
          %v1026 = vpop.f32.mrf.mxu0
          %1027 = vdwg.mxu0
          %1028 = vmatprep.subr.mxu0 0.0
          %1029 = vmatpush1.msra.mxu0 %v906
          %1030 = vmatprep.subr.mxu0 0.0
          %1031 = vmatpush1.msra.mxu0 %v905
          %1032 = vmatprep.subr.mxu0 0.0
          %1033 = vmatpush1.msra.mxu0 %v904
          %1034 = vmatprep.subr.mxu0 0.0
          %1035 = vmatpush1.msra.mxu0 %v903
          %1036 = vmatprep.subr.mxu0 0.0
          %1037 = vmatpush1.msra.mxu0 %v902
          %1038 = vmatprep.subr.mxu0 0.0
          %1039 = vmatpush1.msra.mxu0 %v901
          %1040 = vmatprep.subr.mxu0 0.0
          %1041 = vmatpush1.msra.mxu0 %v900
          %1042 = vmatprep.subr.mxu0 0.0
          %1043 = vmatpush1.msra.mxu0 %v899
          %1044 = vmatprep.subr.mxu0 0.0
          %1045 = vmatpush1.msra.mxu0 %v898
          %1046 = vmatprep.subr.mxu0 0.0
          %1047 = vmatpush1.msra.mxu0 %v897
          %1048 = vmatprep.subr.mxu0 0.0
          %1049 = vmatpush1.msra.mxu0 %v896
          %1050 = vmatprep.subr.mxu0 0.0
          %1051 = vmatpush1.msra.mxu0 %v895
          %1052 = vmatprep.subr.mxu0 0.0
          %1053 = vmatpush1.msra.mxu0 %v894
          %1054 = vmatprep.subr.mxu0 0.0
          %1055 = vmatpush1.msra.mxu0 %v893
          %1056 = vmatprep.subr.mxu0 0.0
          %1057 = vmatpush1.msra.mxu0 %v892
          %1058 = vmatprep.subr.mxu0 0.0
          %1059 = vmatpush1.msra.mxu0 %v891
          %1060 = vmatprep.subr.mxu0 0.0
          %1061 = vmatpush2.msra.mxu0 %v922
          %1062 = vmatprep.subr.mxu0 0.0
          %1063 = vmatpush2.msra.mxu0 %v921
          %1064 = vmatprep.subr.mxu0 0.0
          %1065 = vmatpush2.msra.mxu0 %v920
          %1066 = vmatprep.subr.mxu0 0.0
          %1067 = vmatpush2.msra.mxu0 %v919
          %1068 = vmatprep.subr.mxu0 0.0
          %1069 = vmatpush2.msra.mxu0 %v918
          %1070 = vmatprep.subr.mxu0 0.0
          %1071 = vmatpush2.msra.mxu0 %v917
          %1072 = vmatprep.subr.mxu0 0.0
          %1073 = vmatpush2.msra.mxu0 %v916
          %1074 = vmatprep.subr.mxu0 0.0
          %1075 = vmatpush2.msra.mxu0 %v915
          %1076 = vmatprep.subr.mxu0 0.0
          %1077 = vmatpush2.msra.mxu0 %v914
          %1078 = vmatprep.subr.mxu0 0.0
          %1079 = vmatpush2.msra.mxu0 %v913
          %1080 = vmatprep.subr.mxu0 0.0
          %1081 = vmatpush2.msra.mxu0 %v912
          %1082 = vmatprep.subr.mxu0 0.0
          %1083 = vmatpush2.msra.mxu0 %v911
          %1084 = vmatprep.subr.mxu0 0.0
          %1085 = vmatpush2.msra.mxu0 %v910
          %1086 = vmatprep.subr.mxu0 0.0
          %1087 = vmatpush2.msra.mxu0 %v909
          %1088 = vmatprep.subr.mxu0 0.0
          %1089 = vmatpush2.msra.mxu0 %v908
          %1090 = vmatprep.subr.mxu0 0.0
          %1091 = vmatpush2.msra.mxu0 %v907
          %1092 = vmatprep.mubr.f32.mxu0 %v842
          %1093 = vmatmul.mubr.f32.gmra.mxu0 %v841
          %v1094 = vpop.f32.mrf.mxu0
          %v1095 = vadd.f32 %v1010, %v1094
          %v1096 = vpop.f32.mrf.mxu0
          %1097 = vmatprep.mubr.f32.mxu0 %v847
          %1098 = vmatmul.mubr.f32.gmra.mxu0 %v846
          %v1099 = vpop.f32.mrf.mxu0
          %v1100 = vadd.f32 %v1015, %v1099
          %v1101 = vpop.f32.mrf.mxu0
          %1102 = vmatprep.mubr.f32.mxu0 %v852
          %1103 = vmatmul.mubr.f32.gmra.mxu0 %v851
          %v1104 = vpop.f32.mrf.mxu0
          %v1105 = vadd.f32 %v1020, %v1104
          %v1106 = vpop.f32.mrf.mxu0
          %1107 = vmatprep.mubr.f32.mxu0 %v857
          %1108 = vmatmul.mubr.f32.gmra.mxu0 %v856
          %v1109 = vpop.f32.mrf.mxu0
          %v1110 = vadd.f32 %v1025, %v1109
          %v1111 = vpop.f32.mrf.mxu0
          %1112 = vdwg.mxu0
          %1113 = vmatprep.subr.mxu0 0.0
          %1114 = vmatpush1.msra.mxu0 %v938
          %1115 = vmatprep.subr.mxu0 0.0
          %1116 = vmatpush1.msra.mxu0 %v937
          %1117 = vmatprep.subr.mxu0 0.0
          %1118 = vmatpush1.msra.mxu0 %v936
          %1119 = vmatprep.subr.mxu0 0.0
          %1120 = vmatpush1.msra.mxu0 %v935
          %1121 = vmatprep.subr.mxu0 0.0
          %1122 = vmatpush1.msra.mxu0 %v934
          %1123 = vmatprep.subr.mxu0 0.0
          %1124 = vmatpush1.msra.mxu0 %v933
          %1125 = vmatprep.subr.mxu0 0.0
          %1126 = vmatpush1.msra.mxu0 %v932
          %1127 = vmatprep.subr.mxu0 0.0
          %1128 = vmatpush1.msra.mxu0 %v931
          %1129 = vmatprep.subr.mxu0 0.0
          %1130 = vmatpush1.msra.mxu0 %v930
          %1131 = vmatprep.subr.mxu0 0.0
          %1132 = vmatpush1.msra.mxu0 %v929
          %1133 = vmatprep.subr.mxu0 0.0
          %1134 = vmatpush1.msra.mxu0 %v928
          %1135 = vmatprep.subr.mxu0 0.0
          %1136 = vmatpush1.msra.mxu0 %v927
          %1137 = vmatprep.subr.mxu0 0.0
          %1138 = vmatpush1.msra.mxu0 %v926
          %1139 = vmatprep.subr.mxu0 0.0
          %1140 = vmatpush1.msra.mxu0 %v925
          %1141 = vmatprep.subr.mxu0 0.0
          %1142 = vmatpush1.msra.mxu0 %v924
          %1143 = vmatprep.subr.mxu0 0.0
          %1144 = vmatpush1.msra.mxu0 %v923
          %1145 = vmatprep.subr.mxu0 0.0
          %1146 = vmatpush2.msra.mxu0 0.0
          %1147 = vmatprep.subr.mxu0 0.0
          %1148 = vmatpush2.msra.mxu0 0.0
          %1149 = vmatprep.subr.mxu0 0.0
          %1150 = vmatpush2.msra.mxu0 0.0
          %1151 = vmatprep.subr.mxu0 0.0
          %1152 = vmatpush2.msra.mxu0 0.0
          %1153 = vmatprep.subr.mxu0 0.0
          %1154 = vmatpush2.msra.mxu0 0.0
          %1155 = vmatprep.subr.mxu0 0.0
          %1156 = vmatpush2.msra.mxu0 0.0
          %1157 = vmatprep.subr.mxu0 0.0
          %1158 = vmatpush2.msra.mxu0 0.0
          %1159 = vmatprep.subr.mxu0 0.0
          %1160 = vmatpush2.msra.mxu0 0.0
          %1161 = vmatprep.subr.mxu0 0.0
          %1162 = vmatpush2.msra.mxu0 0.0
          %1163 = vmatprep.subr.mxu0 0.0
          %1164 = vmatpush2.msra.mxu0 0.0
          %1165 = vmatprep.subr.mxu0 0.0
          %1166 = vmatpush2.msra.mxu0 0.0
          %1167 = vmatprep.subr.mxu0 0.0
          %1168 = vmatpush2.msra.mxu0 0.0
          %1169 = vmatprep.subr.mxu0 0.0
          %1170 = vmatpush2.msra.mxu0 0.0
          %1171 = vmatprep.subr.mxu0 0.0
          %1172 = vmatpush2.msra.mxu0 0.0
          %1173 = vmatprep.subr.mxu0 0.0
          %1174 = vmatpush2.msra.mxu0 0.0
          %1175 = vmatprep.subr.mxu0 0.0
          %1176 = vmatpush2.msra.mxu0 0.0
          %1177 = vmatprep.mubr.f32.mxu0 0.0
          %1178 = vmatmul.mubr.f32.gmra.mxu0 %v843
          %v1179 = vpop.f32.mrf.mxu0
          %v1180 = vadd.f32 %v1095, %v1179
          %v1181 = vpop.f32.mrf.mxu0
          %1182 = vmatprep.mubr.f32.mxu0 0.0
          %1183 = vmatmul.mubr.f32.gmra.mxu0 %v848
          %v1184 = vpop.f32.mrf.mxu0
          %v1185 = vadd.f32 %v1100, %v1184
          %v1186 = vpop.f32.mrf.mxu0
          %1187 = vmatprep.mubr.f32.mxu0 0.0
          %1188 = vmatmul.mubr.f32.gmra.mxu0 %v853
          %v1189 = vpop.f32.mrf.mxu0
          %v1190 = vadd.f32 %v1105, %v1189
          %v1191 = vpop.f32.mrf.mxu0
          %1192 = vmatprep.mubr.f32.mxu0 0.0
          %1193 = vmatmul.mubr.f32.gmra.mxu0 %v858
          %v1194 = vpop.f32.mrf.mxu0
          %v1195 = vadd.f32 %v1110, %v1194
          %v1196 = vpop.f32.mrf.mxu0
          %1197 = vdwg.mxu0
          %v1198 = vadd.f32 %v839, %v840
          %v1199 = vadd.f32 %v1198, %v841
          %v1200 = vadd.f32 %v1199, %v842
          %v1201 = vadd.f32 %v1200, %v843
          %1202 = vadd.xlane.f32.xlu0 %v1201
          %v1203 = vpop.xlane.xlu0 %1202
          %v1204 = vadd.f32 %v844, %v845
          %v1205 = vadd.f32 %v1204, %v846
          %v1206 = vadd.f32 %v1205, %v847
          %v1207 = vadd.f32 %v1206, %v848
          %1208 = vadd.xlane.f32.xlu0 %v1207
          %v1209 = vpop.xlane.xlu0 %1208
          %v1210 = vadd.f32 %v849, %v850
          %v1211 = vadd.f32 %v1210, %v851
          %v1212 = vadd.f32 %v1211, %v852
          %v1213 = vadd.f32 %v1212, %v853
          %1214 = vadd.xlane.f32.xlu0 %v1213
          %v1215 = vpop.xlane.xlu0 %1214
          %v1216 = vadd.f32 %v854, %v855
          %v1217 = vadd.f32 %v1216, %v856
          %v1218 = vadd.f32 %v1217, %v857
          %v1219 = vadd.f32 %v1218, %v858
          %1220 = vadd.xlane.f32.xlu0 %v1219
          %v1221 = vpop.xlane.xlu0 %1220
          %v1222 = vmul.f32 %v1203, 0.0017361111
          %v1223 = vmul.f32 %v1209, 0.0017361111
          %v1224 = vmul.f32 %v1215, 0.0017361111
          %v1225 = vmul.f32 %v1221, 0.0017361111
          %vm1226 = vcmp.gt.f32.partialorder %v1222, 0.0
          %vm1227 = vcmp.gt.f32.partialorder %v1223, 0.0
          %vm1228 = vcmp.gt.f32.partialorder %v1224, 0.0
          %vm1229 = vcmp.gt.f32.partialorder %v1225, 0.0
          %v1230 = vsel %vm1226, 1, 0
          %v1231 = vsel %vm1227, 1, 0
          %v1232 = vsel %vm1228, 1, 0
          %v1233 = vsel %vm1229, 1, 0
          %v1234 = vcvt.s32.f32 %v1230
          %v1235 = vcvt.s32.f32 %v1231
          %v1236 = vcvt.s32.f32 %v1232
          %v1237 = vcvt.s32.f32 %v1233
          %v1238 = vsub.f32 1.0, %v1234
          %v1239 = vsub.f32 1.0, %v1235
          %v1240 = vsub.f32 1.0, %v1236
          %v1241 = vsub.f32 1.0, %v1237
          %v1242 = vmul.f32 %v1238, -10000.0
          %v1243 = vmul.f32 %v1239, -10000.0
          %v1244 = vmul.f32 %v1240, -10000.0
          %v1245 = vmul.f32 %v1241, -10000.0
          %1246 = vst [vmem:[#allocation2] sm:$0xff] %v1180
          %1247 = vst [vmem:[#allocation2 + $0x8] sm:$0xff] %v1185
          %1248 = vst [vmem:[#allocation2 + $0x10] sm:$0xff] %v1190
          %1249 = vst [vmem:[#allocation2 + $0x18] sm:$0xff] %v1195
          %vm1250 = vcmask 64512
          %1251 = vst.msk [vmem:[#allocation3] sm:$0xff] %vm1250, %v1242
          %1252 = vst.msk [vmem:[#allocation3 + $0x8] sm:$0xff] %vm1250, %v1243
          %1253 = vst.msk [vmem:[#allocation3 + $0x10] sm:$0xff] %vm1250, %v1244
          %1254 = vst.msk [vmem:[#allocation3 + $0x18] sm:$0xff] %vm1250, %v1245
        $region112: #{transformer_forward.1} parent=99 // pred_fallthru
          _
        %v1255 = vld [vmem:[#allocation2] sm:$0xff]
        %v1256 = vld [vmem:[#allocation2 + $0x8] sm:$0xff]
        %v1257 = vld [vmem:[#allocation2 + $0x10] sm:$0xff]
        %v1258 = vld [vmem:[#allocation2 + $0x18] sm:$0xff]
        %v1259 = vld [vmem:[#allocation3] sm:$0xff]
        %v1260 = vld [vmem:[#allocation3 + $0x8] sm:$0xff]
        %v1261 = vld [vmem:[#allocation3 + $0x10] sm:$0xff]
        %v1262 = vld [vmem:[#allocation3 + $0x18] sm:$0xff]
        %v1263 = vld [vmem:[%s3] sm:$0xff]
        %v1264 = vld [vmem:[%s3 + $0x8] sm:$0xff]
        %v1265 = vld [vmem:[%s3 + $0x10] sm:$0xff]
        %v1266 = vld [vmem:[%s3 + $0x18] sm:$0xff]
        %v1267 = vld [vmem:[%s3 + $0x20] sm:$0xff]
        %v1268 = vld [vmem:[%s3 + $0x28] sm:$0xff]
        %v1269 = vld [vmem:[%s3 + $0x30] sm:$0xff]
        %v1270 = vld [vmem:[%s3 + $0x38] sm:$0xff]
        %v1271 = vld [vmem:[%s3 + $0x40] sm:$0xff]
        %v1272 = vld [vmem:[%s3 + $0x48] sm:$0xff]
        %v1273 = vld [vmem:[%s3 + $0x50] sm:$0xff]
        %v1274 = vld [vmem:[%s3 + $0x58] sm:$0xff]
        %v1275 = vld [vmem:[%s3 + $0x60] sm:$0xff]
        %v1276 = vld [vmem:[%s3 + $0x68] sm:$0xff]
        %v1277 = vld [vmem:[%s3 + $0x70] sm:$0xff]
        %v1278 = vld [vmem:[%s3 + $0x78] sm:$0xff]
        %v1279 = vld [vmem:[%s4] sm:$0xff]
        %v1280 = vld [vmem:[%s803] sm:$0xff]
        %v1281 = vld [vmem:[%s803 + $0x8] sm:$0xff]
        %v1282 = vld [vmem:[%s803 + $0x10] sm:$0xff]
        %v1283 = vld [vmem:[%s803 + $0x18] sm:$0xff]
        %v1284 = vld [vmem:[%s803 + $0x20] sm:$0xff]
        %v1285 = vld [vmem:[%s803 + $0x28] sm:$0xff]
        %v1286 = vld [vmem:[%s803 + $0x30] sm:$0xff]
        %v1287 = vld [vmem:[%s803 + $0x38] sm:$0xff]
        %v1288 = vld [vmem:[%s803 + $0x40] sm:$0xff]
        %v1289 = vld [vmem:[%s803 + $0x48] sm:$0xff]
        %v1290 = vld [vmem:[%s803 + $0x50] sm:$0xff]
        %v1291 = vld [vmem:[%s803 + $0x58] sm:$0xff]
        %v1292 = vld [vmem:[%s803 + $0x60] sm:$0xff]
        %v1293 = vld [vmem:[%s803 + $0x68] sm:$0xff]
        %v1294 = vld [vmem:[%s803 + $0x70] sm:$0xff]
        %v1295 = vld [vmem:[%s803 + $0x78] sm:$0xff]
        %v1296 = vld [vmem:[%s803 + $0x80] sm:$0xff]
        %v1297 = vld [vmem:[%s803 + $0x88] sm:$0xff]
        %v1298 = vld [vmem:[%s803 + $0x90] sm:$0xff]
        %v1299 = vld [vmem:[%s803 + $0x98] sm:$0xff]
        %v1300 = vld [vmem:[%s803 + $0xa0] sm:$0xff]
        %v1301 = vld [vmem:[%s803 + $0xa8] sm:$0xff]
        %v1302 = vld [vmem:[%s803 + $0xb0] sm:$0xff]
        %v1303 = vld [vmem:[%s803 + $0xb8] sm:$0xff]
        %v1304 = vld [vmem:[%s803 + $0xc0] sm:$0xff]
        %v1305 = vld [vmem:[%s803 + $0xc8] sm:$0xff]
        %v1306 = vld [vmem:[%s803 + $0xd0] sm:$0xff]
        %v1307 = vld [vmem:[%s803 + $0xd8] sm:$0xff]
        %v1308 = vld [vmem:[%s803 + $0xe0] sm:$0xff]
        %v1309 = vld [vmem:[%s803 + $0xe8] sm:$0xff]
        %v1310 = vld [vmem:[%s803 + $0xf0] sm:$0xff]
        %v1311 = vld [vmem:[%s803 + $0xf8] sm:$0xff]
        %v1312 = vld [vmem:[%s803 + $0x100] sm:$0xff]
        %v1313 = vld [vmem:[%s803 + $0x108] sm:$0xff]
        %v1314 = vld [vmem:[%s803 + $0x110] sm:$0xff]
        %v1315 = vld [vmem:[%s803 + $0x118] sm:$0xff]
        %v1316 = vld [vmem:[%s803 + $0x120] sm:$0xff]
        %v1317 = vld [vmem:[%s803 + $0x128] sm:$0xff]
        %v1318 = vld [vmem:[%s803 + $0x130] sm:$0xff]
        %v1319 = vld [vmem:[%s803 + $0x138] sm:$0xff]
        %v1320 = vld [vmem:[%s803 + $0x140] sm:$0xff]
        %v1321 = vld [vmem:[%s803 + $0x148] sm:$0xff]
        %v1322 = vld [vmem:[%s803 + $0x150] sm:$0xff]
        %v1323 = vld [vmem:[%s803 + $0x158] sm:$0xff]
        %v1324 = vld [vmem:[%s803 + $0x160] sm:$0xff]
        %v1325 = vld [vmem:[%s803 + $0x168] sm:$0xff]
        %v1326 = vld [vmem:[%s803 + $0x170] sm:$0xff]
        %v1327 = vld [vmem:[%s803 + $0x178] sm:$0xff]
        %v1328 = vld [vmem:[%s807] sm:$0x7]
        %v1329 = vld [vmem:[%s697] sm:$0xff]
        %v1330 = vld [vmem:[%s697 + $0x8] sm:$0xff]
        %v1331 = vld [vmem:[%s697 + $0x10] sm:$0xff]
        %v1332 = vld [vmem:[%s697 + $0x18] sm:$0xff]
        %v1333 = vld [vmem:[%s697 + $0x20] sm:$0xff]
        %v1334 = vld [vmem:[%s697 + $0x28] sm:$0xff]
        %v1335 = vld [vmem:[%s697 + $0x30] sm:$0xff]
        %v1336 = vld [vmem:[%s697 + $0x38] sm:$0xff]
        %v1337 = vld [vmem:[%s697 + $0x40] sm:$0xff]
        %v1338 = vld [vmem:[%s697 + $0x48] sm:$0xff]
        %v1339 = vld [vmem:[%s697 + $0x50] sm:$0xff]
        %v1340 = vld [vmem:[%s697 + $0x58] sm:$0xff]
        %v1341 = vld [vmem:[%s697 + $0x60] sm:$0xff]
        %v1342 = vld [vmem:[%s697 + $0x68] sm:$0xff]
        %v1343 = vld [vmem:[%s697 + $0x70] sm:$0xff]
        %v1344 = vld [vmem:[%s697 + $0x78] sm:$0xff]
        %v1345 = vld [vmem:[%s810] sm:$0x1]
        %v1346 = vld [vmem:[%s813] sm:$0x1]
        %v1347 = vld [vmem:[%s816] sm:$0x1]
        %v1348 = vld [vmem:[%s821] sm:$0xff]
        %v1349 = vld [vmem:[%s821 + $0x8] sm:$0xff]
        %v1350 = vld [vmem:[%s821 + $0x10] sm:$0xff]
        %v1351 = vld [vmem:[%s821 + $0x18] sm:$0xff]
        %v1352 = vld [vmem:[%s821 + $0x20] sm:$0xff]
        %v1353 = vld [vmem:[%s821 + $0x28] sm:$0xff]
        %v1354 = vld [vmem:[%s821 + $0x30] sm:$0xff]
        %v1355 = vld [vmem:[%s821 + $0x38] sm:$0xff]
        %v1356 = vld [vmem:[%s821 + $0x40] sm:$0xff]
        %v1357 = vld [vmem:[%s821 + $0x48] sm:$0xff]
        %v1358 = vld [vmem:[%s821 + $0x50] sm:$0xff]
        %v1359 = vld [vmem:[%s821 + $0x58] sm:$0xff]
        %v1360 = vld [vmem:[%s821 + $0x60] sm:$0xff]
        %v1361 = vld [vmem:[%s821 + $0x68] sm:$0xff]
        %v1362 = vld [vmem:[%s821 + $0x70] sm:$0xff]
        %v1363 = vld [vmem:[%s821 + $0x78] sm:$0xff]
        %v1364 = vld [vmem:[%s821 + $0x80] sm:$0xff]
        %v1365 = vld [vmem:[%s821 + $0x88] sm:$0xff]
        %v1366 = vld [vmem:[%s821 + $0x90] sm:$0xff]
        %v1367 = vld [vmem:[%s821 + $0x98] sm:$0xff]
        %v1368 = vld [vmem:[%s821 + $0xa0] sm:$0xff]
        %v1369 = vld [vmem:[%s821 + $0xa8] sm:$0xff]
        %v1370 = vld [vmem:[%s821 + $0xb0] sm:$0xff]
        %v1371 = vld [vmem:[%s821 + $0xb8] sm:$0xff]
        %v1372 = vld [vmem:[%s821 + $0xc0] sm:$0xff]
        %v1373 = vld [vmem:[%s821 + $0xc8] sm:$0xff]
        %v1374 = vld [vmem:[%s821 + $0xd0] sm:$0xff]
        %v1375 = vld [vmem:[%s821 + $0xd8] sm:$0xff]
        %v1376 = vld [vmem:[%s821 + $0xe0] sm:$0xff]
        %v1377 = vld [vmem:[%s821 + $0xe8] sm:$0xff]
        %v1378 = vld [vmem:[%s821 + $0xf0] sm:$0xff]
        %v1379 = vld [vmem:[%s821 + $0xf8] sm:$0xff]
        %v1380 = vld [vmem:[%s825] sm:$0x3]
        %v1381 = vld [vmem:[%s706] sm:$0xff]
        %v1382 = vld [vmem:[%s706 + $0x8] sm:$0xff]
        %v1383 = vld [vmem:[%s706 + $0x10] sm:$0xff]
        %v1384 = vld [vmem:[%s706 + $0x18] sm:$0xff]
        %v1385 = vld [vmem:[%s706 + $0x20] sm:$0xff]
        %v1386 = vld [vmem:[%s706 + $0x28] sm:$0xff]
        %v1387 = vld [vmem:[%s706 + $0x30] sm:$0xff]
        %v1388 = vld [vmem:[%s706 + $0x38] sm:$0xff]
        %v1389 = vld [vmem:[%s706 + $0x40] sm:$0xff]
        %v1390 = vld [vmem:[%s706 + $0x48] sm:$0xff]
        %v1391 = vld [vmem:[%s706 + $0x50] sm:$0xff]
        %v1392 = vld [vmem:[%s706 + $0x58] sm:$0xff]
        %v1393 = vld [vmem:[%s706 + $0x60] sm:$0xff]
        %v1394 = vld [vmem:[%s706 + $0x68] sm:$0xff]
        %v1395 = vld [vmem:[%s706 + $0x70] sm:$0xff]
        %v1396 = vld [vmem:[%s706 + $0x78] sm:$0xff]
        %v1397 = vld [vmem:[%s706 + $0x80] sm:$0xff]
        %v1398 = vld [vmem:[%s706 + $0x88] sm:$0xff]
        %v1399 = vld [vmem:[%s706 + $0x90] sm:$0xff]
        %v1400 = vld [vmem:[%s706 + $0x98] sm:$0xff]
        %v1401 = vld [vmem:[%s706 + $0xa0] sm:$0xff]
        %v1402 = vld [vmem:[%s706 + $0xa8] sm:$0xff]
        %v1403 = vld [vmem:[%s706 + $0xb0] sm:$0xff]
        %v1404 = vld [vmem:[%s706 + $0xb8] sm:$0xff]
        %v1405 = vld [vmem:[%s706 + $0xc0] sm:$0xff]
        %v1406 = vld [vmem:[%s706 + $0xc8] sm:$0xff]
        %v1407 = vld [vmem:[%s706 + $0xd0] sm:$0xff]
        %v1408 = vld [vmem:[%s706 + $0xd8] sm:$0xff]
        %v1409 = vld [vmem:[%s706 + $0xe0] sm:$0xff]
        %v1410 = vld [vmem:[%s706 + $0xe8] sm:$0xff]
        %v1411 = vld [vmem:[%s706 + $0xf0] sm:$0xff]
        %v1412 = vld [vmem:[%s706 + $0xf8] sm:$0xff]
        %v1413 = vld [vmem:[%s828] sm:$0x1]
        %v1414 = vld [vmem:[%s831] sm:$0x1]
        %v1415 = vld [vmem:[%s834] sm:$0x1]
        %v1417 = vlaneseq
        %v1418 = vshrl.u32 %v1417, 7
        %v1419 = vsub.s32 0, %v1418
        %v1420 = vrot.slane %v1328, %v1419
        %v1421 = vlaneseq
        %v1422 = vshrl.u32 %v1421, 7
        %v1423 = vsub.s32 1, %v1422
        %v1424 = vrot.slane %v1328, %v1423
        %v1425 = vlaneseq
        %v1426 = vshrl.u32 %v1425, 7
        %v1427 = vsub.s32 2, %v1426
        %v1428 = vrot.slane %v1328, %v1427
        %1432 = vmatprep.subr.mxu0 %v1326
        %1433 = vmatpush1.msra.mxu0 %v1325
        %1434 = vmatprep.subr.mxu0 %v1323
        %1435 = vmatpush1.msra.mxu0 %v1322
        %1436 = vmatprep.subr.mxu0 %v1320
        %1437 = vmatpush1.msra.mxu0 %v1319
        %1438 = vmatprep.subr.mxu0 %v1317
        %1439 = vmatpush1.msra.mxu0 %v1316
        %1440 = vmatprep.subr.mxu0 %v1314
        %1441 = vmatpush1.msra.mxu0 %v1313
        %1442 = vmatprep.subr.mxu0 %v1311
        %1443 = vmatpush1.msra.mxu0 %v1310
        %1444 = vmatprep.subr.mxu0 %v1308
        %1445 = vmatpush1.msra.mxu0 %v1307
        %1446 = vmatprep.subr.mxu0 %v1305
        %1447 = vmatpush1.msra.mxu0 %v1304
        %1448 = vmatprep.subr.mxu0 %v1302
        %1449 = vmatpush1.msra.mxu0 %v1301
        %1450 = vmatprep.subr.mxu0 %v1299
        %1451 = vmatpush1.msra.mxu0 %v1298
        %1452 = vmatprep.subr.mxu0 %v1296
        %1453 = vmatpush1.msra.mxu0 %v1295
        %1454 = vmatprep.subr.mxu0 %v1293
        %1455 = vmatpush1.msra.mxu0 %v1292
        %1456 = vmatprep.subr.mxu0 %v1290
        %1457 = vmatpush1.msra.mxu0 %v1289
        %1458 = vmatprep.subr.mxu0 %v1287
        %1459 = vmatpush1.msra.mxu0 %v1286
        %1460 = vmatprep.subr.mxu0 %v1284
        %1461 = vmatpush1.msra.mxu0 %v1283
        %1462 = vmatprep.subr.mxu0 %v1281
        %1463 = vmatpush1.msra.mxu0 %v1280
        %1464 = vmatprep.subr.mxu0 0.0
        %1465 = vmatpush2.msra.mxu0 0.0
        %1466 = vmatprep.subr.mxu0 0.0
        %1467 = vmatpush2.msra.mxu0 0.0
        %1468 = vmatprep.subr.mxu0 0.0
        %1469 = vmatpush2.msra.mxu0 0.0
        %1470 = vmatprep.subr.mxu0 0.0
        %1471 = vmatpush2.msra.mxu0 0.0
        %1472 = vmatprep.subr.mxu0 0.0
        %1473 = vmatpush2.msra.mxu0 0.0
        %1474 = vmatprep.subr.mxu0 0.0
        %1475 = vmatpush2.msra.mxu0 0.0
        %1476 = vmatprep.subr.mxu0 0.0
        %1477 = vmatpush2.msra.mxu0 0.0
        %1478 = vmatprep.subr.mxu0 0.0
        %1479 = vmatpush2.msra.mxu0 0.0
        %1480 = vmatprep.subr.mxu0 0.0
        %1481 = vmatpush2.msra.mxu0 0.0
        %1482 = vmatprep.subr.mxu0 0.0
        %1483 = vmatpush2.msra.mxu0 0.0
        %1484 = vmatprep.subr.mxu0 0.0
        %1485 = vmatpush2.msra.mxu0 0.0
        %1486 = vmatprep.subr.mxu0 0.0
        %1487 = vmatpush2.msra.mxu0 0.0
        %1488 = vmatprep.subr.mxu0 0.0
        %1489 = vmatpush2.msra.mxu0 0.0
        %1490 = vmatprep.subr.mxu0 0.0
        %1491 = vmatpush2.msra.mxu0 0.0
        %1492 = vmatprep.subr.mxu0 0.0
        %1493 = vmatpush2.msra.mxu0 0.0
        %1494 = vmatprep.subr.mxu0 0.0
        %1495 = vmatpush2.msra.mxu0 0.0
        %1496 = vmatprep.mubr.f32.mxu0 0.0
        %1497 = vmatmul.mubr.f32.gmra.mxu0 %v1255
        %v1498 = vpop.f32.mrf.mxu0
        %v1499 = vadd.f32 %v1420, %v1498
        %v1500 = vpop.f32.mrf.mxu0
        %v1501 = vadd.f32 %v1424, %v1500
        %1502 = vmatprep.mubr.f32.mxu0 0.0
        %1503 = vmatmul.mubr.f32.gmra.mxu0 %v1256
        %v1504 = vpop.f32.mrf.mxu0
        %v1505 = vadd.f32 %v1420, %v1504
        %v1506 = vpop.f32.mrf.mxu0
        %v1507 = vadd.f32 %v1424, %v1506
        %1508 = vmatprep.mubr.f32.mxu0 0.0
        %1509 = vmatmul.mubr.f32.gmra.mxu0 %v1257
        %v1510 = vpop.f32.mrf.mxu0
        %v1511 = vadd.f32 %v1420, %v1510
        %v1512 = vpop.f32.mrf.mxu0
        %v1513 = vadd.f32 %v1424, %v1512
        %1514 = vmatprep.mubr.f32.mxu0 0.0
        %1515 = vmatmul.mubr.f32.gmra.mxu0 %v1258
        %v1516 = vpop.f32.mrf.mxu0
        %v1517 = vadd.f32 %v1420, %v1516
        %v1518 = vpop.f32.mrf.mxu0
        %v1519 = vadd.f32 %v1424, %v1518
        %1520 = vdwg.mxu0
        %1521 = vmatprep.subr.mxu0 0.0
        %1522 = vmatpush1.msra.mxu0 %v1327
        %1523 = vmatprep.subr.mxu0 0.0
        %1524 = vmatpush1.msra.mxu0 %v1324
        %1525 = vmatprep.subr.mxu0 0.0
        %1526 = vmatpush1.msra.mxu0 %v1321
        %1527 = vmatprep.subr.mxu0 0.0
        %1528 = vmatpush1.msra.mxu0 %v1318
        %1529 = vmatprep.subr.mxu0 0.0
        %1530 = vmatpush1.msra.mxu0 %v1315
        %1531 = vmatprep.subr.mxu0 0.0
        %1532 = vmatpush1.msra.mxu0 %v1312
        %1533 = vmatprep.subr.mxu0 0.0
        %1534 = vmatpush1.msra.mxu0 %v1309
        %1535 = vmatprep.subr.mxu0 0.0
        %1536 = vmatpush1.msra.mxu0 %v1306
        %1537 = vmatprep.subr.mxu0 0.0
        %1538 = vmatpush1.msra.mxu0 %v1303
        %1539 = vmatprep.subr.mxu0 0.0
        %1540 = vmatpush1.msra.mxu0 %v1300
        %1541 = vmatprep.subr.mxu0 0.0
        %1542 = vmatpush1.msra.mxu0 %v1297
        %1543 = vmatprep.subr.mxu0 0.0
        %1544 = vmatpush1.msra.mxu0 %v1294
        %1545 = vmatprep.subr.mxu0 0.0
        %1546 = vmatpush1.msra.mxu0 %v1291
        %1547 = vmatprep.subr.mxu0 0.0
        %1548 = vmatpush1.msra.mxu0 %v1288
        %1549 = vmatprep.subr.mxu0 0.0
        %1550 = vmatpush1.msra.mxu0 %v1285
        %1551 = vmatprep.subr.mxu0 0.0
        %1552 = vmatpush1.msra.mxu0 %v1282
        %1553 = vmatprep.subr.mxu0 0.0
        %1554 = vmatpush2.msra.mxu0 0.0
        %1555 = vmatprep.subr.mxu0 0.0
        %1556 = vmatpush2.msra.mxu0 0.0
        %1557 = vmatprep.subr.mxu0 0.0
        %1558 = vmatpush2.msra.mxu0 0.0
        %1559 = vmatprep.subr.mxu0 0.0
        %1560 = vmatpush2.msra.mxu0 0.0
        %1561 = vmatprep.subr.mxu0 0.0
        %1562 = vmatpush2.msra.mxu0 0.0
        %1563 = vmatprep.subr.mxu0 0.0
        %1564 = vmatpush2.msra.mxu0 0.0
        %1565 = vmatprep.subr.mxu0 0.0
        %1566 = vmatpush2.msra.mxu0 0.0
        %1567 = vmatprep.subr.mxu0 0.0
        %1568 = vmatpush2.msra.mxu0 0.0
        %1569 = vmatprep.subr.mxu0 0.0
        %1570 = vmatpush2.msra.mxu0 0.0
        %1571 = vmatprep.subr.mxu0 0.0
        %1572 = vmatpush2.msra.mxu0 0.0
        %1573 = vmatprep.subr.mxu0 0.0
        %1574 = vmatpush2.msra.mxu0 0.0
        %1575 = vmatprep.subr.mxu0 0.0
        %1576 = vmatpush2.msra.mxu0 0.0
        %1577 = vmatprep.subr.mxu0 0.0
        %1578 = vmatpush2.msra.mxu0 0.0
        %1579 = vmatprep.subr.mxu0 0.0
        %1580 = vmatpush2.msra.mxu0 0.0
        %1581 = vmatprep.subr.mxu0 0.0
        %1582 = vmatpush2.msra.mxu0 0.0
        %1583 = vmatprep.subr.mxu0 0.0
        %1584 = vmatpush2.msra.mxu0 0.0
        %1585 = vmatprep.mubr.f32.mxu0 0.0
        %1586 = vmatmul.mubr.f32.gmra.mxu0 %v1255
        %v1587 = vpop.f32.mrf.mxu0
        %v1588 = vadd.f32 %v1428, %v1587
        %v1589 = vpop.f32.mrf.mxu0
        %1590 = vmatprep.mubr.f32.mxu0 0.0
        %1591 = vmatmul.mubr.f32.gmra.mxu0 %v1256
        %v1592 = vpop.f32.mrf.mxu0
        %v1593 = vadd.f32 %v1428, %v1592
        %v1594 = vpop.f32.mrf.mxu0
        %1595 = vmatprep.mubr.f32.mxu0 0.0
        %1596 = vmatmul.mubr.f32.gmra.mxu0 %v1257
        %v1597 = vpop.f32.mrf.mxu0
        %v1598 = vadd.f32 %v1428, %v1597
        %v1599 = vpop.f32.mrf.mxu0
        %1600 = vmatprep.mubr.f32.mxu0 0.0
        %1601 = vmatmul.mubr.f32.gmra.mxu0 %v1258
        %v1602 = vpop.f32.mrf.mxu0
        %v1603 = vadd.f32 %v1428, %v1602
        %v1604 = vpop.f32.mrf.mxu0
        %1605 = vdwg.mxu0
        %v1606 = vmul.f32 %v1499, 0.25
        %v1607 = vmul.f32 %v1505, 0.25
        %v1608 = vmul.f32 %v1511, 0.25
        %v1609 = vmul.f32 %v1517, 0.25
        %v1610 = vmul.f32 %v1606, %v1501
        %v1611 = vmul.f32 %v1607, %v1507
        %1612 = vmatprep.subr.mxu0 0.0
        %1613 = vmatpush1.msra.mxu0 %v1278
        %1614 = vmatprep.subr.mxu0 0.0
        %1615 = vmatpush1.msra.mxu0 %v1277
        %1616 = vmatprep.subr.mxu0 0.0
        %1617 = vmatpush1.msra.mxu0 %v1276
        %1618 = vmatprep.subr.mxu0 0.0
        %1619 = vmatpush1.msra.mxu0 %v1275
        %1620 = vmatprep.subr.mxu0 0.0
        %1621 = vmatpush1.msra.mxu0 %v1274
        %1622 = vmatprep.subr.mxu0 0.0
        %1623 = vmatpush1.msra.mxu0 %v1273
        %1624 = vmatprep.subr.mxu0 0.0
        %1625 = vmatpush1.msra.mxu0 %v1272
        %1626 = vmatprep.subr.mxu0 0.0
        %1627 = vmatpush1.msra.mxu0 %v1271
        %1628 = vmatprep.subr.mxu0 0.0
        %1629 = vmatpush1.msra.mxu0 %v1270
        %1630 = vmatprep.subr.mxu0 0.0
        %1631 = vmatpush1.msra.mxu0 %v1269
        %1632 = vmatprep.subr.mxu0 0.0
        %1633 = vmatpush1.msra.mxu0 %v1268
        %1634 = vmatprep.subr.mxu0 0.0
        %1635 = vmatpush1.msra.mxu0 %v1267
        %1636 = vmatprep.subr.mxu0 0.0
        %1637 = vmatpush1.msra.mxu0 %v1266
        %1638 = vmatprep.subr.mxu0 0.0
        %1639 = vmatpush1.msra.mxu0 %v1265
        %1640 = vmatprep.subr.mxu0 0.0
        %1641 = vmatpush1.msra.mxu0 %v1264
        %1642 = vmatprep.subr.mxu0 0.0
        %1643 = vmatpush1.msra.mxu0 %v1263
        %1644 = vmatprep.subr.mxu0 0.0
        %1645 = vmatpush2.msra.mxu0 0.0
        %1646 = vmatprep.subr.mxu0 0.0
        %1647 = vmatpush2.msra.mxu0 0.0
        %1648 = vmatprep.subr.mxu0 0.0
        %1649 = vmatpush2.msra.mxu0 0.0
        %1650 = vmatprep.subr.mxu0 0.0
        %1651 = vmatpush2.msra.mxu0 0.0
        %1652 = vmatprep.subr.mxu0 0.0
        %1653 = vmatpush2.msra.mxu0 0.0
        %1654 = vmatprep.subr.mxu0 0.0
        %1655 = vmatpush2.msra.mxu0 0.0
        %1656 = vmatprep.subr.mxu0 0.0
        %1657 = vmatpush2.msra.mxu0 0.0
        %1658 = vmatprep.subr.mxu0 0.0
        %1659 = vmatpush2.msra.mxu0 0.0
        %1660 = vmatprep.subr.mxu0 0.0
        %1661 = vmatpush2.msra.mxu0 0.0
        %1662 = vmatprep.subr.mxu0 0.0
        %1663 = vmatpush2.msra.mxu0 0.0
        %1664 = vmatprep.subr.mxu0 0.0
        %1665 = vmatpush2.msra.mxu0 0.0
        %1666 = vmatprep.subr.mxu0 0.0
        %1667 = vmatpush2.msra.mxu0 0.0
        %1668 = vmatprep.subr.mxu0 0.0
        %1669 = vmatpush2.msra.mxu0 0.0
        %1670 = vmatprep.subr.mxu0 0.0
        %1671 = vmatpush2.msra.mxu0 0.0
        %1672 = vmatprep.subr.mxu0 0.0
        %1673 = vmatpush2.msra.mxu0 0.0
        %1674 = vmatprep.subr.mxu0 0.0
        %1675 = vmatpush2.msra.mxu0 0.0
        %1676 = vmatprep.mubr.f32.mxu0 0.0
        %1677 = vmatmul.mubr.f32.gmra.mxu0 %v1610
        %v1678 = vpop.f32.mrf.mxu0
        %v1679 = vadd.f32 %v1259, %v1678
        %v1680 = vpop.f32.mrf.mxu0
        %1681 = vmatprep.mubr.f32.mxu0 0.0
        %1682 = vmatmul.mubr.f32.gmra.mxu0 %v1611
        %v1683 = vpop.f32.mrf.mxu0
        %v1684 = vadd.f32 %v1260, %v1683
        %v1685 = vpop.f32.mrf.mxu0
        %1686 = vdwg.mxu0
        %v1687 = vmul.f32 %v1606, %v1513
        %v1688 = vmul.f32 %v1607, %v1519
        %1689 = vmatprep.subr.mxu0 0.0
        %1690 = vmatpush1.msra.mxu0 %v1278
        %1691 = vmatprep.subr.mxu0 0.0
        %1692 = vmatpush1.msra.mxu0 %v1277
        %1693 = vmatprep.subr.mxu0 0.0
        %1694 = vmatpush1.msra.mxu0 %v1276
        %1695 = vmatprep.subr.mxu0 0.0
        %1696 = vmatpush1.msra.mxu0 %v1275
        %1697 = vmatprep.subr.mxu0 0.0
        %1698 = vmatpush1.msra.mxu0 %v1274
        %1699 = vmatprep.subr.mxu0 0.0
        %1700 = vmatpush1.msra.mxu0 %v1273
        %1701 = vmatprep.subr.mxu0 0.0
        %1702 = vmatpush1.msra.mxu0 %v1272
        %1703 = vmatprep.subr.mxu0 0.0
        %1704 = vmatpush1.msra.mxu0 %v1271
        %1705 = vmatprep.subr.mxu0 0.0
        %1706 = vmatpush1.msra.mxu0 %v1270
        %1707 = vmatprep.subr.mxu0 0.0
        %1708 = vmatpush1.msra.mxu0 %v1269
        %1709 = vmatprep.subr.mxu0 0.0
        %1710 = vmatpush1.msra.mxu0 %v1268
        %1711 = vmatprep.subr.mxu0 0.0
        %1712 = vmatpush1.msra.mxu0 %v1267
        %1713 = vmatprep.subr.mxu0 0.0
        %1714 = vmatpush1.msra.mxu0 %v1266
        %1715 = vmatprep.subr.mxu0 0.0
        %1716 = vmatpush1.msra.mxu0 %v1265
        %1717 = vmatprep.subr.mxu0 0.0
        %1718 = vmatpush1.msra.mxu0 %v1264
        %1719 = vmatprep.subr.mxu0 0.0
        %1720 = vmatpush1.msra.mxu0 %v1263
        %1721 = vmatprep.subr.mxu0 0.0
        %1722 = vmatpush2.msra.mxu0 0.0
        %1723 = vmatprep.subr.mxu0 0.0
        %1724 = vmatpush2.msra.mxu0 0.0
        %1725 = vmatprep.subr.mxu0 0.0
        %1726 = vmatpush2.msra.mxu0 0.0
        %1727 = vmatprep.subr.mxu0 0.0
        %1728 = vmatpush2.msra.mxu0 0.0
        %1729 = vmatprep.subr.mxu0 0.0
        %1730 = vmatpush2.msra.mxu0 0.0
        %1731 = vmatprep.subr.mxu0 0.0
        %1732 = vmatpush2.msra.mxu0 0.0
        %1733 = vmatprep.subr.mxu0 0.0
        %1734 = vmatpush2.msra.mxu0 0.0
        %1735 = vmatprep.subr.mxu0 0.0
        %1736 = vmatpush2.msra.mxu0 0.0
        %1737 = vmatprep.subr.mxu0 0.0
        %1738 = vmatpush2.msra.mxu0 0.0
        %1739 = vmatprep.subr.mxu0 0.0
        %1740 = vmatpush2.msra.mxu0 0.0
        %1741 = vmatprep.subr.mxu0 0.0
        %1742 = vmatpush2.msra.mxu0 0.0
        %1743 = vmatprep.subr.mxu0 0.0
        %1744 = vmatpush2.msra.mxu0 0.0
        %1745 = vmatprep.subr.mxu0 0.0
        %1746 = vmatpush2.msra.mxu0 0.0
        %1747 = vmatprep.subr.mxu0 0.0
        %1748 = vmatpush2.msra.mxu0 0.0
        %1749 = vmatprep.subr.mxu0 0.0
        %1750 = vmatpush2.msra.mxu0 0.0
        %1751 = vmatprep.subr.mxu0 0.0
        %1752 = vmatpush2.msra.mxu0 0.0
        %1753 = vmatprep.mubr.f32.mxu0 0.0
        %1754 = vmatmul.mubr.f32.gmra.mxu0 %v1687
        %v1755 = vpop.f32.mrf.mxu0
        %v1756 = vadd.f32 %v1261, %v1755
        %v1757 = vpop.f32.mrf.mxu0
        %1758 = vmatprep.mubr.f32.mxu0 0.0
        %1759 = vmatmul.mubr.f32.gmra.mxu0 %v1688
        %v1760 = vpop.f32.mrf.mxu0
        %v1761 = vadd.f32 %v1262, %v1760
        %v1762 = vpop.f32.mrf.mxu0
        %1763 = vdwg.mxu0
        %v1764 = vmax.f32 %v1679, %v1756
        %v1765 = vmax.f32 %v1684, %v1761
        %v1766 = vsub.f32 %v1679, %v1764
        %v1767 = vsub.f32 %v1684, %v1765
        %v1768 = vmul.f32 %v1766, 1.442695
        %v1769 = vpow.pop %v1768
        %v1770 = vmul.f32 %v1767, 1.442695
        %v1771 = vpow.pop %v1770
        %v1772 = vsub.f32 %v1756, %v1764
        %v1773 = vsub.f32 %v1761, %v1765
        %v1774 = vmul.f32 %v1772, 1.442695
        %v1775 = vpow.pop %v1774
        %v1776 = vmul.f32 %v1773, 1.442695
        %v1777 = vpow.pop %v1776
        %v1778 = vadd.f32 %v1769, %v1775
        %v1779 = vadd.f32 %v1771, %v1777
        %v1780 = vrcp.pop %v1778
        %v1781 = vmul.f32 1.0, %v1780
        %v1782 = vrcp.pop %v1779
        %v1783 = vmul.f32 1.0, %v1782
        %v1784 = vmul.f32 %v1769, %v1781
        %v1785 = vmul.f32 %v1771, %v1783
        %vm1786 = vcmask 64512
        %v1788 = vsel %vm1786, %v1784, 0
        %v1791 = vsel %vm1786, %v1785, 0
        %1793 = vmatprep.subr.mxu0 0.0
        %1794 = vmatpush1.msra.mxu0 0.0
        %1795 = vmatprep.subr.mxu0 0.0
        %1796 = vmatpush1.msra.mxu0 0.0
        %1797 = vmatprep.subr.mxu0 0.0
        %1798 = vmatpush1.msra.mxu0 0.0
        %1799 = vmatprep.subr.mxu0 0.0
        %1800 = vmatpush1.msra.mxu0 0.0
        %1801 = vmatprep.subr.mxu0 0.0
        %1802 = vmatpush1.msra.mxu0 0.0
        %1803 = vmatprep.subr.mxu0 0.0
        %1804 = vmatpush1.msra.mxu0 0.0
        %1805 = vmatprep.subr.mxu0 0.0
        %1806 = vmatpush1.msra.mxu0 0.0
        %1807 = vmatprep.subr.mxu0 0.0
        %1808 = vmatpush1.msra.mxu0 0.0
        %1809 = vmatprep.subr.mxu0 0.0
        %1810 = vmatpush1.msra.mxu0 0.0
        %1811 = vmatprep.subr.mxu0 0.0
        %1812 = vmatpush1.msra.mxu0 0.0
        %1813 = vmatprep.subr.mxu0 0.0
        %1814 = vmatpush1.msra.mxu0 0.0
        %1815 = vmatprep.subr.mxu0 0.0
        %1816 = vmatpush1.msra.mxu0 0.0
        %1817 = vmatprep.subr.mxu0 0.0
        %1818 = vmatpush1.msra.mxu0 0.0
        %1819 = vmatprep.subr.mxu0 0.0
        %1820 = vmatpush1.msra.mxu0 0.0
        %1821 = vmatprep.subr.mxu0 0.0
        %1822 = vmatpush1.msra.mxu0 0.0
        %1823 = vmatprep.subr.mxu0 0.0
        %1824 = vmatpush1.msra.mxu0 %v1279
        %1825 = vmatprep.subr.mxu0 0.0
        %1826 = vmatpush2.msra.mxu0 0.0
        %1827 = vmatprep.subr.mxu0 0.0
        %1828 = vmatpush2.msra.mxu0 0.0
        %1829 = vmatprep.subr.mxu0 0.0
        %1830 = vmatpush2.msra.mxu0 0.0
        %1831 = vmatprep.subr.mxu0 0.0
        %1832 = vmatpush2.msra.mxu0 0.0
        %1833 = vmatprep.subr.mxu0 0.0
        %1834 = vmatpush2.msra.mxu0 0.0
        %1835 = vmatprep.subr.mxu0 0.0
        %1836 = vmatpush2.msra.mxu0 0.0
        %1837 = vmatprep.subr.mxu0 0.0
        %1838 = vmatpush2.msra.mxu0 0.0
        %1839 = vmatprep.subr.mxu0 0.0
        %1840 = vmatpush2.msra.mxu0 0.0
        %1841 = vmatprep.subr.mxu0 0.0
        %1842 = vmatpush2.msra.mxu0 0.0
        %1843 = vmatprep.subr.mxu0 0.0
        %1844 = vmatpush2.msra.mxu0 0.0
        %1845 = vmatprep.subr.mxu0 0.0
        %1846 = vmatpush2.msra.mxu0 0.0
        %1847 = vmatprep.subr.mxu0 0.0
        %1848 = vmatpush2.msra.mxu0 0.0
        %1849 = vmatprep.subr.mxu0 0.0
        %1850 = vmatpush2.msra.mxu0 0.0
        %1851 = vmatprep.subr.mxu0 0.0
        %1852 = vmatpush2.msra.mxu0 0.0
        %1853 = vmatprep.subr.mxu0 0.0
        %1854 = vmatpush2.msra.mxu0 0.0
        %1855 = vmatprep.subr.mxu0 0.0
        %1856 = vmatpush2.msra.mxu0 0.0
        %1857 = vmatprep.mubr.f32.mxu0 0.0
        %1858 = vmatmul.mubr.f32.gmra.mxu0 %v1788
        %v1859 = vpop.f32.mrf.mxu0
        %v1860 = vadd.f32 0.0, %v1859
        %v1861 = vpop.f32.mrf.mxu0
        %1862 = vmatprep.mubr.f32.mxu0 0.0
        %1863 = vmatmul.mubr.f32.gmra.mxu0 %v1791
        %v1864 = vpop.f32.mrf.mxu0
        %v1865 = vadd.f32 0.0, %v1864
        %v1866 = vpop.f32.mrf.mxu0
        %1867 = vdwg.mxu0
        %v1868 = vmul.f32 %v1860, %v1588
        %v1869 = vmul.f32 %v1865, %v1593
        %v1870 = vadd.f32 %v1868, 0.0
        %v1871 = vadd.f32 %v1869, 0.0
        %v1872 = vmul.f32 %v1775, %v1781
        %v1873 = vmul.f32 %v1777, %v1783
        %v1875 = vsel %vm1786, %v1872, 0
        %v1878 = vsel %vm1786, %v1873, 0
        %1880 = vmatprep.subr.mxu0 0.0
        %1881 = vmatpush1.msra.mxu0 0.0
        %1882 = vmatprep.subr.mxu0 0.0
        %1883 = vmatpush1.msra.mxu0 0.0
        %1884 = vmatprep.subr.mxu0 0.0
        %1885 = vmatpush1.msra.mxu0 0.0
        %1886 = vmatprep.subr.mxu0 0.0
        %1887 = vmatpush1.msra.mxu0 0.0
        %1888 = vmatprep.subr.mxu0 0.0
        %1889 = vmatpush1.msra.mxu0 0.0
        %1890 = vmatprep.subr.mxu0 0.0
        %1891 = vmatpush1.msra.mxu0 0.0
        %1892 = vmatprep.subr.mxu0 0.0
        %1893 = vmatpush1.msra.mxu0 0.0
        %1894 = vmatprep.subr.mxu0 0.0
        %1895 = vmatpush1.msra.mxu0 0.0
        %1896 = vmatprep.subr.mxu0 0.0
        %1897 = vmatpush1.msra.mxu0 0.0
        %1898 = vmatprep.subr.mxu0 0.0
        %1899 = vmatpush1.msra.mxu0 0.0
        %1900 = vmatprep.subr.mxu0 0.0
        %1901 = vmatpush1.msra.mxu0 0.0
        %1902 = vmatprep.subr.mxu0 0.0
        %1903 = vmatpush1.msra.mxu0 0.0
        %1904 = vmatprep.subr.mxu0 0.0
        %1905 = vmatpush1.msra.mxu0 0.0
        %1906 = vmatprep.subr.mxu0 0.0
        %1907 = vmatpush1.msra.mxu0 0.0
        %1908 = vmatprep.subr.mxu0 0.0
        %1909 = vmatpush1.msra.mxu0 0.0
        %1910 = vmatprep.subr.mxu0 0.0
        %1911 = vmatpush1.msra.mxu0 %v1279
        %1912 = vmatprep.subr.mxu0 0.0
        %1913 = vmatpush2.msra.mxu0 0.0
        %1914 = vmatprep.subr.mxu0 0.0
        %1915 = vmatpush2.msra.mxu0 0.0
        %1916 = vmatprep.subr.mxu0 0.0
        %1917 = vmatpush2.msra.mxu0 0.0
        %1918 = vmatprep.subr.mxu0 0.0
        %1919 = vmatpush2.msra.mxu0 0.0
        %1920 = vmatprep.subr.mxu0 0.0
        %1921 = vmatpush2.msra.mxu0 0.0
        %1922 = vmatprep.subr.mxu0 0.0
        %1923 = vmatpush2.msra.mxu0 0.0
        %1924 = vmatprep.subr.mxu0 0.0
        %1925 = vmatpush2.msra.mxu0 0.0
        %1926 = vmatprep.subr.mxu0 0.0
        %1927 = vmatpush2.msra.mxu0 0.0
        %1928 = vmatprep.subr.mxu0 0.0
        %1929 = vmatpush2.msra.mxu0 0.0
        %1930 = vmatprep.subr.mxu0 0.0
        %1931 = vmatpush2.msra.mxu0 0.0
        %1932 = vmatprep.subr.mxu0 0.0
        %1933 = vmatpush2.msra.mxu0 0.0
        %1934 = vmatprep.subr.mxu0 0.0
        %1935 = vmatpush2.msra.mxu0 0.0
        %1936 = vmatprep.subr.mxu0 0.0
        %1937 = vmatpush2.msra.mxu0 0.0
        %1938 = vmatprep.subr.mxu0 0.0
        %1939 = vmatpush2.msra.mxu0 0.0
        %1940 = vmatprep.subr.mxu0 0.0
        %1941 = vmatpush2.msra.mxu0 0.0
        %1942 = vmatprep.subr.mxu0 0.0
        %1943 = vmatpush2.msra.mxu0 0.0
        %1944 = vmatprep.mubr.f32.mxu0 0.0
        %1945 = vmatmul.mubr.f32.gmra.mxu0 %v1875
        %v1946 = vpop.f32.mrf.mxu0
        %v1947 = vadd.f32 0.0, %v1946
        %v1948 = vpop.f32.mrf.mxu0
        %1949 = vmatprep.mubr.f32.mxu0 0.0
        %1950 = vmatmul.mubr.f32.gmra.mxu0 %v1878
        %v1951 = vpop.f32.mrf.mxu0
        %v1952 = vadd.f32 0.0, %v1951
        %v1953 = vpop.f32.mrf.mxu0
        %1954 = vdwg.mxu0
        %v1955 = vmul.f32 %v1947, %v1598
        %v1956 = vmul.f32 %v1952, %v1603
        %v1957 = vadd.f32 %v1870, %v1955
        %v1958 = vadd.f32 %v1871, %v1956
        %v1959 = vmul.f32 %v1608, %v1501
        %v1960 = vmul.f32 %v1609, %v1507
        %1961 = vmatprep.subr.mxu0 0.0
        %1962 = vmatpush1.msra.mxu0 %v1278
        %1963 = vmatprep.subr.mxu0 0.0
        %1964 = vmatpush1.msra.mxu0 %v1277
        %1965 = vmatprep.subr.mxu0 0.0
        %1966 = vmatpush1.msra.mxu0 %v1276
        %1967 = vmatprep.subr.mxu0 0.0
        %1968 = vmatpush1.msra.mxu0 %v1275
        %1969 = vmatprep.subr.mxu0 0.0
        %1970 = vmatpush1.msra.mxu0 %v1274
        %1971 = vmatprep.subr.mxu0 0.0
        %1972 = vmatpush1.msra.mxu0 %v1273
        %1973 = vmatprep.subr.mxu0 0.0
        %1974 = vmatpush1.msra.mxu0 %v1272
        %1975 = vmatprep.subr.mxu0 0.0
        %1976 = vmatpush1.msra.mxu0 %v1271
        %1977 = vmatprep.subr.mxu0 0.0
        %1978 = vmatpush1.msra.mxu0 %v1270
        %1979 = vmatprep.subr.mxu0 0.0
        %1980 = vmatpush1.msra.mxu0 %v1269
        %1981 = vmatprep.subr.mxu0 0.0
        %1982 = vmatpush1.msra.mxu0 %v1268
        %1983 = vmatprep.subr.mxu0 0.0
        %1984 = vmatpush1.msra.mxu0 %v1267
        %1985 = vmatprep.subr.mxu0 0.0
        %1986 = vmatpush1.msra.mxu0 %v1266
        %1987 = vmatprep.subr.mxu0 0.0
        %1988 = vmatpush1.msra.mxu0 %v1265
        %1989 = vmatprep.subr.mxu0 0.0
        %1990 = vmatpush1.msra.mxu0 %v1264
        %1991 = vmatprep.subr.mxu0 0.0
        %1992 = vmatpush1.msra.mxu0 %v1263
        %1993 = vmatprep.subr.mxu0 0.0
        %1994 = vmatpush2.msra.mxu0 0.0
        %1995 = vmatprep.subr.mxu0 0.0
        %1996 = vmatpush2.msra.mxu0 0.0
        %1997 = vmatprep.subr.mxu0 0.0
        %1998 = vmatpush2.msra.mxu0 0.0
        %1999 = vmatprep.subr.mxu0 0.0
        %2000 = vmatpush2.msra.mxu0 0.0
        %2001 = vmatprep.subr.mxu0 0.0
        %2002 = vmatpush2.msra.mxu0 0.0
        %2003 = vmatprep.subr.mxu0 0.0
        %2004 = vmatpush2.msra.mxu0 0.0
        %2005 = vmatprep.subr.mxu0 0.0
        %2006 = vmatpush2.msra.mxu0 0.0
        %2007 = vmatprep.subr.mxu0 0.0
        %2008 = vmatpush2.msra.mxu0 0.0
        %2009 = vmatprep.subr.mxu0 0.0
        %2010 = vmatpush2.msra.mxu0 0.0
        %2011 = vmatprep.subr.mxu0 0.0
        %2012 = vmatpush2.msra.mxu0 0.0
        %2013 = vmatprep.subr.mxu0 0.0
        %2014 = vmatpush2.msra.mxu0 0.0
        %2015 = vmatprep.subr.mxu0 0.0
        %2016 = vmatpush2.msra.mxu0 0.0
        %2017 = vmatprep.subr.mxu0 0.0
        %2018 = vmatpush2.msra.mxu0 0.0
        %2019 = vmatprep.subr.mxu0 0.0
        %2020 = vmatpush2.msra.mxu0 0.0
        %2021 = vmatprep.subr.mxu0 0.0
        %2022 = vmatpush2.msra.mxu0 0.0
        %2023 = vmatprep.subr.mxu0 0.0
        %2024 = vmatpush2.msra.mxu0 0.0
        %2025 = vmatprep.mubr.f32.mxu0 0.0
        %2026 = vmatmul.mubr.f32.gmra.mxu0 %v1959
        %v2027 = vpop.f32.mrf.mxu0
        %v2028 = vadd.f32 %v1259, %v2027
        %v2029 = vpop.f32.mrf.mxu0
        %2030 = vmatprep.mubr.f32.mxu0 0.0
        %2031 = vmatmul.mubr.f32.gmra.mxu0 %v1960
        %v2032 = vpop.f32.mrf.mxu0
        %v2033 = vadd.f32 %v1260, %v2032
        %v2034 = vpop.f32.mrf.mxu0
        %2035 = vdwg.mxu0
        %v2036 = vmul.f32 %v1608, %v1513
        %v2037 = vmul.f32 %v1609, %v1519
        %2038 = vmatprep.subr.mxu0 0.0
        %2039 = vmatpush1.msra.mxu0 %v1278
        %2040 = vmatprep.subr.mxu0 0.0
        %2041 = vmatpush1.msra.mxu0 %v1277
        %2042 = vmatprep.subr.mxu0 0.0
        %2043 = vmatpush1.msra.mxu0 %v1276
        %2044 = vmatprep.subr.mxu0 0.0
        %2045 = vmatpush1.msra.mxu0 %v1275
        %2046 = vmatprep.subr.mxu0 0.0
        %2047 = vmatpush1.msra.mxu0 %v1274
        %2048 = vmatprep.subr.mxu0 0.0
        %2049 = vmatpush1.msra.mxu0 %v1273
        %2050 = vmatprep.subr.mxu0 0.0
        %2051 = vmatpush1.msra.mxu0 %v1272
        %2052 = vmatprep.subr.mxu0 0.0
        %2053 = vmatpush1.msra.mxu0 %v1271
        %2054 = vmatprep.subr.mxu0 0.0
        %2055 = vmatpush1.msra.mxu0 %v1270
        %2056 = vmatprep.subr.mxu0 0.0
        %2057 = vmatpush1.msra.mxu0 %v1269
        %2058 = vmatprep.subr.mxu0 0.0
        %2059 = vmatpush1.msra.mxu0 %v1268
        %2060 = vmatprep.subr.mxu0 0.0
        %2061 = vmatpush1.msra.mxu0 %v1267
        %2062 = vmatprep.subr.mxu0 0.0
        %2063 = vmatpush1.msra.mxu0 %v1266
        %2064 = vmatprep.subr.mxu0 0.0
        %2065 = vmatpush1.msra.mxu0 %v1265
        %2066 = vmatprep.subr.mxu0 0.0
        %2067 = vmatpush1.msra.mxu0 %v1264
        %2068 = vmatprep.subr.mxu0 0.0
        %2069 = vmatpush1.msra.mxu0 %v1263
        %2070 = vmatprep.subr.mxu0 0.0
        %2071 = vmatpush2.msra.mxu0 0.0
        %2072 = vmatprep.subr.mxu0 0.0
        %2073 = vmatpush2.msra.mxu0 0.0
        %2074 = vmatprep.subr.mxu0 0.0
        %2075 = vmatpush2.msra.mxu0 0.0
        %2076 = vmatprep.subr.mxu0 0.0
        %2077 = vmatpush2.msra.mxu0 0.0
        %2078 = vmatprep.subr.mxu0 0.0
        %2079 = vmatpush2.msra.mxu0 0.0
        %2080 = vmatprep.subr.mxu0 0.0
        %2081 = vmatpush2.msra.mxu0 0.0
        %2082 = vmatprep.subr.mxu0 0.0
        %2083 = vmatpush2.msra.mxu0 0.0
        %2084 = vmatprep.subr.mxu0 0.0
        %2085 = vmatpush2.msra.mxu0 0.0
        %2086 = vmatprep.subr.mxu0 0.0
        %2087 = vmatpush2.msra.mxu0 0.0
        %2088 = vmatprep.subr.mxu0 0.0
        %2089 = vmatpush2.msra.mxu0 0.0
        %2090 = vmatprep.subr.mxu0 0.0
        %2091 = vmatpush2.msra.mxu0 0.0
        %2092 = vmatprep.subr.mxu0 0.0
        %2093 = vmatpush2.msra.mxu0 0.0
        %2094 = vmatprep.subr.mxu0 0.0
        %2095 = vmatpush2.msra.mxu0 0.0
        %2096 = vmatprep.subr.mxu0 0.0
        %2097 = vmatpush2.msra.mxu0 0.0
        %2098 = vmatprep.subr.mxu0 0.0
        %2099 = vmatpush2.msra.mxu0 0.0
        %2100 = vmatprep.subr.mxu0 0.0
        %2101 = vmatpush2.msra.mxu0 0.0
        %2102 = vmatprep.mubr.f32.mxu0 0.0
        %2103 = vmatmul.mubr.f32.gmra.mxu0 %v2036
        %v2104 = vpop.f32.mrf.mxu0
        %v2105 = vadd.f32 %v1261, %v2104
        %v2106 = vpop.f32.mrf.mxu0
        %2107 = vmatprep.mubr.f32.mxu0 0.0
        %2108 = vmatmul.mubr.f32.gmra.mxu0 %v2037
        %v2109 = vpop.f32.mrf.mxu0
        %v2110 = vadd.f32 %v1262, %v2109
        %v2111 = vpop.f32.mrf.mxu0
        %2112 = vdwg.mxu0
        %v2113 = vmax.f32 %v2028, %v2105
        %v2114 = vmax.f32 %v2033, %v2110
        %v2115 = vsub.f32 %v2028, %v2113
        %v2116 = vsub.f32 %v2033, %v2114
        %v2117 = vmul.f32 %v2115, 1.442695
        %v2118 = vpow.pop %v2117
        %v2119 = vmul.f32 %v2116, 1.442695
        %v2120 = vpow.pop %v2119
        %v2121 = vsub.f32 %v2105, %v2113
        %v2122 = vsub.f32 %v2110, %v2114
        %v2123 = vmul.f32 %v2121, 1.442695
        %v2124 = vpow.pop %v2123
        %v2125 = vmul.f32 %v2122, 1.442695
        %v2126 = vpow.pop %v2125
        %v2127 = vadd.f32 %v2118, %v2124
        %v2128 = vadd.f32 %v2120, %v2126
        %v2129 = vrcp.pop %v2127
        %v2130 = vmul.f32 1.0, %v2129
        %v2131 = vrcp.pop %v2128
        %v2132 = vmul.f32 1.0, %v2131
        %v2133 = vmul.f32 %v2118, %v2130
        %v2134 = vmul.f32 %v2120, %v2132
        %v2136 = vsel %vm1786, %v2133, 0
        %v2139 = vsel %vm1786, %v2134, 0
        %2141 = vmatprep.subr.mxu0 0.0
        %2142 = vmatpush1.msra.mxu0 0.0
        %2143 = vmatprep.subr.mxu0 0.0
        %2144 = vmatpush1.msra.mxu0 0.0
        %2145 = vmatprep.subr.mxu0 0.0
        %2146 = vmatpush1.msra.mxu0 0.0
        %2147 = vmatprep.subr.mxu0 0.0
        %2148 = vmatpush1.msra.mxu0 0.0
        %2149 = vmatprep.subr.mxu0 0.0
        %2150 = vmatpush1.msra.mxu0 0.0
        %2151 = vmatprep.subr.mxu0 0.0
        %2152 = vmatpush1.msra.mxu0 0.0
        %2153 = vmatprep.subr.mxu0 0.0
        %2154 = vmatpush1.msra.mxu0 0.0
        %2155 = vmatprep.subr.mxu0 0.0
        %2156 = vmatpush1.msra.mxu0 0.0
        %2157 = vmatprep.subr.mxu0 0.0
        %2158 = vmatpush1.msra.mxu0 0.0
        %2159 = vmatprep.subr.mxu0 0.0
        %2160 = vmatpush1.msra.mxu0 0.0
        %2161 = vmatprep.subr.mxu0 0.0
        %2162 = vmatpush1.msra.mxu0 0.0
        %2163 = vmatprep.subr.mxu0 0.0
        %2164 = vmatpush1.msra.mxu0 0.0
        %2165 = vmatprep.subr.mxu0 0.0
        %2166 = vmatpush1.msra.mxu0 0.0
        %2167 = vmatprep.subr.mxu0 0.0
        %2168 = vmatpush1.msra.mxu0 0.0
        %2169 = vmatprep.subr.mxu0 0.0
        %2170 = vmatpush1.msra.mxu0 0.0
        %2171 = vmatprep.subr.mxu0 0.0
        %2172 = vmatpush1.msra.mxu0 %v1279
        %2173 = vmatprep.subr.mxu0 0.0
        %2174 = vmatpush2.msra.mxu0 0.0
        %2175 = vmatprep.subr.mxu0 0.0
        %2176 = vmatpush2.msra.mxu0 0.0
        %2177 = vmatprep.subr.mxu0 0.0
        %2178 = vmatpush2.msra.mxu0 0.0
        %2179 = vmatprep.subr.mxu0 0.0
        %2180 = vmatpush2.msra.mxu0 0.0
        %2181 = vmatprep.subr.mxu0 0.0
        %2182 = vmatpush2.msra.mxu0 0.0
        %2183 = vmatprep.subr.mxu0 0.0
        %2184 = vmatpush2.msra.mxu0 0.0
        %2185 = vmatprep.subr.mxu0 0.0
        %2186 = vmatpush2.msra.mxu0 0.0
        %2187 = vmatprep.subr.mxu0 0.0
        %2188 = vmatpush2.msra.mxu0 0.0
        %2189 = vmatprep.subr.mxu0 0.0
        %2190 = vmatpush2.msra.mxu0 0.0
        %2191 = vmatprep.subr.mxu0 0.0
        %2192 = vmatpush2.msra.mxu0 0.0
        %2193 = vmatprep.subr.mxu0 0.0
        %2194 = vmatpush2.msra.mxu0 0.0
        %2195 = vmatprep.subr.mxu0 0.0
        %2196 = vmatpush2.msra.mxu0 0.0
        %2197 = vmatprep.subr.mxu0 0.0
        %2198 = vmatpush2.msra.mxu0 0.0
        %2199 = vmatprep.subr.mxu0 0.0
        %2200 = vmatpush2.msra.mxu0 0.0
        %2201 = vmatprep.subr.mxu0 0.0
        %2202 = vmatpush2.msra.mxu0 0.0
        %2203 = vmatprep.subr.mxu0 0.0
        %2204 = vmatpush2.msra.mxu0 0.0
        %2205 = vmatprep.mubr.f32.mxu0 0.0
        %2206 = vmatmul.mubr.f32.gmra.mxu0 %v2136
        %v2207 = vpop.f32.mrf.mxu0
        %v2208 = vadd.f32 0.0, %v2207
        %v2209 = vpop.f32.mrf.mxu0
        %2210 = vmatprep.mubr.f32.mxu0 0.0
        %2211 = vmatmul.mubr.f32.gmra.mxu0 %v2139
        %v2212 = vpop.f32.mrf.mxu0
        %v2213 = vadd.f32 0.0, %v2212
        %v2214 = vpop.f32.mrf.mxu0
        %2215 = vdwg.mxu0
        %v2216 = vmul.f32 %v2208, %v1588
        %v2217 = vmul.f32 %v2213, %v1593
        %v2218 = vadd.f32 %v2216, 0.0
        %v2219 = vadd.f32 %v2217, 0.0
        %v2220 = vmul.f32 %v2124, %v2130
        %v2221 = vmul.f32 %v2126, %v2132
        %v2223 = vsel %vm1786, %v2220, 0
        %v2226 = vsel %vm1786, %v2221, 0
        %2228 = vmatprep.subr.mxu0 0.0
        %2229 = vmatpush1.msra.mxu0 0.0
        %2230 = vmatprep.subr.mxu0 0.0
        %2231 = vmatpush1.msra.mxu0 0.0
        %2232 = vmatprep.subr.mxu0 0.0
        %2233 = vmatpush1.msra.mxu0 0.0
        %2234 = vmatprep.subr.mxu0 0.0
        %2235 = vmatpush1.msra.mxu0 0.0
        %2236 = vmatprep.subr.mxu0 0.0
        %2237 = vmatpush1.msra.mxu0 0.0
        %2238 = vmatprep.subr.mxu0 0.0
        %2239 = vmatpush1.msra.mxu0 0.0
        %2240 = vmatprep.subr.mxu0 0.0
        %2241 = vmatpush1.msra.mxu0 0.0
        %2242 = vmatprep.subr.mxu0 0.0
        %2243 = vmatpush1.msra.mxu0 0.0
        %2244 = vmatprep.subr.mxu0 0.0
        %2245 = vmatpush1.msra.mxu0 0.0
        %2246 = vmatprep.subr.mxu0 0.0
        %2247 = vmatpush1.msra.mxu0 0.0
        %2248 = vmatprep.subr.mxu0 0.0
        %2249 = vmatpush1.msra.mxu0 0.0
        %2250 = vmatprep.subr.mxu0 0.0
        %2251 = vmatpush1.msra.mxu0 0.0
        %2252 = vmatprep.subr.mxu0 0.0
        %2253 = vmatpush1.msra.mxu0 0.0
        %2254 = vmatprep.subr.mxu0 0.0
        %2255 = vmatpush1.msra.mxu0 0.0
        %2256 = vmatprep.subr.mxu0 0.0
        %2257 = vmatpush1.msra.mxu0 0.0
        %2258 = vmatprep.subr.mxu0 0.0
        %2259 = vmatpush1.msra.mxu0 %v1279
        %2260 = vmatprep.subr.mxu0 0.0
        %2261 = vmatpush2.msra.mxu0 0.0
        %2262 = vmatprep.subr.mxu0 0.0
        %2263 = vmatpush2.msra.mxu0 0.0
        %2264 = vmatprep.subr.mxu0 0.0
        %2265 = vmatpush2.msra.mxu0 0.0
        %2266 = vmatprep.subr.mxu0 0.0
        %2267 = vmatpush2.msra.mxu0 0.0
        %2268 = vmatprep.subr.mxu0 0.0
        %2269 = vmatpush2.msra.mxu0 0.0
        %2270 = vmatprep.subr.mxu0 0.0
        %2271 = vmatpush2.msra.mxu0 0.0
        %2272 = vmatprep.subr.mxu0 0.0
        %2273 = vmatpush2.msra.mxu0 0.0
        %2274 = vmatprep.subr.mxu0 0.0
        %2275 = vmatpush2.msra.mxu0 0.0
        %2276 = vmatprep.subr.mxu0 0.0
        %2277 = vmatpush2.msra.mxu0 0.0
        %2278 = vmatprep.subr.mxu0 0.0
        %2279 = vmatpush2.msra.mxu0 0.0
        %2280 = vmatprep.subr.mxu0 0.0
        %2281 = vmatpush2.msra.mxu0 0.0
        %2282 = vmatprep.subr.mxu0 0.0
        %2283 = vmatpush2.msra.mxu0 0.0
        %2284 = vmatprep.subr.mxu0 0.0
        %2285 = vmatpush2.msra.mxu0 0.0
        %2286 = vmatprep.subr.mxu0 0.0
        %2287 = vmatpush2.msra.mxu0 0.0
        %2288 = vmatprep.subr.mxu0 0.0
        %2289 = vmatpush2.msra.mxu0 0.0
        %2290 = vmatprep.subr.mxu0 0.0
        %2291 = vmatpush2.msra.mxu0 0.0
        %2292 = vmatprep.mubr.f32.mxu0 0.0
        %2293 = vmatmul.mubr.f32.gmra.mxu0 %v2223
        %v2294 = vpop.f32.mrf.mxu0
        %v2295 = vadd.f32 0.0, %v2294
        %v2296 = vpop.f32.mrf.mxu0
        %2297 = vmatprep.mubr.f32.mxu0 0.0
        %2298 = vmatmul.mubr.f32.gmra.mxu0 %v2226
        %v2299 = vpop.f32.mrf.mxu0
        %v2300 = vadd.f32 0.0, %v2299
        %v2301 = vpop.f32.mrf.mxu0
        %2302 = vdwg.mxu0
        %v2303 = vmul.f32 %v2295, %v1598
        %v2304 = vmul.f32 %v2300, %v1603
        %v2305 = vadd.f32 %v2218, %v2303
        %v2306 = vadd.f32 %v2219, %v2304
        %v2308 = vlaneseq
        %v2309 = vshrl.u32 %v2308, 7
        %v2310 = vsub.s32 0, %v2309
        %v2311 = vrot.slane %v1345, %v2310
        %2313 = vmatprep.subr.mxu0 0.0
        %2314 = vmatpush1.msra.mxu0 %v1344
        %2315 = vmatprep.subr.mxu0 0.0
        %2316 = vmatpush1.msra.mxu0 %v1343
        %2317 = vmatprep.subr.mxu0 0.0
        %2318 = vmatpush1.msra.mxu0 %v1342
        %2319 = vmatprep.subr.mxu0 0.0
        %2320 = vmatpush1.msra.mxu0 %v1341
        %2321 = vmatprep.subr.mxu0 0.0
        %2322 = vmatpush1.msra.mxu0 %v1340
        %2323 = vmatprep.subr.mxu0 0.0
        %2324 = vmatpush1.msra.mxu0 %v1339
        %2325 = vmatprep.subr.mxu0 0.0
        %2326 = vmatpush1.msra.mxu0 %v1338
        %2327 = vmatprep.subr.mxu0 0.0
        %2328 = vmatpush1.msra.mxu0 %v1337
        %2329 = vmatprep.subr.mxu0 0.0
        %2330 = vmatpush1.msra.mxu0 %v1336
        %2331 = vmatprep.subr.mxu0 0.0
        %2332 = vmatpush1.msra.mxu0 %v1335
        %2333 = vmatprep.subr.mxu0 0.0
        %2334 = vmatpush1.msra.mxu0 %v1334
        %2335 = vmatprep.subr.mxu0 0.0
        %2336 = vmatpush1.msra.mxu0 %v1333
        %2337 = vmatprep.subr.mxu0 0.0
        %2338 = vmatpush1.msra.mxu0 %v1332
        %2339 = vmatprep.subr.mxu0 0.0
        %2340 = vmatpush1.msra.mxu0 %v1331
        %2341 = vmatprep.subr.mxu0 0.0
        %2342 = vmatpush1.msra.mxu0 %v1330
        %2343 = vmatprep.subr.mxu0 0.0
        %2344 = vmatpush1.msra.mxu0 %v1329
        %2345 = vmatprep.subr.mxu0 0.0
        %2346 = vmatpush2.msra.mxu0 0.0
        %2347 = vmatprep.subr.mxu0 0.0
        %2348 = vmatpush2.msra.mxu0 0.0
        %2349 = vmatprep.subr.mxu0 0.0
        %2350 = vmatpush2.msra.mxu0 0.0
        %2351 = vmatprep.subr.mxu0 0.0
        %2352 = vmatpush2.msra.mxu0 0.0
        %2353 = vmatprep.subr.mxu0 0.0
        %2354 = vmatpush2.msra.mxu0 0.0
        %2355 = vmatprep.subr.mxu0 0.0
        %2356 = vmatpush2.msra.mxu0 0.0
        %2357 = vmatprep.subr.mxu0 0.0
        %2358 = vmatpush2.msra.mxu0 0.0
        %2359 = vmatprep.subr.mxu0 0.0
        %2360 = vmatpush2.msra.mxu0 0.0
        %2361 = vmatprep.subr.mxu0 0.0
        %2362 = vmatpush2.msra.mxu0 0.0
        %2363 = vmatprep.subr.mxu0 0.0
        %2364 = vmatpush2.msra.mxu0 0.0
        %2365 = vmatprep.subr.mxu0 0.0
        %2366 = vmatpush2.msra.mxu0 0.0
        %2367 = vmatprep.subr.mxu0 0.0
        %2368 = vmatpush2.msra.mxu0 0.0
        %2369 = vmatprep.subr.mxu0 0.0
        %2370 = vmatpush2.msra.mxu0 0.0
        %2371 = vmatprep.subr.mxu0 0.0
        %2372 = vmatpush2.msra.mxu0 0.0
        %2373 = vmatprep.subr.mxu0 0.0
        %2374 = vmatpush2.msra.mxu0 0.0
        %2375 = vmatprep.subr.mxu0 0.0
        %2376 = vmatpush2.msra.mxu0 0.0
        %2377 = vmatprep.mubr.f32.mxu0 0.0
        %2378 = vmatmul.mubr.f32.gmra.mxu0 %v1957
        %v2379 = vpop.f32.mrf.mxu0
        %v2380 = vadd.f32 %v2311, %v2379
        %v2381 = vpop.f32.mrf.mxu0
        %2382 = vmatprep.mubr.f32.mxu0 0.0
        %2383 = vmatmul.mubr.f32.gmra.mxu0 %v1958
        %v2384 = vpop.f32.mrf.mxu0
        %v2385 = vadd.f32 %v2311, %v2384
        %v2386 = vpop.f32.mrf.mxu0
        %2387 = vmatprep.mubr.f32.mxu0 0.0
        %2388 = vmatmul.mubr.f32.gmra.mxu0 %v2305
        %v2389 = vpop.f32.mrf.mxu0
        %v2390 = vadd.f32 %v2311, %v2389
        %v2391 = vpop.f32.mrf.mxu0
        %2392 = vmatprep.mubr.f32.mxu0 0.0
        %2393 = vmatmul.mubr.f32.gmra.mxu0 %v2306
        %v2394 = vpop.f32.mrf.mxu0
        %v2395 = vadd.f32 %v2311, %v2394
        %v2396 = vpop.f32.mrf.mxu0
        %2397 = vdwg.mxu0
        %v2398 = vadd.f32 %v1255, %v2380
        %v2399 = vadd.f32 %v1256, %v2385
        %v2400 = vadd.f32 %v1257, %v2390
        %v2401 = vadd.f32 %v1258, %v2395
        %2402 = vadd.xlane.f32.xlu0 %v2398
        %v2403 = vpop.xlane.xlu0 %2402
        %2404 = vadd.xlane.f32.xlu0 %v2399
        %v2405 = vpop.xlane.xlu0 %2404
        %2406 = vadd.xlane.f32.xlu0 %v2400
        %v2407 = vpop.xlane.xlu0 %2406
        %2408 = vadd.xlane.f32.xlu0 %v2401
        %v2409 = vpop.xlane.xlu0 %2408
        %v2410 = vrcp.pop 128.0
        %v2411 = vmul.f32 %v2403, %v2410
        %v2412 = vmul.f32 %v2405, %v2410
        %v2413 = vmul.f32 %v2407, %v2410
        %v2414 = vmul.f32 %v2409, %v2410
        %v2415 = vsub.f32 %v2398, %v2411
        %v2416 = vsub.f32 %v2399, %v2412
        %v2417 = vsub.f32 %v2400, %v2413
        %v2418 = vsub.f32 %v2401, %v2414
        %v2419 = vmul.f32 %v2415, %v2415
        %v2420 = vmul.f32 %v2416, %v2416
        %v2421 = vmul.f32 %v2417, %v2417
        %v2422 = vmul.f32 %v2418, %v2418
        %2423 = vadd.xlane.f32.xlu0 %v2419
        %v2424 = vpop.xlane.xlu0 %2423
        %2425 = vadd.xlane.f32.xlu0 %v2420
        %v2426 = vpop.xlane.xlu0 %2425
        %2427 = vadd.xlane.f32.xlu0 %v2421
        %v2428 = vpop.xlane.xlu0 %2427
        %2429 = vadd.xlane.f32.xlu0 %v2422
        %v2430 = vpop.xlane.xlu0 %2429
        %v2431 = vmul.f32 %v2424, %v2410
        %v2432 = vmul.f32 %v2426, %v2410
        %v2433 = vmul.f32 %v2428, %v2410
        %v2434 = vmul.f32 %v2430, %v2410
        %v2435 = vadd.f32 %v2431, 1e-05
        %v2436 = vadd.f32 %v2432, 1e-05
        %v2437 = vadd.f32 %v2433, 1e-05
        %v2438 = vadd.f32 %v2434, 1e-05
        %v2439 = vrsqrt.pop %v2435
        %v2440 = vrsqrt.pop %v2436
        %v2441 = vrsqrt.pop %v2437
        %v2442 = vrsqrt.pop %v2438
        %v2443 = vmul.f32 %v2415, %v2439
        %v2444 = vmul.f32 %v2416, %v2440
        %v2445 = vmul.f32 %v2417, %v2441
        %v2446 = vmul.f32 %v2418, %v2442
        %v2448 = vlaneseq
        %v2449 = vshrl.u32 %v2448, 7
        %v2450 = vsub.s32 0, %v2449
        %v2451 = vrot.slane %v1346, %v2450
        %v2453 = vmul.f32 %v2443, %v2451
        %v2454 = vmul.f32 %v2444, %v2451
        %v2455 = vmul.f32 %v2445, %v2451
        %v2456 = vmul.f32 %v2446, %v2451
        %v2458 = vlaneseq
        %v2459 = vshrl.u32 %v2458, 7
        %v2460 = vsub.s32 0, %v2459
        %v2461 = vrot.slane %v1347, %v2460
        %v2463 = vadd.f32 %v2453, %v2461
        %v2464 = vadd.f32 %v2454, %v2461
        %v2465 = vadd.f32 %v2455, %v2461
        %v2466 = vadd.f32 %v2456, %v2461
        %v2468 = vlaneseq
        %v2469 = vshrl.u32 %v2468, 7
        %v2470 = vsub.s32 0, %v2469
        %v2471 = vrot.slane %v1380, %v2470
        %v2472 = vlaneseq
        %v2473 = vshrl.u32 %v2472, 7
        %v2474 = vsub.s32 1, %v2473
        %v2475 = vrot.slane %v1380, %v2474
        %2478 = vmatprep.subr.mxu0 %v1379
        %2479 = vmatpush1.msra.mxu0 %v1378
        %2480 = vmatprep.subr.mxu0 %v1377
        %2481 = vmatpush1.msra.mxu0 %v1376
        %2482 = vmatprep.subr.mxu0 %v1375
        %2483 = vmatpush1.msra.mxu0 %v1374
        %2484 = vmatprep.subr.mxu0 %v1373
        %2485 = vmatpush1.msra.mxu0 %v1372
        %2486 = vmatprep.subr.mxu0 %v1371
        %2487 = vmatpush1.msra.mxu0 %v1370
        %2488 = vmatprep.subr.mxu0 %v1369
        %2489 = vmatpush1.msra.mxu0 %v1368
        %2490 = vmatprep.subr.mxu0 %v1367
        %2491 = vmatpush1.msra.mxu0 %v1366
        %2492 = vmatprep.subr.mxu0 %v1365
        %2493 = vmatpush1.msra.mxu0 %v1364
        %2494 = vmatprep.subr.mxu0 %v1363
        %2495 = vmatpush1.msra.mxu0 %v1362
        %2496 = vmatprep.subr.mxu0 %v1361
        %2497 = vmatpush1.msra.mxu0 %v1360
        %2498 = vmatprep.subr.mxu0 %v1359
        %2499 = vmatpush1.msra.mxu0 %v1358
        %2500 = vmatprep.subr.mxu0 %v1357
        %2501 = vmatpush1.msra.mxu0 %v1356
        %2502 = vmatprep.subr.mxu0 %v1355
        %2503 = vmatpush1.msra.mxu0 %v1354
        %2504 = vmatprep.subr.mxu0 %v1353
        %2505 = vmatpush1.msra.mxu0 %v1352
        %2506 = vmatprep.subr.mxu0 %v1351
        %2507 = vmatpush1.msra.mxu0 %v1350
        %2508 = vmatprep.subr.mxu0 %v1349
        %2509 = vmatpush1.msra.mxu0 %v1348
        %2510 = vmatprep.subr.mxu0 0.0
        %2511 = vmatpush2.msra.mxu0 0.0
        %2512 = vmatprep.subr.mxu0 0.0
        %2513 = vmatpush2.msra.mxu0 0.0
        %2514 = vmatprep.subr.mxu0 0.0
        %2515 = vmatpush2.msra.mxu0 0.0
        %2516 = vmatprep.subr.mxu0 0.0
        %2517 = vmatpush2.msra.mxu0 0.0
        %2518 = vmatprep.subr.mxu0 0.0
        %2519 = vmatpush2.msra.mxu0 0.0
        %2520 = vmatprep.subr.mxu0 0.0
        %2521 = vmatpush2.msra.mxu0 0.0
        %2522 = vmatprep.subr.mxu0 0.0
        %2523 = vmatpush2.msra.mxu0 0.0
        %2524 = vmatprep.subr.mxu0 0.0
        %2525 = vmatpush2.msra.mxu0 0.0
        %2526 = vmatprep.subr.mxu0 0.0
        %2527 = vmatpush2.msra.mxu0 0.0
        %2528 = vmatprep.subr.mxu0 0.0
        %2529 = vmatpush2.msra.mxu0 0.0
        %2530 = vmatprep.subr.mxu0 0.0
        %2531 = vmatpush2.msra.mxu0 0.0
        %2532 = vmatprep.subr.mxu0 0.0
        %2533 = vmatpush2.msra.mxu0 0.0
        %2534 = vmatprep.subr.mxu0 0.0
        %2535 = vmatpush2.msra.mxu0 0.0
        %2536 = vmatprep.subr.mxu0 0.0
        %2537 = vmatpush2.msra.mxu0 0.0
        %2538 = vmatprep.subr.mxu0 0.0
        %2539 = vmatpush2.msra.mxu0 0.0
        %2540 = vmatprep.subr.mxu0 0.0
        %2541 = vmatpush2.msra.mxu0 0.0
        %2542 = vmatprep.mubr.f32.mxu0 0.0
        %2543 = vmatmul.mubr.f32.gmra.mxu0 %v2463
        %v2544 = vpop.f32.mrf.mxu0
        %v2545 = vadd.f32 %v2471, %v2544
        %v2546 = vpop.f32.mrf.mxu0
        %v2547 = vadd.f32 %v2475, %v2546
        %2548 = vmatprep.mubr.f32.mxu0 0.0
        %2549 = vmatmul.mubr.f32.gmra.mxu0 %v2464
        %v2550 = vpop.f32.mrf.mxu0
        %v2551 = vadd.f32 %v2471, %v2550
        %v2552 = vpop.f32.mrf.mxu0
        %v2553 = vadd.f32 %v2475, %v2552
        %2554 = vmatprep.mubr.f32.mxu0 0.0
        %2555 = vmatmul.mubr.f32.gmra.mxu0 %v2465
        %v2556 = vpop.f32.mrf.mxu0
        %v2557 = vadd.f32 %v2471, %v2556
        %v2558 = vpop.f32.mrf.mxu0
        %v2559 = vadd.f32 %v2475, %v2558
        %2560 = vmatprep.mubr.f32.mxu0 0.0
        %2561 = vmatmul.mubr.f32.gmra.mxu0 %v2466
        %v2562 = vpop.f32.mrf.mxu0
        %v2563 = vadd.f32 %v2471, %v2562
        %v2564 = vpop.f32.mrf.mxu0
        %v2565 = vadd.f32 %v2475, %v2564
        %2566 = vdwg.mxu0
        %v2567 = vmax.f32 %v2545, 0.0
        %v2568 = vmax.f32 %v2547, 0.0
        %v2569 = vmax.f32 %v2551, 0.0
        %v2570 = vmax.f32 %v2553, 0.0
        %v2571 = vmax.f32 %v2557, 0.0
        %v2572 = vmax.f32 %v2559, 0.0
        %v2573 = vmax.f32 %v2563, 0.0
        %v2574 = vmax.f32 %v2565, 0.0
        %v2576 = vlaneseq
        %v2577 = vshrl.u32 %v2576, 7
        %v2578 = vsub.s32 0, %v2577
        %v2579 = vrot.slane %v1413, %v2578
        %2581 = vmatprep.subr.mxu0 0.0
        %2582 = vmatpush1.msra.mxu0 %v1396
        %2583 = vmatprep.subr.mxu0 0.0
        %2584 = vmatpush1.msra.mxu0 %v1395
        %2585 = vmatprep.subr.mxu0 0.0
        %2586 = vmatpush1.msra.mxu0 %v1394
        %2587 = vmatprep.subr.mxu0 0.0
        %2588 = vmatpush1.msra.mxu0 %v1393
        %2589 = vmatprep.subr.mxu0 0.0
        %2590 = vmatpush1.msra.mxu0 %v1392
        %2591 = vmatprep.subr.mxu0 0.0
        %2592 = vmatpush1.msra.mxu0 %v1391
        %2593 = vmatprep.subr.mxu0 0.0
        %2594 = vmatpush1.msra.mxu0 %v1390
        %2595 = vmatprep.subr.mxu0 0.0
        %2596 = vmatpush1.msra.mxu0 %v1389
        %2597 = vmatprep.subr.mxu0 0.0
        %2598 = vmatpush1.msra.mxu0 %v1388
        %2599 = vmatprep.subr.mxu0 0.0
        %2600 = vmatpush1.msra.mxu0 %v1387
        %2601 = vmatprep.subr.mxu0 0.0
        %2602 = vmatpush1.msra.mxu0 %v1386
        %2603 = vmatprep.subr.mxu0 0.0
        %2604 = vmatpush1.msra.mxu0 %v1385
        %2605 = vmatprep.subr.mxu0 0.0
        %2606 = vmatpush1.msra.mxu0 %v1384
        %2607 = vmatprep.subr.mxu0 0.0
        %2608 = vmatpush1.msra.mxu0 %v1383
        %2609 = vmatprep.subr.mxu0 0.0
        %2610 = vmatpush1.msra.mxu0 %v1382
        %2611 = vmatprep.subr.mxu0 0.0
        %2612 = vmatpush1.msra.mxu0 %v1381
        %2613 = vmatprep.subr.mxu0 0.0
        %2614 = vmatpush2.msra.mxu0 %v1412
        %2615 = vmatprep.subr.mxu0 0.0
        %2616 = vmatpush2.msra.mxu0 %v1411
        %2617 = vmatprep.subr.mxu0 0.0
        %2618 = vmatpush2.msra.mxu0 %v1410
        %2619 = vmatprep.subr.mxu0 0.0
        %2620 = vmatpush2.msra.mxu0 %v1409
        %2621 = vmatprep.subr.mxu0 0.0
        %2622 = vmatpush2.msra.mxu0 %v1408
        %2623 = vmatprep.subr.mxu0 0.0
        %2624 = vmatpush2.msra.mxu0 %v1407
        %2625 = vmatprep.subr.mxu0 0.0
        %2626 = vmatpush2.msra.mxu0 %v1406
        %2627 = vmatprep.subr.mxu0 0.0
        %2628 = vmatpush2.msra.mxu0 %v1405
        %2629 = vmatprep.subr.mxu0 0.0
        %2630 = vmatpush2.msra.mxu0 %v1404
        %2631 = vmatprep.subr.mxu0 0.0
        %2632 = vmatpush2.msra.mxu0 %v1403
        %2633 = vmatprep.subr.mxu0 0.0
        %2634 = vmatpush2.msra.mxu0 %v1402
        %2635 = vmatprep.subr.mxu0 0.0
        %2636 = vmatpush2.msra.mxu0 %v1401
        %2637 = vmatprep.subr.mxu0 0.0
        %2638 = vmatpush2.msra.mxu0 %v1400
        %2639 = vmatprep.subr.mxu0 0.0
        %2640 = vmatpush2.msra.mxu0 %v1399
        %2641 = vmatprep.subr.mxu0 0.0
        %2642 = vmatpush2.msra.mxu0 %v1398
        %2643 = vmatprep.subr.mxu0 0.0
        %2644 = vmatpush2.msra.mxu0 %v1397
        %2645 = vmatprep.mubr.f32.mxu0 %v2568
        %2646 = vmatmul.mubr.f32.gmra.mxu0 %v2567
        %v2647 = vpop.f32.mrf.mxu0
        %v2648 = vadd.f32 %v2579, %v2647
        %v2649 = vpop.f32.mrf.mxu0
        %2650 = vmatprep.mubr.f32.mxu0 %v2570
        %2651 = vmatmul.mubr.f32.gmra.mxu0 %v2569
        %v2652 = vpop.f32.mrf.mxu0
        %v2653 = vadd.f32 %v2579, %v2652
        %v2654 = vpop.f32.mrf.mxu0
        %2655 = vmatprep.mubr.f32.mxu0 %v2572
        %2656 = vmatmul.mubr.f32.gmra.mxu0 %v2571
        %v2657 = vpop.f32.mrf.mxu0
        %v2658 = vadd.f32 %v2579, %v2657
        %v2659 = vpop.f32.mrf.mxu0
        %2660 = vmatprep.mubr.f32.mxu0 %v2574
        %2661 = vmatmul.mubr.f32.gmra.mxu0 %v2573
        %v2662 = vpop.f32.mrf.mxu0
        %v2663 = vadd.f32 %v2579, %v2662
        %v2664 = vpop.f32.mrf.mxu0
        %2665 = vdwg.mxu0
        %v2666 = vadd.f32 %v2463, %v2648
        %v2667 = vadd.f32 %v2464, %v2653
        %v2668 = vadd.f32 %v2465, %v2658
        %v2669 = vadd.f32 %v2466, %v2663
        %2670 = vadd.xlane.f32.xlu0 %v2666
        %v2671 = vpop.xlane.xlu0 %2670
        %2672 = vadd.xlane.f32.xlu0 %v2667
        %v2673 = vpop.xlane.xlu0 %2672
        %2674 = vadd.xlane.f32.xlu0 %v2668
        %v2675 = vpop.xlane.xlu0 %2674
        %2676 = vadd.xlane.f32.xlu0 %v2669
        %v2677 = vpop.xlane.xlu0 %2676
        %v2678 = vmul.f32 %v2671, %v2410
        %v2679 = vmul.f32 %v2673, %v2410
        %v2680 = vmul.f32 %v2675, %v2410
        %v2681 = vmul.f32 %v2677, %v2410
        %v2682 = vsub.f32 %v2666, %v2678
        %v2683 = vsub.f32 %v2667, %v2679
        %v2684 = vsub.f32 %v2668, %v2680
        %v2685 = vsub.f32 %v2669, %v2681
        %v2686 = vmul.f32 %v2682, %v2682
        %v2687 = vmul.f32 %v2683, %v2683
        %v2688 = vmul.f32 %v2684, %v2684
        %v2689 = vmul.f32 %v2685, %v2685
        %2690 = vadd.xlane.f32.xlu0 %v2686
        %v2691 = vpop.xlane.xlu0 %2690
        %2692 = vadd.xlane.f32.xlu0 %v2687
        %v2693 = vpop.xlane.xlu0 %2692
        %2694 = vadd.xlane.f32.xlu0 %v2688
        %v2695 = vpop.xlane.xlu0 %2694
        %2696 = vadd.xlane.f32.xlu0 %v2689
        %v2697 = vpop.xlane.xlu0 %2696
        %v2698 = vmul.f32 %v2691, %v2410
        %v2699 = vmul.f32 %v2693, %v2410
        %v2700 = vmul.f32 %v2695, %v2410
        %v2701 = vmul.f32 %v2697, %v2410
        %v2702 = vadd.f32 %v2698, 1e-05
        %v2703 = vadd.f32 %v2699, 1e-05
        %v2704 = vadd.f32 %v2700, 1e-05
        %v2705 = vadd.f32 %v2701, 1e-05
        %v2706 = vrsqrt.pop %v2702
        %v2707 = vrsqrt.pop %v2703
        %v2708 = vrsqrt.pop %v2704
        %v2709 = vrsqrt.pop %v2705
        %v2710 = vmul.f32 %v2682, %v2706
        %v2711 = vmul.f32 %v2683, %v2707
        %v2712 = vmul.f32 %v2684, %v2708
        %v2713 = vmul.f32 %v2685, %v2709
        %v2715 = vlaneseq
        %v2716 = vshrl.u32 %v2715, 7
        %v2717 = vsub.s32 0, %v2716
        %v2718 = vrot.slane %v1414, %v2717
        %v2720 = vmul.f32 %v2710, %v2718
        %v2721 = vmul.f32 %v2711, %v2718
        %v2722 = vmul.f32 %v2712, %v2718
        %v2723 = vmul.f32 %v2713, %v2718
        %v2725 = vlaneseq
        %v2726 = vshrl.u32 %v2725, 7
        %v2727 = vsub.s32 0, %v2726
        %v2728 = vrot.slane %v1415, %v2727
        %v2730 = vadd.f32 %v2720, %v2728
        %v2731 = vadd.f32 %v2721, %v2728
        %v2732 = vadd.f32 %v2722, %v2728
        %v2733 = vadd.f32 %v2723, %v2728
        %2734 = vst [vmem:[#allocation2] sm:$0xff] %v2730
        %2735 = vst [vmem:[#allocation2 + $0x8] sm:$0xff] %v2731
        %2736 = vst [vmem:[#allocation2 + $0x10] sm:$0xff] %v2732
        %2737 = vst [vmem:[#allocation2 + $0x18] sm:$0xff] %v2733
        %p2738 = scmp.eq.s32.totalorder %s39, 1
        // Predicated region
        $region113: #{transformer_forward.1} parent=99 // pred_check
          %p2739 = pneg %p2738
        $region114: #{transformer_forward.1} parent=99 // pred_check_branch
          %2741 = sbr.rel (%p2739) target = $region116
        $region115: #{transformer_forward.1} parent=99 // pred_region
          %v2742 = vld [vmem:[%s5] sm:$0x3]
          %v2743 = vld [vmem:[%s6] sm:$0xff]
          %v2744 = vld [vmem:[%s6 + $0x8] sm:$0xff]
          %v2745 = vld [vmem:[%s6 + $0x10] sm:$0xff]
          %v2746 = vld [vmem:[%s6 + $0x18] sm:$0xff]
          %v2747 = vld [vmem:[%s6 + $0x20] sm:$0xff]
          %v2748 = vld [vmem:[%s6 + $0x28] sm:$0xff]
          %v2749 = vld [vmem:[%s6 + $0x30] sm:$0xff]
          %v2750 = vld [vmem:[%s6 + $0x38] sm:$0xff]
          %v2751 = vld [vmem:[%s6 + $0x40] sm:$0xff]
          %v2752 = vld [vmem:[%s6 + $0x48] sm:$0xff]
          %v2753 = vld [vmem:[%s6 + $0x50] sm:$0xff]
          %v2754 = vld [vmem:[%s6 + $0x58] sm:$0xff]
          %v2755 = vld [vmem:[%s6 + $0x60] sm:$0xff]
          %v2756 = vld [vmem:[%s6 + $0x68] sm:$0xff]
          %v2757 = vld [vmem:[%s6 + $0x70] sm:$0xff]
          %v2758 = vld [vmem:[%s6 + $0x78] sm:$0xff]
          %v2759 = vld [vmem:[#allocation4] sm:$0x1]
          %vm2760 = vcmask 261120
          %v2762 = vsel %vm2760, %v2742, 0
          %2764 = vmatprep.subr.mxu0 0.0
          %2765 = vmatpush1.msra.mxu0 0.0
          %2766 = vmatprep.subr.mxu0 0.0
          %2767 = vmatpush1.msra.mxu0 0.0
          %2768 = vmatprep.subr.mxu0 0.0
          %2769 = vmatpush1.msra.mxu0 0.0
          %2770 = vmatprep.subr.mxu0 0.0
          %2771 = vmatpush1.msra.mxu0 0.0
          %2772 = vmatprep.subr.mxu0 0.0
          %2773 = vmatpush1.msra.mxu0 0.0
          %2774 = vmatprep.subr.mxu0 0.0
          %2775 = vmatpush1.msra.mxu0 0.0
          %2776 = vmatprep.subr.mxu0 0.0
          %2777 = vmatpush1.msra.mxu0 0.0
          %2778 = vmatprep.subr.mxu0 0.0
          %2779 = vmatpush1.msra.mxu0 0.0
          %2780 = vmatprep.subr.mxu0 0.0
          %2781 = vmatpush1.msra.mxu0 0.0
          %2782 = vmatprep.subr.mxu0 0.0
          %2783 = vmatpush1.msra.mxu0 0.0
          %2784 = vmatprep.subr.mxu0 0.0
          %2785 = vmatpush1.msra.mxu0 0.0
          %2786 = vmatprep.subr.mxu0 0.0
          %2787 = vmatpush1.msra.mxu0 0.0
          %2788 = vmatprep.subr.mxu0 0.0
          %2789 = vmatpush1.msra.mxu0 %v2733
          %2790 = vmatprep.subr.mxu0 0.0
          %2791 = vmatpush1.msra.mxu0 %v2732
          %2792 = vmatprep.subr.mxu0 0.0
          %2793 = vmatpush1.msra.mxu0 %v2731
          %2794 = vmatprep.subr.mxu0 0.0
          %2795 = vmatpush1.msra.mxu0 %v2730
          %2796 = vmatprep.subr.mxu0 0.0
          %2797 = vmatpush2.msra.mxu0 0.0
          %2798 = vmatprep.subr.mxu0 0.0
          %2799 = vmatpush2.msra.mxu0 0.0
          %2800 = vmatprep.subr.mxu0 0.0
          %2801 = vmatpush2.msra.mxu0 0.0
          %2802 = vmatprep.subr.mxu0 0.0
          %2803 = vmatpush2.msra.mxu0 0.0
          %2804 = vmatprep.subr.mxu0 0.0
          %2805 = vmatpush2.msra.mxu0 0.0
          %2806 = vmatprep.subr.mxu0 0.0
          %2807 = vmatpush2.msra.mxu0 0.0
          %2808 = vmatprep.subr.mxu0 0.0
          %2809 = vmatpush2.msra.mxu0 0.0
          %2810 = vmatprep.subr.mxu0 0.0
          %2811 = vmatpush2.msra.mxu0 0.0
          %2812 = vmatprep.subr.mxu0 0.0
          %2813 = vmatpush2.msra.mxu0 0.0
          %2814 = vmatprep.subr.mxu0 0.0
          %2815 = vmatpush2.msra.mxu0 0.0
          %2816 = vmatprep.subr.mxu0 0.0
          %2817 = vmatpush2.msra.mxu0 0.0
          %2818 = vmatprep.subr.mxu0 0.0
          %2819 = vmatpush2.msra.mxu0 0.0
          %2820 = vmatprep.subr.mxu0 0.0
          %2821 = vmatpush2.msra.mxu0 0.0
          %2822 = vmatprep.subr.mxu0 0.0
          %2823 = vmatpush2.msra.mxu0 0.0
          %2824 = vmatprep.subr.mxu0 0.0
          %2825 = vmatpush2.msra.mxu0 0.0
          %2826 = vmatprep.subr.mxu0 0.0
          %2827 = vmatpush2.msra.mxu0 0.0
          %2828 = vmatprep.mubr.f32.mxu0 0.0
          %2829 = vmatmul.mubr.f32.gmra.mxu0 %v2762
          %v2830 = vpop.f32.mrf.mxu0
          %v2831 = vadd.f32 0.0, %v2830
          %v2832 = vpop.f32.mrf.mxu0
          %2833 = vdwg.mxu0
          %v2835 = vlaneseq
          %v2836 = vshrl.u32 %v2835, 7
          %v2837 = vsub.s32 0, %v2836
          %v2838 = vrot.slane %v2759, %v2837
          %2840 = vmatprep.subr.mxu0 0.0
          %2841 = vmatpush1.msra.mxu0 %v2758
          %2842 = vmatprep.subr.mxu0 0.0
          %2843 = vmatpush1.msra.mxu0 %v2757
          %2844 = vmatprep.subr.mxu0 0.0
          %2845 = vmatpush1.msra.mxu0 %v2756
          %2846 = vmatprep.subr.mxu0 0.0
          %2847 = vmatpush1.msra.mxu0 %v2755
          %2848 = vmatprep.subr.mxu0 0.0
          %2849 = vmatpush1.msra.mxu0 %v2754
          %2850 = vmatprep.subr.mxu0 0.0
          %2851 = vmatpush1.msra.mxu0 %v2753
          %2852 = vmatprep.subr.mxu0 0.0
          %2853 = vmatpush1.msra.mxu0 %v2752
          %2854 = vmatprep.subr.mxu0 0.0
          %2855 = vmatpush1.msra.mxu0 %v2751
          %2856 = vmatprep.subr.mxu0 0.0
          %2857 = vmatpush1.msra.mxu0 %v2750
          %2858 = vmatprep.subr.mxu0 0.0
          %2859 = vmatpush1.msra.mxu0 %v2749
          %2860 = vmatprep.subr.mxu0 0.0
          %2861 = vmatpush1.msra.mxu0 %v2748
          %2862 = vmatprep.subr.mxu0 0.0
          %2863 = vmatpush1.msra.mxu0 %v2747
          %2864 = vmatprep.subr.mxu0 0.0
          %2865 = vmatpush1.msra.mxu0 %v2746
          %2866 = vmatprep.subr.mxu0 0.0
          %2867 = vmatpush1.msra.mxu0 %v2745
          %2868 = vmatprep.subr.mxu0 0.0
          %2869 = vmatpush1.msra.mxu0 %v2744
          %2870 = vmatprep.subr.mxu0 0.0
          %2871 = vmatpush1.msra.mxu0 %v2743
          %2872 = vmatprep.subr.mxu0 0.0
          %2873 = vmatpush2.msra.mxu0 0.0
          %2874 = vmatprep.subr.mxu0 0.0
          %2875 = vmatpush2.msra.mxu0 0.0
          %2876 = vmatprep.subr.mxu0 0.0
          %2877 = vmatpush2.msra.mxu0 0.0
          %2878 = vmatprep.subr.mxu0 0.0
          %2879 = vmatpush2.msra.mxu0 0.0
          %2880 = vmatprep.subr.mxu0 0.0
          %2881 = vmatpush2.msra.mxu0 0.0
          %2882 = vmatprep.subr.mxu0 0.0
          %2883 = vmatpush2.msra.mxu0 0.0
          %2884 = vmatprep.subr.mxu0 0.0
          %2885 = vmatpush2.msra.mxu0 0.0
          %2886 = vmatprep.subr.mxu0 0.0
          %2887 = vmatpush2.msra.mxu0 0.0
          %2888 = vmatprep.subr.mxu0 0.0
          %2889 = vmatpush2.msra.mxu0 0.0
          %2890 = vmatprep.subr.mxu0 0.0
          %2891 = vmatpush2.msra.mxu0 0.0
          %2892 = vmatprep.subr.mxu0 0.0
          %2893 = vmatpush2.msra.mxu0 0.0
          %2894 = vmatprep.subr.mxu0 0.0
          %2895 = vmatpush2.msra.mxu0 0.0
          %2896 = vmatprep.subr.mxu0 0.0
          %2897 = vmatpush2.msra.mxu0 0.0
          %2898 = vmatprep.subr.mxu0 0.0
          %2899 = vmatpush2.msra.mxu0 0.0
          %2900 = vmatprep.subr.mxu0 0.0
          %2901 = vmatpush2.msra.mxu0 0.0
          %2902 = vmatprep.subr.mxu0 0.0
          %2903 = vmatpush2.msra.mxu0 0.0
          %2904 = vmatprep.mubr.f32.mxu0 0.0
          %2905 = vmatmul.mubr.f32.gmra.mxu0 %v2831
          %v2906 = vpop.f32.mrf.mxu0
          %v2907 = vadd.f32 %v2838, %v2906
          %v2908 = vpop.f32.mrf.mxu0
          %2909 = vdwg.mxu0
          %vm2910 = vcmask 1024
          %2911 = vst.msk [vmem:[%s20] sm:$0x3] %vm2910, %v2907
        $region116: #{transformer_forward.1} parent=99 // pred_fallthru
          _
        // Predicated region
        $region117: #{transformer_forward.1} parent=99 // pred_check
          %p2912 = pneg %p532
        $region118: #{transformer_forward.1} parent=99 // pred_check_branch
          %2914 = sbr.rel (%p2912) target = $region120
        $region119: #{transformer_forward.1} parent=99 // pred_region
          _
        $region120: #{transformer_forward.1} parent=99 // pred_fallthru
          _
        // Predicated region
        $region121: #{transformer_forward.1} parent=99 // pred_check
          %p2915 = pneg %p532
        $region122: #{transformer_forward.1} parent=99 // pred_check_branch
          %2917 = sbr.rel (%p2915) target = $region124
        $region123: #{transformer_forward.1} parent=99 // pred_region
          _
        $region124: #{transformer_forward.1} parent=99 // pred_fallthru
          _
      $region100: #{transformer_forward.1} parent=5 // pred_fallthru
        _
      %p2918 = scmp.le.s32.totalorder 2, %s34
      // Predicated region
      $region125: #{transformer_forward.1} parent=5 // pred_check
        %p2919 = pneg %p2918
      $region126: #{transformer_forward.1} parent=5 // pred_check_branch
        %2921 = sbr.rel (%p2919) target = $region128
      $region127: #{transformer_forward.1} parent=5 // pred_region
        %s2922 = ssub.s32 %s34, 2
      $region128: #{transformer_forward.1} parent=5 // pred_fallthru
        _
    $region6: #{transformer_forward.1} parent=1 // loop_footer
      %s38 = sadd.s32 1, %s34
    $region7: #{transformer_forward.1} parent=1 // loop_footer_branch
      %33 = sbr.rel target = $region3
    $region8: #{transformer_forward.1} parent=1 // loop_exit
      _
    %2923 = vsyncpa [#allocation6], 1
    %s2924 = scalar_lea.sflag [#allocation6], 1
    %2925 = vsyncpa %s2924, 1
    %2926 = vsyncpa [#allocation8], 1
    %s2927 = scalar_lea.sflag [#allocation8], 1
    %2928 = vsyncpa %s2927, 1

</llo_original>
